<compile_context>
chip_gen: v6e
topology: v6e:2x2x1
jax: 0.10.0
libtpu: 0.0.40
codegen_flags: <defaults>
</compile_context>

<pallas_src>
import functools

import jax
import jax.numpy as jnp
from jax.experimental import pallas as pl
from jax.experimental.pallas import tpu as pltpu


# ----------------------------------------------------------------------------
# Fused Pallas kernel: qkv projection + MHA softmax attention + out projection
# ----------------------------------------------------------------------------
def _temporal_attn_kernel(x_ref, w_in_ref, b_in_ref, w_out_ref, b_out_ref,
                          m_ref, o_ref, *, n_head):
    """One block of Lb temporal sequences, all heads, fully fused.

    x_ref : (Lb, T, D)  f32   activation block (cast to bf16 in-kernel)
    w_in  : (D, 3D)     bf16  in-projection (q-scale already folded in)
    b_in  : (1, 3D)     f32
    w_out : (D, D)      bf16  out-projection
    b_out : (1, D)      f32
    m_ref : (T, T)      f32   additive attention mask
    o_ref : (Lb, T, D)  f32   output block (same layout as the input block)
    """
    Lb, T, D = x_ref.shape
    dh = D // n_head

    # ---- qkv in-projection (bf16 MXU operands, f32 accumulation) ----------
    x = x_ref[...].astype(jnp.bfloat16).reshape(Lb * T, D)
    qkv = jnp.dot(x, w_in_ref[...], preferred_element_type=jnp.float32)
    qkv = (qkv + b_in_ref[...]).astype(jnp.bfloat16).reshape(Lb, T, 3 * D)
    q = qkv[:, :, 0 * D:1 * D]              # 128-lane aligned slices
    k = qkv[:, :, 1 * D:2 * D]
    v = qkv[:, :, 2 * D:3 * D]

    # ---- attention + fused out-projection ----------------------------------
    mask_b = jnp.broadcast_to(m_ref[...][None, :, :], (Lb, T, T))  # hoisted
    w_out = w_out_ref[...]
    acc = jnp.zeros((Lb * T, D), jnp.float32)
    for h in range(n_head):                 # small static head loop
        sl = slice(h * dh, (h + 1) * dh)
        s = jnp.einsum('bqd,bkd->bqk', q[:, :, sl], k[:, :, sl],
                       preferred_element_type=jnp.float32)
        s = s + mask_b
        s = s - jnp.max(s, axis=-1, keepdims=True)
        p = jnp.exp(s)
        p = p * pl.reciprocal(jnp.sum(p, axis=-1, keepdims=True), approx=True)
        o_h = jnp.einsum('bqk,bkd->bqd', p.astype(v.dtype), v[:, :, sl],
                         preferred_element_type=jnp.float32)
        # fold the out-projection per head: no lane-axis concat needed
        acc += jnp.dot(o_h.astype(jnp.bfloat16).reshape(Lb * T, dh),
                       w_out[sl, :], preferred_element_type=jnp.float32)

    out = acc + b_out_ref[...]
    o_ref[...] = out.reshape(Lb, T, D).astype(o_ref.dtype)


# ----------------------------------------------------------------------------
# Wrappers
# ----------------------------------------------------------------------------
def _pick_lb(l, T, d, b, max_block_bytes=2 << 20):
    """Largest divisor of l such that an f32 (Lb, T, d) block stays ~2 MiB
    (safe on v5e/v6e/v7x VMEM with double-buffering), while keeping >= 2
    parallel grid steps for v7x megacore when possible."""
    cap = max(1, max_block_bytes // (T * d * 4))
    lb = 1
    for c in range(1, l + 1):
        if l % c == 0 and c <= cap:
            lb = c
    if b * (l // lb) < 2 and l > 1:
        # split the l axis so both v7x TensorCores get a grid step
        for c in range(lb - 1, 0, -1):
            if l % c == 0:
                lb = c
                break
    return lb


def prepare_params(in_proj_w, in_proj_b, out_proj_w, out_proj_b, n_head):
    """Fold q-scale, transpose and cast weights to bf16 ONCE."""
    D3, D = in_proj_w.shape
    assert D3 == 3 * D and D % n_head == 0
    scale = (D // n_head) ** -0.5
    w_in = in_proj_w.astype(jnp.float32).at[:D, :].multiply(scale)
    b_in = in_proj_b.astype(jnp.float32).at[:D].multiply(scale)
    return dict(
        w_in=jnp.asarray(w_in.T, jnp.bfloat16),                    # (D, 3D)
        b_in=b_in.reshape(1, 3 * D).astype(jnp.float32),
        w_out=jnp.asarray(out_proj_w.astype(jnp.float32).T,        # (D, D)
                          jnp.bfloat16),
        b_out=out_proj_b.reshape(1, D).astype(jnp.float32),
        d_model=D, n_head=n_head)


def temporal_block_forward(x, params, T, attn_mask=None):
    """TEMPORAL_BLOCK.forward: x (l, b*T, d) -> (l, b*T, d), one fused kernel."""
    l, bt, d = x.shape
    assert bt % T == 0
    b = bt // T
    D, H = params["d_model"], params["n_head"]
    assert d == D
    # Alignment requirements of the fused (Lb, T, D) block layout:
    #   T multiple of 8 (sublane), d multiple of 128 (lane-dense output).
    assert T % 8 == 0 and d % 128 == 0, (T, d)

    # Additive (T, T) f32 mask (zeros if None; bool -> -1e9 where masked).
    # TODO(synk): per-head 3-D attn_mask (PyTorch option) is not supported.
    if attn_mask is None:
        mask = jnp.zeros((T, T), jnp.float32)
    elif attn_mask.dtype == jnp.bool_:
        mask = jnp.where(attn_mask, -1e9, 0.0).astype(jnp.float32)
    else:
        mask = attn_mask.astype(jnp.float32)

    Lb = _pick_lb(l, T, d, b)
    grid = (b, l // Lb)

    blk_spec = pl.BlockSpec((Lb, T, d), lambda bi, lj: (lj, bi, 0))
    const = lambda bi, lj: (0, 0)

    return pl.pallas_call(
        functools.partial(_temporal_attn_kernel, n_head=H),
        out_shape=jax.ShapeDtypeStruct((l, bt, d), jnp.float32),
        grid=grid,
        in_specs=[
            blk_spec,                                  # x block
            pl.BlockSpec((d, 3 * d), const),           # w_in  (resident)
            pl.BlockSpec((1, 3 * d), const),           # b_in
            pl.BlockSpec((d, d), const),               # w_out (resident)
            pl.BlockSpec((1, d), const),               # b_out
            pl.BlockSpec((T, T), const),               # additive mask
        ],
        out_specs=blk_spec,
        compiler_params=pltpu.CompilerParams(
            dimension_semantics=("parallel", "parallel")),
    )(x, params["w_in"], params["b_in"], params["w_out"], params["b_out"],
      mask)


# ----------------------------------------------------------------------------
# Pure-JAX reference (loose numerical check)
# ----------------------------------------------------------------------------
def _reference_forward(x, in_w, in_b, out_w, out_b, T, n_head, attn_mask=None):
    l, bt, d = x.shape
    b = bt // T
    xt = x.reshape(l, b, T, d).transpose(2, 1, 0, 3).reshape(T, b * l, d)
    Tq, B2, D = xt.shape
    dh = D // n_head
    qkv = jnp.einsum('tbd,ed->tbe', xt, in_w) + in_b
    q, k, v = qkv[..., :D], qkv[..., D:2 * D], qkv[..., 2 * D:]

    def heads(t):
        return t.reshape(Tq, B2, n_head, dh).transpose(1, 2, 0, 3)

    qh, kh, vh = heads(q) * dh ** -0.5, heads(k), heads(v)
    s = jnp.einsum('bhqd,bhkd->bhqk', qh, kh)
    if attn_mask is not None:
        s = s + attn_mask
    p_ = jax.nn.softmax(s, axis=-1)
    o = jnp.einsum('bhqk,bhkd->bhqd', p_, vh)
    o = o.transpose(2, 0, 1, 3).reshape(Tq, B2, D)
    o = jnp.einsum('tbd,ed->tbe', o, out_w) + out_b
    return o.reshape(Tq, b, l, d).transpose(2, 1, 0, 3).reshape(l, b * T, d)


# ----------------------------------------------------------------------------
if __name__ == "__main__":
    key = jax.random.PRNGKey(0)
    k_x, k_iw, k_ib, k_ow, k_ob = jax.random.split(key, 5)

    d_model, n_head, T = 128, 4, 8     # d_model multiple of 128 -> lane-dense
    l, b = 8, 2
    bt = b * T

    x = jax.random.normal(k_x, (l, bt, d_model), jnp.float32) * 0.5
    in_w = jax.random.normal(k_iw, (3 * d_model, d_model), jnp.float32) * 0.05
    in_b = jax.random.normal(k_ib, (3 * d_model,), jnp.float32) * 0.05
    out_w = jax.random.normal(k_ow, (d_model, d_model), jnp.float32) * 0.05
    out_b = jax.random.normal(k_ob, (d_model,), jnp.float32) * 0.05

    params = prepare_params(in_w, in_b, out_w, out_b, n_head)

    # ---- no mask ------------------------------------------------------
    y = temporal_block_forward(x, params, T=T, attn_mask=None)
    jax.block_until_ready(y)
    assert y.shape == (l, bt, d_model), y.shape
    y_ref = _reference_forward(x, in_w, in_b, out_w, out_b, T, n_head)
    err = float(jnp.max(jnp.abs(y - y_ref)))
    assert err < 5e-2, f"max abs err (no mask) {err}"

    # ---- boolean causal mask (True = masked, PyTorch convention) -------
    causal = jnp.triu(jnp.ones((T, T), jnp.bool_), k=1)
    y_m = temporal_block_forward(x, params, T=T, attn_mask=causal)
    jax.block_until_ready(y_m)
    add_mask = jnp.where(causal, -1e9, 0.0).astype(jnp.float32)
    y_m_ref = _reference_forward(x, in_w, in_b, out_w, out_b, T, n_head,
                                 attn_mask=add_mask)
    err_m = float(jnp.max(jnp.abs(y_m - y_m_ref)))
    assert err_m < 5e-2, f"max abs err (causal mask) {err_m}"

    print("KERNEL_OK")
</pallas_src>

<mosaic_0001>
module attributes {stable_mosaic.version = 11 : i64} {
  func.func @_temporal_attn_kernel(%arg0: i32, %arg1: i32, %arg2: memref<8x8x128xf32, #tpu.memory_space<vmem>>, %arg3: memref<128x384xbf16, #tpu.memory_space<vmem>>, %arg4: memref<1x384xf32, #tpu.memory_space<vmem>>, %arg5: memref<128x128xbf16, #tpu.memory_space<vmem>>, %arg6: memref<1x128xf32, #tpu.memory_space<vmem>>, %arg7: memref<8x8xf32, #tpu.memory_space<vmem>>, %arg8: memref<8x8x128xf32, #tpu.memory_space<vmem>>) attributes {dimension_semantics = [#tpu.dimension_semantics<parallel>, #tpu.dimension_semantics<parallel>], iteration_bounds = array<i64: 2, 1>, scalar_prefetch = 0 : i64, scratch_operands = 0 : i64, tpu.core_type = #tpu.core_type<tc>, window_params = [{transform_indices = @transform_0, window_bounds = array<i64: 8, 8, 128>}, {pipeline_mode = #tpu.pipeline_mode<synchronous>, transform_indices = @transform_1, window_bounds = array<i64: 128, 384>}, {pipeline_mode = #tpu.pipeline_mode<synchronous>, transform_indices = @transform_2, window_bounds = array<i64: 1, 384>}, {pipeline_mode = #tpu.pipeline_mode<synchronous>, transform_indices = @transform_3, window_bounds = array<i64: 128, 128>}, {pipeline_mode = #tpu.pipeline_mode<synchronous>, transform_indices = @transform_4, window_bounds = array<i64: 1, 128>}, {pipeline_mode = #tpu.pipeline_mode<synchronous>, transform_indices = @transform_5, window_bounds = array<i64: 8, 8>}, {transform_indices = @transform_6, window_bounds = array<i64: 8, 8, 128>}]} {
    %c0 = arith.constant 0 : index
    %c0_0 = arith.constant 0 : index
    %c0_1 = arith.constant 0 : index
    %0 = vector.load %arg2[%c0, %c0_0, %c0_1] : memref<8x8x128xf32, #tpu.memory_space<vmem>>, vector<8x8x128xf32>
    %1 = arith.truncf %0 : vector<8x8x128xf32> to vector<8x8x128xbf16>
    %2 = vector.shape_cast %1 : vector<8x8x128xbf16> to vector<64x128xbf16>
    %c0_2 = arith.constant 0 : index
    %c0_3 = arith.constant 0 : index
    %3 = vector.load %arg3[%c0_2, %c0_3] : memref<128x384xbf16, #tpu.memory_space<vmem>>, vector<128x384xbf16>
    %cst = arith.constant dense<0.000000e+00> : vector<64x384xf32>
    %4 = tpu.matmul %2, %3, %cst {dimension_numbers = #tpu.dot_dimension_numbers<[1], [0], [0], [1], [0, 0, 1, 1], [], []>} : vector<64x128xbf16>, vector<128x384xbf16>, vector<64x384xf32> -> vector<64x384xf32>
    %c0_4 = arith.constant 0 : index
    %c0_5 = arith.constant 0 : index
    %5 = vector.load %arg4[%c0_4, %c0_5] : memref<1x384xf32, #tpu.memory_space<vmem>>, vector<1x384xf32>
    %6 = vector.broadcast %5 : vector<1x384xf32> to vector<64x384xf32>
    %7 = arith.addf %4, %6 : vector<64x384xf32>
    %8 = arith.truncf %7 : vector<64x384xf32> to vector<64x384xbf16>
    %9 = vector.shape_cast %8 : vector<64x384xbf16> to vector<8x8x384xbf16>
    %10 = vector.extract_strided_slice %9 {offsets = [0, 0, 0], sizes = [8, 8, 128], strides = [1, 1, 1]} : vector<8x8x384xbf16> to vector<8x8x128xbf16>
    %11 = vector.extract_strided_slice %9 {offsets = [0, 0, 128], sizes = [8, 8, 128], strides = [1, 1, 1]} : vector<8x8x384xbf16> to vector<8x8x128xbf16>
    %12 = vector.extract_strided_slice %9 {offsets = [0, 0, 256], sizes = [8, 8, 128], strides = [1, 1, 1]} : vector<8x8x384xbf16> to vector<8x8x128xbf16>
    %c0_6 = arith.constant 0 : index
    %c0_7 = arith.constant 0 : index
    %13 = vector.load %arg7[%c0_6, %c0_7] : memref<8x8xf32, #tpu.memory_space<vmem>>, vector<8x8xf32>
    %14 = vector.shape_cast %13 : vector<8x8xf32> to vector<1x8x8xf32>
    %15 = vector.shape_cast %14 : vector<1x8x8xf32> to vector<1x8x8xf32>
    %16 = vector.broadcast %15 : vector<1x8x8xf32> to vector<8x8x8xf32>
    %c0_8 = arith.constant 0 : index
    %c0_9 = arith.constant 0 : index
    %17 = vector.load %arg5[%c0_8, %c0_9] : memref<128x128xbf16, #tpu.memory_space<vmem>>, vector<128x128xbf16>
    %cst_10 = arith.constant 0.000000e+00 : f32
    %18 = vector.broadcast %cst_10 : f32 to vector<64x128xf32>
    %19 = vector.extract_strided_slice %10 {offsets = [0, 0, 0], sizes = [8, 8, 32], strides = [1, 1, 1]} : vector<8x8x128xbf16> to vector<8x8x32xbf16>
    %20 = vector.extract_strided_slice %11 {offsets = [0, 0, 0], sizes = [8, 8, 32], strides = [1, 1, 1]} : vector<8x8x128xbf16> to vector<8x8x32xbf16>
    "tpu.trace_start"() <{level = 10 : i32, message = "bqd,bkd->bqk"}> : () -> ()
    %cst_11 = arith.constant dense<0.000000e+00> : vector<8x8x8xf32>
    %21 = tpu.matmul %19, %20, %cst_11 {dimension_numbers = #tpu.dot_dimension_numbers<[2], [2], [1], [1], [0, 0, 0, 1, 1, 1], [0], [0]>} : vector<8x8x32xbf16>, vector<8x8x32xbf16>, vector<8x8x8xf32> -> vector<8x8x8xf32>
    "tpu.trace_stop"() : () -> ()
    %22 = arith.addf %21, %16 : vector<8x8x8xf32>
    %cst_12 = arith.constant dense<0xFF800000> : vector<8x8xf32>
    %23 = vector.multi_reduction <maximumf>, %22, %cst_12 [2] : vector<8x8x8xf32> to vector<8x8xf32>
    %24 = vector.shape_cast %23 : vector<8x8xf32> to vector<8x8x1xf32>
    %25 = vector.broadcast %24 : vector<8x8x1xf32> to vector<8x8x8xf32>
    %26 = arith.subf %22, %25 : vector<8x8x8xf32>
    %27 = math.exp %26 : vector<8x8x8xf32>
    %cst_13 = arith.constant dense<0.000000e+00> : vector<8x8xf32>
    %28 = vector.multi_reduction <add>, %27, %cst_13 [2] : vector<8x8x8xf32> to vector<8x8xf32>
    %29 = vector.shape_cast %28 : vector<8x8xf32> to vector<8x8x1xf32>
    %30 = tpu.reciprocal %29 {approx = true} : vector<8x8x1xf32> -> vector<8x8x1xf32>
    %31 = vector.broadcast %30 : vector<8x8x1xf32> to vector<8x8x8xf32>
    %32 = arith.mulf %27, %31 : vector<8x8x8xf32>
    %33 = arith.truncf %32 : vector<8x8x8xf32> to vector<8x8x8xbf16>
    %34 = vector.extract_strided_slice %12 {offsets = [0, 0, 0], sizes = [8, 8, 32], strides = [1, 1, 1]} : vector<8x8x128xbf16> to vector<8x8x32xbf16>
    "tpu.trace_start"() <{level = 10 : i32, message = "bqk,bkd->bqd"}> : () -> ()
    %cst_14 = arith.constant dense<0.000000e+00> : vector<8x8x32xf32>
    %35 = tpu.matmul %33, %34, %cst_14 {dimension_numbers = #tpu.dot_dimension_numbers<[2], [1], [1], [2], [0, 0, 0, 1, 1, 2], [0], [0]>} : vector<8x8x8xbf16>, vector<8x8x32xbf16>, vector<8x8x32xf32> -> vector<8x8x32xf32>
    "tpu.trace_stop"() : () -> ()
    %36 = arith.truncf %35 : vector<8x8x32xf32> to vector<8x8x32xbf16>
    %37 = vector.shape_cast %36 : vector<8x8x32xbf16> to vector<64x32xbf16>
    %38 = vector.extract_strided_slice %17 {offsets = [0, 0], sizes = [32, 128], strides = [1, 1]} : vector<128x128xbf16> to vector<32x128xbf16>
    %cst_15 = arith.constant dense<0.000000e+00> : vector<64x128xf32>
    %39 = tpu.matmul %37, %38, %cst_15 {dimension_numbers = #tpu.dot_dimension_numbers<[1], [0], [0], [1], [0, 0, 1, 1], [], []>} : vector<64x32xbf16>, vector<32x128xbf16>, vector<64x128xf32> -> vector<64x128xf32>
    %40 = arith.addf %18, %39 : vector<64x128xf32>
    %41 = vector.extract_strided_slice %10 {offsets = [0, 0, 32], sizes = [8, 8, 32], strides = [1, 1, 1]} : vector<8x8x128xbf16> to vector<8x8x32xbf16>
    %42 = vector.extract_strided_slice %11 {offsets = [0, 0, 32], sizes = [8, 8, 32], strides = [1, 1, 1]} : vector<8x8x128xbf16> to vector<8x8x32xbf16>
    "tpu.trace_start"() <{level = 10 : i32, message = "bqd,bkd->bqk"}> : () -> ()
    %cst_16 = arith.constant dense<0.000000e+00> : vector<8x8x8xf32>
    %43 = tpu.matmul %41, %42, %cst_16 {dimension_numbers = #tpu.dot_dimension_numbers<[2], [2], [1], [1], [0, 0, 0, 1, 1, 1], [0], [0]>} : vector<8x8x32xbf16>, vector<8x8x32xbf16>, vector<8x8x8xf32> -> vector<8x8x8xf32>
    "tpu.trace_stop"() : () -> ()
    %44 = arith.addf %43, %16 : vector<8x8x8xf32>
    %cst_17 = arith.constant dense<0xFF800000> : vector<8x8xf32>
    %45 = vector.multi_reduction <maximumf>, %44, %cst_17 [2] : vector<8x8x8xf32> to vector<8x8xf32>
    %46 = vector.shape_cast %45 : vector<8x8xf32> to vector<8x8x1xf32>
    %47 = vector.broadcast %46 : vector<8x8x1xf32> to vector<8x8x8xf32>
    %48 = arith.subf %44, %47 : vector<8x8x8xf32>
    %49 = math.exp %48 : vector<8x8x8xf32>
    %cst_18 = arith.constant dense<0.000000e+00> : vector<8x8xf32>
    %50 = vector.multi_reduction <add>, %49, %cst_18 [2] : vector<8x8x8xf32> to vector<8x8xf32>
    %51 = vector.shape_cast %50 : vector<8x8xf32> to vector<8x8x1xf32>
    %52 = tpu.reciprocal %51 {approx = true} : vector<8x8x1xf32> -> vector<8x8x1xf32>
    %53 = vector.broadcast %52 : vector<8x8x1xf32> to vector<8x8x8xf32>
    %54 = arith.mulf %49, %53 : vector<8x8x8xf32>
    %55 = arith.truncf %54 : vector<8x8x8xf32> to vector<8x8x8xbf16>
    %56 = vector.extract_strided_slice %12 {offsets = [0, 0, 32], sizes = [8, 8, 32], strides = [1, 1, 1]} : vector<8x8x128xbf16> to vector<8x8x32xbf16>
    "tpu.trace_start"() <{level = 10 : i32, message = "bqk,bkd->bqd"}> : () -> ()
    %cst_19 = arith.constant dense<0.000000e+00> : vector<8x8x32xf32>
    %57 = tpu.matmul %55, %56, %cst_19 {dimension_numbers = #tpu.dot_dimension_numbers<[2], [1], [1], [2], [0, 0, 0, 1, 1, 2], [0], [0]>} : vector<8x8x8xbf16>, vector<8x8x32xbf16>, vector<8x8x32xf32> -> vector<8x8x32xf32>
    "tpu.trace_stop"() : () -> ()
    %58 = arith.truncf %57 : vector<8x8x32xf32> to vector<8x8x32xbf16>
    %59 = vector.shape_cast %58 : vector<8x8x32xbf16> to vector<64x32xbf16>
    %60 = vector.extract_strided_slice %17 {offsets = [32, 0], sizes = [32, 128], strides = [1, 1]} : vector<128x128xbf16> to vector<32x128xbf16>
    %cst_20 = arith.constant dense<0.000000e+00> : vector<64x128xf32>
    %61 = tpu.matmul %59, %60, %cst_20 {dimension_numbers = #tpu.dot_dimension_numbers<[1], [0], [0], [1], [0, 0, 1, 1], [], []>} : vector<64x32xbf16>, vector<32x128xbf16>, vector<64x128xf32> -> vector<64x128xf32>
    %62 = arith.addf %40, %61 : vector<64x128xf32>
    %63 = vector.extract_strided_slice %10 {offsets = [0, 0, 64], sizes = [8, 8, 32], strides = [1, 1, 1]} : vector<8x8x128xbf16> to vector<8x8x32xbf16>
    %64 = vector.extract_strided_slice %11 {offsets = [0, 0, 64], sizes = [8, 8, 32], strides = [1, 1, 1]} : vector<8x8x128xbf16> to vector<8x8x32xbf16>
    "tpu.trace_start"() <{level = 10 : i32, message = "bqd,bkd->bqk"}> : () -> ()
    %cst_21 = arith.constant dense<0.000000e+00> : vector<8x8x8xf32>
    %65 = tpu.matmul %63, %64, %cst_21 {dimension_numbers = #tpu.dot_dimension_numbers<[2], [2], [1], [1], [0, 0, 0, 1, 1, 1], [0], [0]>} : vector<8x8x32xbf16>, vector<8x8x32xbf16>, vector<8x8x8xf32> -> vector<8x8x8xf32>
    "tpu.trace_stop"() : () -> ()
    %66 = arith.addf %65, %16 : vector<8x8x8xf32>
    %cst_22 = arith.constant dense<0xFF800000> : vector<8x8xf32>
    %67 = vector.multi_reduction <maximumf>, %66, %cst_22 [2] : vector<8x8x8xf32> to vector<8x8xf32>
    %68 = vector.shape_cast %67 : vector<8x8xf32> to vector<8x8x1xf32>
    %69 = vector.broadcast %68 : vector<8x8x1xf32> to vector<8x8x8xf32>
    %70 = arith.subf %66, %69 : vector<8x8x8xf32>
    %71 = math.exp %70 : vector<8x8x8xf32>
    %cst_23 = arith.constant dense<0.000000e+00> : vector<8x8xf32>
    %72 = vector.multi_reduction <add>, %71, %cst_23 [2] : vector<8x8x8xf32> to vector<8x8xf32>
    %73 = vector.shape_cast %72 : vector<8x8xf32> to vector<8x8x1xf32>
    %74 = tpu.reciprocal %73 {approx = true} : vector<8x8x1xf32> -> vector<8x8x1xf32>
    %75 = vector.broadcast %74 : vector<8x8x1xf32> to vector<8x8x8xf32>
    %76 = arith.mulf %71, %75 : vector<8x8x8xf32>
    %77 = arith.truncf %76 : vector<8x8x8xf32> to vector<8x8x8xbf16>
    %78 = vector.extract_strided_slice %12 {offsets = [0, 0, 64], sizes = [8, 8, 32], strides = [1, 1, 1]} : vector<8x8x128xbf16> to vector<8x8x32xbf16>
    "tpu.trace_start"() <{level = 10 : i32, message = "bqk,bkd->bqd"}> : () -> ()
    %cst_24 = arith.constant dense<0.000000e+00> : vector<8x8x32xf32>
    %79 = tpu.matmul %77, %78, %cst_24 {dimension_numbers = #tpu.dot_dimension_numbers<[2], [1], [1], [2], [0, 0, 0, 1, 1, 2], [0], [0]>} : vector<8x8x8xbf16>, vector<8x8x32xbf16>, vector<8x8x32xf32> -> vector<8x8x32xf32>
    "tpu.trace_stop"() : () -> ()
    %80 = arith.truncf %79 : vector<8x8x32xf32> to vector<8x8x32xbf16>
    %81 = vector.shape_cast %80 : vector<8x8x32xbf16> to vector<64x32xbf16>
    %82 = vector.extract_strided_slice %17 {offsets = [64, 0], sizes = [32, 128], strides = [1, 1]} : vector<128x128xbf16> to vector<32x128xbf16>
    %cst_25 = arith.constant dense<0.000000e+00> : vector<64x128xf32>
    %83 = tpu.matmul %81, %82, %cst_25 {dimension_numbers = #tpu.dot_dimension_numbers<[1], [0], [0], [1], [0, 0, 1, 1], [], []>} : vector<64x32xbf16>, vector<32x128xbf16>, vector<64x128xf32> -> vector<64x128xf32>
    %84 = arith.addf %62, %83 : vector<64x128xf32>
    %85 = vector.extract_strided_slice %10 {offsets = [0, 0, 96], sizes = [8, 8, 32], strides = [1, 1, 1]} : vector<8x8x128xbf16> to vector<8x8x32xbf16>
    %86 = vector.extract_strided_slice %11 {offsets = [0, 0, 96], sizes = [8, 8, 32], strides = [1, 1, 1]} : vector<8x8x128xbf16> to vector<8x8x32xbf16>
    "tpu.trace_start"() <{level = 10 : i32, message = "bqd,bkd->bqk"}> : () -> ()
    %cst_26 = arith.constant dense<0.000000e+00> : vector<8x8x8xf32>
    %87 = tpu.matmul %85, %86, %cst_26 {dimension_numbers = #tpu.dot_dimension_numbers<[2], [2], [1], [1], [0, 0, 0, 1, 1, 1], [0], [0]>} : vector<8x8x32xbf16>, vector<8x8x32xbf16>, vector<8x8x8xf32> -> vector<8x8x8xf32>
    "tpu.trace_stop"() : () -> ()
    %88 = arith.addf %87, %16 : vector<8x8x8xf32>
    %cst_27 = arith.constant dense<0xFF800000> : vector<8x8xf32>
    %89 = vector.multi_reduction <maximumf>, %88, %cst_27 [2] : vector<8x8x8xf32> to vector<8x8xf32>
    %90 = vector.shape_cast %89 : vector<8x8xf32> to vector<8x8x1xf32>
    %91 = vector.broadcast %90 : vector<8x8x1xf32> to vector<8x8x8xf32>
    %92 = arith.subf %88, %91 : vector<8x8x8xf32>
    %93 = math.exp %92 : vector<8x8x8xf32>
    %cst_28 = arith.constant dense<0.000000e+00> : vector<8x8xf32>
    %94 = vector.multi_reduction <add>, %93, %cst_28 [2] : vector<8x8x8xf32> to vector<8x8xf32>
    %95 = vector.shape_cast %94 : vector<8x8xf32> to vector<8x8x1xf32>
    %96 = tpu.reciprocal %95 {approx = true} : vector<8x8x1xf32> -> vector<8x8x1xf32>
    %97 = vector.broadcast %96 : vector<8x8x1xf32> to vector<8x8x8xf32>
    %98 = arith.mulf %93, %97 : vector<8x8x8xf32>
    %99 = arith.truncf %98 : vector<8x8x8xf32> to vector<8x8x8xbf16>
    %100 = vector.extract_strided_slice %12 {offsets = [0, 0, 96], sizes = [8, 8, 32], strides = [1, 1, 1]} : vector<8x8x128xbf16> to vector<8x8x32xbf16>
    "tpu.trace_start"() <{level = 10 : i32, message = "bqk,bkd->bqd"}> : () -> ()
    %cst_29 = arith.constant dense<0.000000e+00> : vector<8x8x32xf32>
    %101 = tpu.matmul %99, %100, %cst_29 {dimension_numbers = #tpu.dot_dimension_numbers<[2], [1], [1], [2], [0, 0, 0, 1, 1, 2], [0], [0]>} : vector<8x8x8xbf16>, vector<8x8x32xbf16>, vector<8x8x32xf32> -> vector<8x8x32xf32>
    "tpu.trace_stop"() : () -> ()
    %102 = arith.truncf %101 : vector<8x8x32xf32> to vector<8x8x32xbf16>
    %103 = vector.shape_cast %102 : vector<8x8x32xbf16> to vector<64x32xbf16>
    %104 = vector.extract_strided_slice %17 {offsets = [96, 0], sizes = [32, 128], strides = [1, 1]} : vector<128x128xbf16> to vector<32x128xbf16>
    %cst_30 = arith.constant dense<0.000000e+00> : vector<64x128xf32>
    %105 = tpu.matmul %103, %104, %cst_30 {dimension_numbers = #tpu.dot_dimension_numbers<[1], [0], [0], [1], [0, 0, 1, 1], [], []>} : vector<64x32xbf16>, vector<32x128xbf16>, vector<64x128xf32> -> vector<64x128xf32>
    %106 = arith.addf %84, %105 : vector<64x128xf32>
    %c0_31 = arith.constant 0 : index
    %c0_32 = arith.constant 0 : index
    %107 = vector.load %arg6[%c0_31, %c0_32] : memref<1x128xf32, #tpu.memory_space<vmem>>, vector<1x128xf32>
    %108 = vector.broadcast %107 : vector<1x128xf32> to vector<64x128xf32>
    %109 = arith.addf %106, %108 : vector<64x128xf32>
    %110 = vector.shape_cast %109 : vector<64x128xf32> to vector<8x8x128xf32>
    %c0_33 = arith.constant 0 : index
    %c0_34 = arith.constant 0 : index
    %c0_35 = arith.constant 0 : index
    %111 = vector.load %arg8[%c0_33, %c0_34, %c0_35] : memref<8x8x128xf32, #tpu.memory_space<vmem>>, vector<8x8x128xf32>
    tpu.vector_store %arg8[%c0_33, %c0_34, %c0_35], %110 {strides = array<i32>} : memref<8x8x128xf32, #tpu.memory_space<vmem>>, vector<8x8x128xf32>,
    return
  }
  func.func @transform_0(%arg0: i32, %arg1: i32) -> (i32, i32, i32) {
    %c0_i32 = arith.constant 0 : i32
    %c0_i32_0 = arith.constant 0 : i32
    return %arg1, %arg0, %c0_i32 : i32, i32, i32
  }
  func.func @transform_1(%arg0: i32, %arg1: i32) -> (i32, i32) {
    %c0_i32 = arith.constant 0 : i32
    %c0_i32_0 = arith.constant 0 : i32
    %c0_i32_1 = arith.constant 0 : i32
    return %c0_i32, %c0_i32_0 : i32, i32
  }
  func.func @transform_2(%arg0: i32, %arg1: i32) -> (i32, i32) {
    %c0_i32 = arith.constant 0 : i32
    %c0_i32_0 = arith.constant 0 : i32
    %c0_i32_1 = arith.constant 0 : i32
    return %c0_i32, %c0_i32_0 : i32, i32
  }
  func.func @transform_3(%arg0: i32, %arg1: i32) -> (i32, i32) {
    %c0_i32 = arith.constant 0 : i32
    %c0_i32_0 = arith.constant 0 : i32
    %c0_i32_1 = arith.constant 0 : i32
    return %c0_i32, %c0_i32_0 : i32, i32
  }
  func.func @transform_4(%arg0: i32, %arg1: i32) -> (i32, i32) {
    %c0_i32 = arith.constant 0 : i32
    %c0_i32_0 = arith.constant 0 : i32
    %c0_i32_1 = arith.constant 0 : i32
    return %c0_i32, %c0_i32_0 : i32, i32
  }
  func.func @transform_5(%arg0: i32, %arg1: i32) -> (i32, i32) {
    %c0_i32 = arith.constant 0 : i32
    %c0_i32_0 = arith.constant 0 : i32
    %c0_i32_1 = arith.constant 0 : i32
    return %c0_i32, %c0_i32_0 : i32, i32
  }
  func.func @transform_6(%arg0: i32, %arg1: i32) -> (i32, i32, i32) {
    %c0_i32 = arith.constant 0 : i32
    %c0_i32_0 = arith.constant 0 : i32
    return %arg1, %arg0, %c0_i32 : i32, i32, i32
  }
}

</mosaic_0001>

<llo_original>
// kernel: tpu_custom_call.1
$region0: #{tpu_custom_call.1}
  #allocation0 [shape = 'u32[]', space=smem, size = 0x4, offset = 0x4, fixed_abs, tag = 'smem constant byte address 0x4 - core index']
  #allocation1 [shape = 'u32[144,128]{1,0:T(1,128)}', space=vmem, size = 0x12000, scoped, tag = 'internal scratch']
  %s0 = inlined_call_operand.hbm [shape: f32[8,16,128], index: 0, kind: input, shape index: {}]
  %s1 = inlined_call_operand.hbm [shape: bf16[128,384], index: 1, kind: input, shape index: {}]
  %s2 = inlined_call_operand.hbm [shape: f32[1,384], index: 2, kind: input, shape index: {}]
  %s3 = inlined_call_operand.hbm [shape: bf16[128,128], index: 3, kind: input, shape index: {}]
  %s4 = inlined_call_operand.vmem [shape: f32[1,128], index: 4, kind: input, shape index: {}]
  %s5 = inlined_call_operand.vmem [shape: f32[8,8], index: 5, kind: input, shape index: {}]
  %s6 = inlined_call_operand.hbm [shape: f32[8,16,128], index: 6, kind: output, shape index: {}]
  %s7 = sld [smem:[#allocation0]]
  $region73: #{tpu_custom_call.1} parent=0
    _
  %s9 = ssub.s32 1, %s7
  %s10 = scalar_select 0, %s9, %s7
  $region1: #{tpu_custom_call.1} parent=0
    #allocation2 [shape = 'u8[65536]{0}', space=vmem, size = 0x10000, scoped, tag = 'input window, operand 0']
    #allocation3 [shape = 's32[2]{0}', space=sflag, size = 0x8, scoped, tag = 'scoped memory for tpu_custom_call.1']
    #allocation4 [shape = 's32[2]{0}', space=sflag, size = 0x8, scoped, tag = 'scoped memory for tpu_custom_call.1']
    #allocation5 [shape = 'u8[98304]{0}', space=vmem, size = 0x18000, scoped, tag = 'input window, operand 1, single buffered']
    #allocation6 [shape = 's32[1]{0}', space=sflag, size = 0x4, scoped, tag = 'scoped memory for tpu_custom_call.1']
    #allocation7 [shape = 'u8[1536]{0}', space=vmem, size = 0x800, scoped, tag = 'input window, operand 2, single buffered']
    #allocation8 [shape = 'u8[32768]{0}', space=vmem, size = 0x8000, scoped, tag = 'input window, operand 3, single buffered']
    #allocation9 [shape = 's32[1]{0}', space=sflag, size = 0x4, scoped, tag = 'scoped memory for tpu_custom_call.1']
    #allocation10 [shape = 'u8[65536]{0}', space=vmem, size = 0x10000, scoped, tag = 'output window, operand 0']
    %11 = vsyncpa [#allocation3], 0
    %s12 = scalar_lea.sflag [#allocation3], 1
    %13 = vsyncpa %s12, 0
    %14 = vsyncpa [#allocation6], 0
    %15 = vsyncpa [#allocation9], 0
    %16 = vsyncpa [#allocation4], 0
    %s17 = scalar_lea.sflag [#allocation4], 1
    %18 = vsyncpa %s17, 0
    loop: start=0, step=1, limit=4
    $region2: #{tpu_custom_call.1} parent=1 // loop_pre_header
      _
    $region3: #{tpu_custom_call.1} parent=1 // loop_header
      %s20 = sphi 0, %s24
      %p21 = scmp.ge.s32.totalorder %s20, 4
      %s27 = sphi 0, %s39
      %s28 = sphi 0, %s35
      %s29 = sphi 0, %s27
      %s30 = sphi 0, %s28
      %s31 = sphi 0, %s29
      %s32 = sphi 0, %s30
      %s44 = sphi 0, %s46
      %s47 = sphi 0, %s44
      %s48 = sphi 0, %s47
      %s64 = sphi 0, %s48
      %s68 = sphi 0, %s68
      %s70 = sphi 0, %s68
      %s71 = sphi 0, %s70
      %s85 = sphi 0, %s71
      %s89 = sphi 0, %s89
      %s91 = sphi 0, %s89
      %s92 = sphi 0, %s91
      %s106 = sphi 0, %s92
      %s110 = sphi 0, %s110
      %s112 = sphi 0, %s110
      %s113 = sphi 0, %s112
      %s127 = sphi 0, %s113
      %s131 = sphi 0, %s131
      %s133 = sphi 0, %s131
      %s134 = sphi 0, %s133
      %s148 = sphi 0, %s134
      %s152 = sphi 0, %s152
      %s154 = sphi 0, %s152
      %s155 = sphi 0, %s154
      %s169 = sphi 0, %s155
      %s177 = sphi 0, %s179
      %s180 = sphi 0, %s177
      %s181 = sphi 0, %s180
      %s197 = sphi 0, %s181
    $region4: #{tpu_custom_call.1} parent=1 // loop_header_branch
      %23 = sbr.rel (%p21) target = $region8
    $region5: #{tpu_custom_call.1} parent=1 // loop_body
      %s25 = ssub.s32 %s20, 1
      %s26 = ssub.s32 %s20, 2
      %s33 = sadd.s32 1, %s28
      %p34 = scmp.ge.s32.totalorder %s33, 1
      %s35 = scalar_select %p34, 0, %s33
      %s36 = sadd.s32 1, %s27
      %s37 = scalar_select %p34, %s36, %s27
      %p38 = scmp.ge.s32.totalorder %s37, 2
      %s39 = scalar_select %p38, 0, %s37
      %s40 = ssub.s32 %s28, %s35
      %s41 = ssub.s32 %s27, %s39
      %s42 = sor.u32 %s40, %s41
      %p43 = scmp.eq.s32.totalorder %s42, 0
      %s45 = sadd.s32 %s44, 1
      %s46 = scalar_select %p43, %s44, %s45
      %p49 = pneg %p43
      %p50 = scmp.eq.s32.totalorder %s20, 1
      %p51 = por %p49, %p50
      %p52 = scmp.ne.s32.totalorder %s44, %s47
      %p53 = scmp.eq.s32.totalorder %s20, 0
      %p54 = por %p52, %p53
      %p55 = scmp.ne.s32.totalorder %s44, %s47
      %p56 = scmp.eq.s32.totalorder %s25, 1
      %p57 = por %p55, %p56
      %p58 = scmp.ne.s32.totalorder %s47, %s48
      %p59 = scmp.eq.s32.totalorder %s25, 0
      %p60 = por %p58, %p59
      %p61 = scmp.ne.s32.totalorder %s47, %s48
      %p62 = scmp.eq.s32.totalorder %s26, 1
      %p63 = por %p61, %p62
      %p65 = scmp.ne.s32.totalorder %s48, %s64
      %p66 = scmp.eq.s32.totalorder %s26, 0
      %p67 = por %p65, %p66
      %s69 = sadd.s32 %s68, 1
      %p72 = scmp.eq.s32.totalorder %s20, 1
      %p73 = scmp.ne.s32.totalorder %s68, %s70
      %p74 = scmp.eq.s32.totalorder %s20, 0
      %p75 = por %p73, %p74
      %p76 = scmp.ne.s32.totalorder %s68, %s70
      %p77 = scmp.eq.s32.totalorder %s25, 1
      %p78 = por %p76, %p77
      %p79 = scmp.ne.s32.totalorder %s70, %s71
      %p80 = scmp.eq.s32.totalorder %s25, 0
      %p81 = por %p79, %p80
      %p82 = scmp.ne.s32.totalorder %s70, %s71
      %p83 = scmp.eq.s32.totalorder %s26, 1
      %p84 = por %p82, %p83
      %p86 = scmp.ne.s32.totalorder %s71, %s85
      %p87 = scmp.eq.s32.totalorder %s26, 0
      %p88 = por %p86, %p87
      %s90 = sadd.s32 %s89, 1
      %p93 = scmp.eq.s32.totalorder %s20, 1
      %p94 = scmp.ne.s32.totalorder %s89, %s91
      %p95 = scmp.eq.s32.totalorder %s20, 0
      %p96 = por %p94, %p95
      %p97 = scmp.ne.s32.totalorder %s89, %s91
      %p98 = scmp.eq.s32.totalorder %s25, 1
      %p99 = por %p97, %p98
      %p100 = scmp.ne.s32.totalorder %s91, %s92
      %p101 = scmp.eq.s32.totalorder %s25, 0
      %p102 = por %p100, %p101
      %p103 = scmp.ne.s32.totalorder %s91, %s92
      %p104 = scmp.eq.s32.totalorder %s26, 1
      %p105 = por %p103, %p104
      %p107 = scmp.ne.s32.totalorder %s92, %s106
      %p108 = scmp.eq.s32.totalorder %s26, 0
      %p109 = por %p107, %p108
      %s111 = sadd.s32 %s110, 1
      %p114 = scmp.eq.s32.totalorder %s20, 1
      %p115 = scmp.ne.s32.totalorder %s110, %s112
      %p116 = scmp.eq.s32.totalorder %s20, 0
      %p117 = por %p115, %p116
      %p118 = scmp.ne.s32.totalorder %s110, %s112
      %p119 = scmp.eq.s32.totalorder %s25, 1
      %p120 = por %p118, %p119
      %p121 = scmp.ne.s32.totalorder %s112, %s113
      %p122 = scmp.eq.s32.totalorder %s25, 0
      %p123 = por %p121, %p122
      %p124 = scmp.ne.s32.totalorder %s112, %s113
      %p125 = scmp.eq.s32.totalorder %s26, 1
      %p126 = por %p124, %p125
      %p128 = scmp.ne.s32.totalorder %s113, %s127
      %p129 = scmp.eq.s32.totalorder %s26, 0
      %p130 = por %p128, %p129
      %s132 = sadd.s32 %s131, 1
      %p135 = scmp.eq.s32.totalorder %s20, 1
      %p136 = scmp.ne.s32.totalorder %s131, %s133
      %p137 = scmp.eq.s32.totalorder %s20, 0
      %p138 = por %p136, %p137
      %p139 = scmp.ne.s32.totalorder %s131, %s133
      %p140 = scmp.eq.s32.totalorder %s25, 1
      %p141 = por %p139, %p140
      %p142 = scmp.ne.s32.totalorder %s133, %s134
      %p143 = scmp.eq.s32.totalorder %s25, 0
      %p144 = por %p142, %p143
      %p145 = scmp.ne.s32.totalorder %s133, %s134
      %p146 = scmp.eq.s32.totalorder %s26, 1
      %p147 = por %p145, %p146
      %p149 = scmp.ne.s32.totalorder %s134, %s148
      %p150 = scmp.eq.s32.totalorder %s26, 0
      %p151 = por %p149, %p150
      %s153 = sadd.s32 %s152, 1
      %p156 = scmp.eq.s32.totalorder %s20, 1
      %p157 = scmp.ne.s32.totalorder %s152, %s154
      %p158 = scmp.eq.s32.totalorder %s20, 0
      %p159 = por %p157, %p158
      %p160 = scmp.ne.s32.totalorder %s152, %s154
      %p161 = scmp.eq.s32.totalorder %s25, 1
      %p162 = por %p160, %p161
      %p163 = scmp.ne.s32.totalorder %s154, %s155
      %p164 = scmp.eq.s32.totalorder %s25, 0
      %p165 = por %p163, %p164
      %p166 = scmp.ne.s32.totalorder %s154, %s155
      %p167 = scmp.eq.s32.totalorder %s26, 1
      %p168 = por %p166, %p167
      %p170 = scmp.ne.s32.totalorder %s155, %s169
      %p171 = scmp.eq.s32.totalorder %s26, 0
      %p172 = por %p170, %p171
      %s173 = ssub.s32 %s28, %s35
      %s174 = ssub.s32 %s27, %s39
      %s175 = sor.u32 %s173, %s174
      %p176 = scmp.eq.s32.totalorder %s175, 0
      %s178 = sadd.s32 %s177, 1
      %s179 = scalar_select %p176, %s177, %s178
      %p182 = pneg %p176
      %p183 = scmp.eq.s32.totalorder %s20, 1
      %p184 = por %p182, %p183
      %p185 = scmp.ne.s32.totalorder %s177, %s180
      %p186 = scmp.eq.s32.totalorder %s20, 0
      %p187 = por %p185, %p186
      %p188 = scmp.ne.s32.totalorder %s177, %s180
      %p189 = scmp.eq.s32.totalorder %s25, 1
      %p190 = por %p188, %p189
      %p191 = scmp.ne.s32.totalorder %s180, %s181
      %p192 = scmp.eq.s32.totalorder %s25, 0
      %p193 = por %p191, %p192
      %p194 = scmp.ne.s32.totalorder %s180, %s181
      %p195 = scmp.eq.s32.totalorder %s26, 1
      %p196 = por %p194, %p195
      %p198 = scmp.ne.s32.totalorder %s181, %s197
      %p199 = scmp.eq.s32.totalorder %s26, 0
      %p200 = por %p198, %p199
      %p201 = scmp.le.s32.totalorder 1, %s20
      %p202 = scmp.lt.s32.totalorder %s20, 3
      %p203 = pnand %p201, %p202
      %p204 = pneg %p203
      // Predicated region
      $region9: #{tpu_custom_call.1} parent=5 // pred_check
        _
      $region10: #{tpu_custom_call.1} parent=5 // pred_check_branch
        %206 = sbr.rel (%p203) target = $region12
      $region11: #{tpu_custom_call.1} parent=5 // pred_region
        %s207 = ssub.s32 %s20, 1
        // Predicated region
        $region13: #{tpu_custom_call.1} parent=11 // pred_check
          %p208 = pneg %p81
        $region14: #{tpu_custom_call.1} parent=11 // pred_check_branch
          %210 = sbr.rel (%p208) target = $region16
        $region15: #{tpu_custom_call.1} parent=11 // pred_region
          %s212 = ssub.s32 3072, 3072
          %213 = vsyncadd [#allocation6], %s212
          %s214 = sshll.u32 [#allocation5], 4
          %s215 = int_to_ptr.vmem [resolvable:$true] %s214
          %220 = dma.hbm_to_vmem [thread:$0]  %s1, 3072, %s215, [#allocation6], 192, 192, 12
        $region16: #{tpu_custom_call.1} parent=11 // pred_fallthru
          _
        // Predicated region
        $region17: #{tpu_custom_call.1} parent=11 // pred_check
          %p221 = pneg %p102
        $region18: #{tpu_custom_call.1} parent=11 // pred_check_branch
          %223 = sbr.rel (%p221) target = $region20
        $region19: #{tpu_custom_call.1} parent=11 // pred_region
          %s225 = ssub.s32 48, 48
          %226 = vsyncadd [#allocation6], %s225
          %s228 = sshll.u32 [#allocation7], 4
          %s229 = int_to_ptr.vmem [resolvable:$true] %s228
          %231 = dma.hbm_to_vmem [thread:$0]  %s2, 48, %s229, [#allocation6]
        $region20: #{tpu_custom_call.1} parent=11 // pred_fallthru
          _
        // Predicated region
        $region21: #{tpu_custom_call.1} parent=11 // pred_check
          %p232 = pneg %p123
        $region22: #{tpu_custom_call.1} parent=11 // pred_check_branch
          %234 = sbr.rel (%p232) target = $region24
        $region23: #{tpu_custom_call.1} parent=11 // pred_region
          %s236 = ssub.s32 1024, 1024
          %237 = vsyncadd [#allocation9], %s236
          %s238 = sshll.u32 [#allocation8], 4
          %s239 = int_to_ptr.vmem [resolvable:$true] %s238
          %244 = dma.hbm_to_vmem [thread:$0]  %s3, 1024, %s239, [#allocation9], 64, 64, 4
        $region24: #{tpu_custom_call.1} parent=11 // pred_fallthru
          _
        // Predicated region
        $region25: #{tpu_custom_call.1} parent=11 // pred_check
          %p245 = pneg %p144
        $region26: #{tpu_custom_call.1} parent=11 // pred_check_branch
          %247 = sbr.rel (%p245) target = $region28
        $region27: #{tpu_custom_call.1} parent=11 // pred_region
          _
        $region28: #{tpu_custom_call.1} parent=11 // pred_fallthru
          _
        // Predicated region
        $region29: #{tpu_custom_call.1} parent=11 // pred_check
          %p248 = pneg %p165
        $region30: #{tpu_custom_call.1} parent=11 // pred_check_branch
          %250 = sbr.rel (%p248) target = $region32
        $region31: #{tpu_custom_call.1} parent=11 // pred_region
          _
        $region32: #{tpu_custom_call.1} parent=11 // pred_fallthru
          _
      $region12: #{tpu_custom_call.1} parent=5 // pred_fallthru
        _
      %p251 = scmp.lt.s32.totalorder %s20, 2
      // Predicated region
      $region33: #{tpu_custom_call.1} parent=5 // pred_check
        %p252 = pneg %p251
      $region34: #{tpu_custom_call.1} parent=5 // pred_check_branch
        %254 = sbr.rel (%p252) target = $region36
      $region35: #{tpu_custom_call.1} parent=5 // pred_region
        // Predicated region
        $region37: #{tpu_custom_call.1} parent=35 // pred_check
          %p255 = pneg %p54
        $region38: #{tpu_custom_call.1} parent=35 // pred_check_branch
          %257 = sbr.rel (%p255) target = $region40
        $region39: #{tpu_custom_call.1} parent=35 // pred_region
          %s258 = sand.u32 %s44, 1
          %s259 = scalar_lea.sflag [#allocation3], %s258
          %s260 = sand.u32 %s44, 1
          %s261 = smul.addr %s260, 64
          %s262 = scalar_lea.vmem [#allocation2], %s261
          %s263 = smul.u32 8, %s28
          %s265 = ssub.s32 1024, 1024
          %266 = vsyncadd %s259, %s265
          %s267 = smul.addr %s263, 2
          %s268 = sadd.s32 %s27, %s267
          %s269 = smul.addr %s268, 128
          %s270 = scalar_lea.hbm %s0, %s269
          %s271 = sshll.u32 %s262, 4
          %s272 = int_to_ptr.vmem [resolvable:$true] %s271
          %277 = dma.hbm_to_vmem [thread:$0]  %s270, 1024, %s272, %s259, 256, 128, 8
        $region40: #{tpu_custom_call.1} parent=35 // pred_fallthru
          _
      $region36: #{tpu_custom_call.1} parent=5 // pred_fallthru
        _
      %p278 = scmp.le.s32.totalorder 1, %s20
      %p279 = scmp.lt.s32.totalorder %s20, 3
      %p280 = pnand %p278, %p279
      %p281 = pneg %p280
      // Predicated region
      $region41: #{tpu_custom_call.1} parent=5 // pred_check
        _
      $region42: #{tpu_custom_call.1} parent=5 // pred_check_branch
        %283 = sbr.rel (%p280) target = $region44
      $region43: #{tpu_custom_call.1} parent=5 // pred_region
        %s284 = ssub.s32 %s20, 1
        %s285 = sand.u32 %s47, 1
        %s286 = scalar_lea.sflag [#allocation3], %s285
        %s287 = sand.u32 %s47, 1
        %s288 = smul.addr %s287, 64
        %s289 = scalar_lea.vmem [#allocation2], %s288
        // Predicated region
        $region45: #{tpu_custom_call.1} parent=43 // pred_check
          %p290 = pneg %p60
        $region46: #{tpu_custom_call.1} parent=43 // pred_check_branch
          %292 = sbr.rel (%p290) target = $region48
        $region47: #{tpu_custom_call.1} parent=43 // pred_region
          %293 = dma.done %s286, 1024
        $region48: #{tpu_custom_call.1} parent=43 // pred_fallthru
          _
        // Predicated region
        $region49: #{tpu_custom_call.1} parent=43 // pred_check
          %p294 = pneg %p81
        $region50: #{tpu_custom_call.1} parent=43 // pred_check_branch
          %296 = sbr.rel (%p294) target = $region52
        $region51: #{tpu_custom_call.1} parent=43 // pred_region
          %297 = dma.done [#allocation6], 3072
        $region52: #{tpu_custom_call.1} parent=43 // pred_fallthru
          _
        // Predicated region
        $region53: #{tpu_custom_call.1} parent=43 // pred_check
          %p298 = pneg %p102
        $region54: #{tpu_custom_call.1} parent=43 // pred_check_branch
          %300 = sbr.rel (%p298) target = $region56
        $region55: #{tpu_custom_call.1} parent=43 // pred_region
          %301 = dma.done [#allocation6], 48
        $region56: #{tpu_custom_call.1} parent=43 // pred_fallthru
          _
        // Predicated region
        $region57: #{tpu_custom_call.1} parent=43 // pred_check
          %p302 = pneg %p123
        $region58: #{tpu_custom_call.1} parent=43 // pred_check_branch
          %304 = sbr.rel (%p302) target = $region60
        $region59: #{tpu_custom_call.1} parent=43 // pred_region
          %305 = dma.done [#allocation9], 1024
        $region60: #{tpu_custom_call.1} parent=43 // pred_fallthru
          _
        %s306 = sand.u32 %s47, 1
        %s307 = scalar_lea.sflag [#allocation3], %s306
        %s308 = sand.u32 %s47, 1
        %s309 = smul.addr %s308, 64
        %s310 = scalar_lea.vmem [#allocation2], %s309
        %p311 = pneg %p60
        %p312 = pneg %p57
        %p313 = pneg %p81
        %p314 = pneg %p78
        %p315 = pneg %p102
        %p316 = pneg %p99
        %p317 = pneg %p123
        %p318 = pneg %p120
        %p319 = pneg %p144
        %p320 = pneg %p141
        %p321 = pneg %p165
        %p322 = pneg %p162
        %p323 = pneg %p193
        %p324 = pneg %p190
        %s325 = sand.u32 %s180, 1
        %s326 = scalar_lea.sflag [#allocation4], %s325
        %s327 = sand.u32 %s180, 1
        %s328 = smul.addr %s327, 64
        %s329 = scalar_lea.vmem [#allocation10], %s328
        %s330 = smul.u32 8, %s30
        %s331 = smul.u32 8, %s30
        %v333 = vld [vmem:[%s289] sm:$0xff]
        %v334 = vld [vmem:[%s289 + $0x8] sm:$0xff]
        %v335 = vld [vmem:[%s289 + $0x10] sm:$0xff]
        %v336 = vld [vmem:[%s289 + $0x18] sm:$0xff]
        %v337 = vld [vmem:[%s289 + $0x20] sm:$0xff]
        %v338 = vld [vmem:[%s289 + $0x28] sm:$0xff]
        %v339 = vld [vmem:[%s289 + $0x30] sm:$0xff]
        %v340 = vld [vmem:[%s289 + $0x38] sm:$0xff]
        %v341 = vpack.c.bf16 %v333, %v333
        %v342 = vpack.c.bf16 %v334, %v334
        %v343 = vpack.c.bf16 %v335, %v335
        %v344 = vpack.c.bf16 %v336, %v336
        %v345 = vpack.c.bf16 %v337, %v337
        %v346 = vpack.c.bf16 %v338, %v338
        %v347 = vpack.c.bf16 %v339, %v339
        %v348 = vpack.c.bf16 %v340, %v340
        %v349 = vld [vmem:[#allocation5] sm:$0xff]
        %v350 = vld [vmem:[#allocation5 + $0x8] sm:$0xf]
        %v351 = vld [vmem:[#allocation5 + $0xc] sm:$0xff]
        %v352 = vld [vmem:[#allocation5 + $0x14] sm:$0xf]
        %v353 = vld [vmem:[#allocation5 + $0x18] sm:$0xff]
        %v354 = vld [vmem:[#allocation5 + $0x20] sm:$0xf]
        %v355 = vld [vmem:[#allocation5 + $0x24] sm:$0xff]
        %v356 = vld [vmem:[#allocation5 + $0x2c] sm:$0xf]
        %v357 = vld [vmem:[#allocation5 + $0x30] sm:$0xff]
        %v358 = vld [vmem:[#allocation5 + $0x38] sm:$0xf]
        %v359 = vld [vmem:[#allocation5 + $0x3c] sm:$0xff]
        %v360 = vld [vmem:[#allocation5 + $0x44] sm:$0xf]
        %v361 = vld [vmem:[#allocation5 + $0x48] sm:$0xff]
        %v362 = vld [vmem:[#allocation5 + $0x50] sm:$0xf]
        %v363 = vld [vmem:[#allocation5 + $0x54] sm:$0xff]
        %v364 = vld [vmem:[#allocation5 + $0x5c] sm:$0xf]
        %v365 = vld [vmem:[#allocation5 + $0x60] sm:$0xff]
        %v366 = vld [vmem:[#allocation5 + $0x68] sm:$0xf]
        %v367 = vld [vmem:[#allocation5 + $0x6c] sm:$0xff]
        %v368 = vld [vmem:[#allocation5 + $0x74] sm:$0xf]
        %v369 = vld [vmem:[#allocation5 + $0x78] sm:$0xff]
        %v370 = vld [vmem:[#allocation5 + $0x80] sm:$0xf]
        %v371 = vld [vmem:[#allocation5 + $0x84] sm:$0xff]
        %v372 = vld [vmem:[#allocation5 + $0x8c] sm:$0xf]
        %v373 = vld [vmem:[#allocation5 + $0x90] sm:$0xff]
        %v374 = vld [vmem:[#allocation5 + $0x98] sm:$0xf]
        %v375 = vld [vmem:[#allocation5 + $0x9c] sm:$0xff]
        %v376 = vld [vmem:[#allocation5 + $0xa4] sm:$0xf]
        %v377 = vld [vmem:[#allocation5 + $0xa8] sm:$0xff]
        %v378 = vld [vmem:[#allocation5 + $0xb0] sm:$0xf]
        %v379 = vld [vmem:[#allocation5 + $0xb4] sm:$0xff]
        %v380 = vld [vmem:[#allocation5 + $0xbc] sm:$0xf]
        %v381 = vld [vmem:[#allocation7] sm:$0x7]
        %v383 = vlaneseq
        %v384 = vshrl.u32 %v383, 7
        %v385 = vsub.s32 0, %v384
        %v386 = vrot.slane %v381, %v385
        %v387 = vlaneseq
        %v388 = vshrl.u32 %v387, 7
        %v389 = vsub.s32 1, %v388
        %v390 = vrot.slane %v381, %v389
        %v391 = vlaneseq
        %v392 = vshrl.u32 %v391, 7
        %v393 = vsub.s32 2, %v392
        %v394 = vrot.slane %v381, %v393
        %v406 = vunpack.c.l.b16 %v341
        %v407 = vunpack.c.l.b16 %v342
        %v408 = vunpack.c.l.b16 %v343
        %v409 = vunpack.c.l.b16 %v344
        %v410 = vunpack.c.l.b16 %v345
        %v411 = vunpack.c.l.b16 %v346
        %v412 = vunpack.c.l.b16 %v347
        %v413 = vunpack.c.l.b16 %v348
        %v414 = vpack.c.b16 %v407, %v406
        %v415 = vpack.c.b16 %v409, %v408
        %v416 = vpack.c.b16 %v411, %v410
        %v417 = vpack.c.b16 %v413, %v412
        %v454 = vunpack.c.l.b16 %v349
        %v455 = vunpack.c.h.b16 %v349
        %v456 = vunpack.c.l.b16 %v350
        %v457 = vunpack.c.l.b16 %v351
        %v458 = vunpack.c.h.b16 %v351
        %v459 = vunpack.c.l.b16 %v352
        %v460 = vunpack.c.l.b16 %v353
        %v461 = vunpack.c.h.b16 %v353
        %v462 = vunpack.c.l.b16 %v354
        %v463 = vunpack.c.l.b16 %v355
        %v464 = vunpack.c.h.b16 %v355
        %v465 = vunpack.c.l.b16 %v356
        %v466 = vunpack.c.l.b16 %v357
        %v467 = vunpack.c.h.b16 %v357
        %v468 = vunpack.c.l.b16 %v358
        %v469 = vunpack.c.l.b16 %v359
        %v470 = vunpack.c.h.b16 %v359
        %v471 = vunpack.c.l.b16 %v360
        %v472 = vunpack.c.l.b16 %v361
        %v473 = vunpack.c.h.b16 %v361
        %v474 = vunpack.c.l.b16 %v362
        %v475 = vunpack.c.l.b16 %v363
        %v476 = vunpack.c.h.b16 %v363
        %v477 = vunpack.c.l.b16 %v364
        %v478 = vunpack.c.l.b16 %v365
        %v479 = vunpack.c.h.b16 %v365
        %v480 = vunpack.c.l.b16 %v366
        %v481 = vunpack.c.l.b16 %v367
        %v482 = vunpack.c.h.b16 %v367
        %v483 = vunpack.c.l.b16 %v368
        %v484 = vunpack.c.l.b16 %v369
        %v485 = vunpack.c.h.b16 %v369
        %v486 = vunpack.c.l.b16 %v370
        %v487 = vunpack.c.l.b16 %v371
        %v488 = vunpack.c.h.b16 %v371
        %v489 = vunpack.c.l.b16 %v372
        %v490 = vunpack.c.l.b16 %v373
        %v491 = vunpack.c.h.b16 %v373
        %v492 = vunpack.c.l.b16 %v374
        %v493 = vunpack.c.l.b16 %v375
        %v494 = vunpack.c.h.b16 %v375
        %v495 = vunpack.c.l.b16 %v376
        %v496 = vunpack.c.l.b16 %v377
        %v497 = vunpack.c.h.b16 %v377
        %v498 = vunpack.c.l.b16 %v378
        %v499 = vunpack.c.l.b16 %v379
        %v500 = vunpack.c.h.b16 %v379
        %v501 = vunpack.c.l.b16 %v380
        %v502 = vpack.c.b16 %v457, %v454
        %v503 = vpack.c.b16 %v458, %v455
        %v504 = vpack.c.b16 %v459, %v456
        %v505 = vpack.c.b16 %v463, %v460
        %v506 = vpack.c.b16 %v464, %v461
        %v507 = vpack.c.b16 %v465, %v462
        %v508 = vpack.c.b16 %v469, %v466
        %v509 = vpack.c.b16 %v470, %v467
        %v510 = vpack.c.b16 %v471, %v468
        %v511 = vpack.c.b16 %v475, %v472
        %v512 = vpack.c.b16 %v476, %v473
        %v513 = vpack.c.b16 %v477, %v474
        %v514 = vpack.c.b16 %v481, %v478
        %v515 = vpack.c.b16 %v482, %v479
        %v516 = vpack.c.b16 %v483, %v480
        %v517 = vpack.c.b16 %v487, %v484
        %v518 = vpack.c.b16 %v488, %v485
        %v519 = vpack.c.b16 %v489, %v486
        %v520 = vpack.c.b16 %v493, %v490
        %v521 = vpack.c.b16 %v494, %v491
        %v522 = vpack.c.b16 %v495, %v492
        %v523 = vpack.c.b16 %v499, %v496
        %v524 = vpack.c.b16 %v500, %v497
        %v525 = vpack.c.b16 %v501, %v498
        %550 = vmatprep.subr.bf16.mxu0 %v524
        %551 = vmatpush1.bf16.msra.mxu0 %v523
        %552 = vmatprep.subr.bf16.mxu0 %v521
        %553 = vmatpush1.bf16.msra.mxu0 %v520
        %554 = vmatprep.subr.bf16.mxu0 %v518
        %555 = vmatpush1.bf16.msra.mxu0 %v517
        %556 = vmatprep.subr.bf16.mxu0 %v515
        %557 = vmatpush1.bf16.msra.mxu0 %v514
        %558 = vmatprep.subr.bf16.mxu0 %v512
        %559 = vmatpush1.bf16.msra.mxu0 %v511
        %560 = vmatprep.subr.bf16.mxu0 %v509
        %561 = vmatpush1.bf16.msra.mxu0 %v508
        %562 = vmatprep.subr.bf16.mxu0 %v506
        %563 = vmatpush1.bf16.msra.mxu0 %v505
        %564 = vmatprep.subr.bf16.mxu0 %v503
        %565 = vmatpush1.bf16.msra.mxu0 %v502
        %566 = vmatprep.subr.bf16.mxu0 0
        %567 = vmatpush2.bf16.msra.mxu0 0
        %568 = vmatprep.subr.bf16.mxu0 0
        %569 = vmatpush2.bf16.msra.mxu0 0
        %570 = vmatprep.subr.bf16.mxu0 0
        %571 = vmatpush2.bf16.msra.mxu0 0
        %572 = vmatprep.subr.bf16.mxu0 0
        %573 = vmatpush2.bf16.msra.mxu0 0
        %574 = vmatprep.subr.bf16.mxu0 0
        %575 = vmatpush2.bf16.msra.mxu0 0
        %576 = vmatprep.subr.bf16.mxu0 0
        %577 = vmatpush2.bf16.msra.mxu0 0
        %578 = vmatprep.subr.bf16.mxu0 0
        %579 = vmatpush2.bf16.msra.mxu0 0
        %580 = vmatprep.subr.bf16.mxu0 0
        %581 = vmatpush2.bf16.msra.mxu0 0
        %582 = vmatprep.mubr.bf16.mxu0 0
        %583 = vmatmul.mubr.bf16.gmra.mxu0 %v414
        %v584 = vpop.f32.mrf.mxu0
        %v585 = vadd.f32 %v386, %v584
        %v586 = vpop.f32.mrf.mxu0
        %v587 = vadd.f32 %v390, %v586
        %v588 = vpop.f32.mrf.mxu0
        %v589 = vadd.f32 %v386, %v588
        %v590 = vpop.f32.mrf.mxu0
        %v591 = vadd.f32 %v390, %v590
        %592 = vmatprep.mubr.bf16.mxu0 0
        %593 = vmatmul.mubr.bf16.gmra.mxu0 %v415
        %v594 = vpop.f32.mrf.mxu0
        %v595 = vadd.f32 %v386, %v594
        %v596 = vpop.f32.mrf.mxu0
        %v597 = vadd.f32 %v390, %v596
        %v598 = vpop.f32.mrf.mxu0
        %v599 = vadd.f32 %v386, %v598
        %v600 = vpop.f32.mrf.mxu0
        %v601 = vadd.f32 %v390, %v600
        %602 = vmatprep.mubr.bf16.mxu0 0
        %603 = vmatmul.mubr.bf16.gmra.mxu0 %v416
        %v604 = vpop.f32.mrf.mxu0
        %v605 = vadd.f32 %v386, %v604
        %v606 = vpop.f32.mrf.mxu0
        %v607 = vadd.f32 %v390, %v606
        %v608 = vpop.f32.mrf.mxu0
        %v609 = vadd.f32 %v386, %v608
        %v610 = vpop.f32.mrf.mxu0
        %v611 = vadd.f32 %v390, %v610
        %612 = vmatprep.mubr.bf16.mxu0 0
        %613 = vmatmul.mubr.bf16.gmra.mxu0 %v417
        %v614 = vpop.f32.mrf.mxu0
        %v615 = vadd.f32 %v386, %v614
        %v616 = vpop.f32.mrf.mxu0
        %v617 = vadd.f32 %v390, %v616
        %v618 = vpop.f32.mrf.mxu0
        %v619 = vadd.f32 %v386, %v618
        %v620 = vpop.f32.mrf.mxu0
        %v621 = vadd.f32 %v390, %v620
        %622 = vdwg.mxu0
        %623 = vmatprep.subr.bf16.mxu0 0
        %624 = vmatpush1.bf16.msra.mxu0 %v525
        %625 = vmatprep.subr.bf16.mxu0 0
        %626 = vmatpush1.bf16.msra.mxu0 %v522
        %627 = vmatprep.subr.bf16.mxu0 0
        %628 = vmatpush1.bf16.msra.mxu0 %v519
        %629 = vmatprep.subr.bf16.mxu0 0
        %630 = vmatpush1.bf16.msra.mxu0 %v516
        %631 = vmatprep.subr.bf16.mxu0 0
        %632 = vmatpush1.bf16.msra.mxu0 %v513
        %633 = vmatprep.subr.bf16.mxu0 0
        %634 = vmatpush1.bf16.msra.mxu0 %v510
        %635 = vmatprep.subr.bf16.mxu0 0
        %636 = vmatpush1.bf16.msra.mxu0 %v507
        %637 = vmatprep.subr.bf16.mxu0 0
        %638 = vmatpush1.bf16.msra.mxu0 %v504
        %639 = vmatprep.subr.bf16.mxu0 0
        %640 = vmatpush2.bf16.msra.mxu0 0
        %641 = vmatprep.subr.bf16.mxu0 0
        %642 = vmatpush2.bf16.msra.mxu0 0
        %643 = vmatprep.subr.bf16.mxu0 0
        %644 = vmatpush2.bf16.msra.mxu0 0
        %645 = vmatprep.subr.bf16.mxu0 0
        %646 = vmatpush2.bf16.msra.mxu0 0
        %647 = vmatprep.subr.bf16.mxu0 0
        %648 = vmatpush2.bf16.msra.mxu0 0
        %649 = vmatprep.subr.bf16.mxu0 0
        %650 = vmatpush2.bf16.msra.mxu0 0
        %651 = vmatprep.subr.bf16.mxu0 0
        %652 = vmatpush2.bf16.msra.mxu0 0
        %653 = vmatprep.subr.bf16.mxu0 0
        %654 = vmatpush2.bf16.msra.mxu0 0
        %655 = vmatprep.mubr.bf16.mxu0 0
        %656 = vmatmul.mubr.bf16.gmra.mxu0 %v414
        %v657 = vpop.f32.mrf.mxu0
        %v658 = vadd.f32 %v394, %v657
        %v659 = vpop.f32.mrf.mxu0
        %v660 = vpop.f32.mrf.mxu0
        %v661 = vadd.f32 %v394, %v660
        %v662 = vpop.f32.mrf.mxu0
        %663 = vmatprep.mubr.bf16.mxu0 0
        %664 = vmatmul.mubr.bf16.gmra.mxu0 %v415
        %v665 = vpop.f32.mrf.mxu0
        %v666 = vadd.f32 %v394, %v665
        %v667 = vpop.f32.mrf.mxu0
        %v668 = vpop.f32.mrf.mxu0
        %v669 = vadd.f32 %v394, %v668
        %v670 = vpop.f32.mrf.mxu0
        %671 = vmatprep.mubr.bf16.mxu0 0
        %672 = vmatmul.mubr.bf16.gmra.mxu0 %v416
        %v673 = vpop.f32.mrf.mxu0
        %v674 = vadd.f32 %v394, %v673
        %v675 = vpop.f32.mrf.mxu0
        %v676 = vpop.f32.mrf.mxu0
        %v677 = vadd.f32 %v394, %v676
        %v678 = vpop.f32.mrf.mxu0
        %679 = vmatprep.mubr.bf16.mxu0 0
        %680 = vmatmul.mubr.bf16.gmra.mxu0 %v417
        %v681 = vpop.f32.mrf.mxu0
        %v682 = vadd.f32 %v394, %v681
        %v683 = vpop.f32.mrf.mxu0
        %v684 = vpop.f32.mrf.mxu0
        %v685 = vadd.f32 %v394, %v684
        %v686 = vpop.f32.mrf.mxu0
        %687 = vdwg.mxu0
        %v688 = vpack.c.bf16 %v589, %v585
        %v689 = vpack.c.bf16 %v591, %v587
        %v690 = vpack.c.bf16 %v661, %v658
        %v691 = vpack.c.bf16 %v599, %v595
        %v692 = vpack.c.bf16 %v601, %v597
        %v693 = vpack.c.bf16 %v669, %v666
        %v694 = vpack.c.bf16 %v609, %v605
        %v695 = vpack.c.bf16 %v611, %v607
        %v696 = vpack.c.bf16 %v677, %v674
        %v697 = vpack.c.bf16 %v619, %v615
        %v698 = vpack.c.bf16 %v621, %v617
        %v699 = vpack.c.bf16 %v685, %v682
        %v712 = vunpack.c.l.b16 %v688
        %v713 = vunpack.c.l.b16 %v689
        %v714 = vunpack.c.l.b16 %v690
        %v715 = vunpack.c.h.b16 %v688
        %v716 = vunpack.c.h.b16 %v689
        %v717 = vunpack.c.h.b16 %v690
        %v718 = vunpack.c.l.b16 %v691
        %v719 = vunpack.c.l.b16 %v692
        %v720 = vunpack.c.l.b16 %v693
        %v721 = vunpack.c.h.b16 %v691
        %v722 = vunpack.c.h.b16 %v692
        %v723 = vunpack.c.h.b16 %v693
        %v724 = vunpack.c.l.b16 %v694
        %v725 = vunpack.c.l.b16 %v695
        %v726 = vunpack.c.l.b16 %v696
        %v727 = vunpack.c.h.b16 %v694
        %v728 = vunpack.c.h.b16 %v695
        %v729 = vunpack.c.h.b16 %v696
        %v730 = vunpack.c.l.b16 %v697
        %v731 = vunpack.c.l.b16 %v698
        %v732 = vunpack.c.l.b16 %v699
        %v733 = vunpack.c.h.b16 %v697
        %v734 = vunpack.c.h.b16 %v698
        %v735 = vunpack.c.h.b16 %v699
        %v736 = vpack.c.b16 %v713, %v712
        %v737 = vpack.c.b16 %v714, %v714
        %v738 = vpack.c.b16 %v716, %v715
        %v739 = vpack.c.b16 %v717, %v717
        %v740 = vpack.c.b16 %v719, %v718
        %v741 = vpack.c.b16 %v720, %v720
        %v742 = vpack.c.b16 %v722, %v721
        %v743 = vpack.c.b16 %v723, %v723
        %v744 = vpack.c.b16 %v725, %v724
        %v745 = vpack.c.b16 %v726, %v726
        %v746 = vpack.c.b16 %v728, %v727
        %v747 = vpack.c.b16 %v729, %v729
        %v748 = vpack.c.b16 %v731, %v730
        %v749 = vpack.c.b16 %v732, %v732
        %v750 = vpack.c.b16 %v734, %v733
        %v751 = vpack.c.b16 %v735, %v735
        %v752 = vld [vmem:[%s5] sm:$0xff]
        %v753 = vld [vmem:[#allocation8] sm:$0xf]
        %v754 = vld [vmem:[#allocation8 + $0x4] sm:$0xf]
        %v755 = vld [vmem:[#allocation8 + $0x8] sm:$0xf]
        %v756 = vld [vmem:[#allocation8 + $0xc] sm:$0xf]
        %v757 = vld [vmem:[#allocation8 + $0x10] sm:$0xf]
        %v758 = vld [vmem:[#allocation8 + $0x14] sm:$0xf]
        %v759 = vld [vmem:[#allocation8 + $0x18] sm:$0xf]
        %v760 = vld [vmem:[#allocation8 + $0x1c] sm:$0xf]
        %v761 = vld [vmem:[#allocation8 + $0x20] sm:$0xf]
        %v762 = vld [vmem:[#allocation8 + $0x24] sm:$0xf]
        %v763 = vld [vmem:[#allocation8 + $0x28] sm:$0xf]
        %v764 = vld [vmem:[#allocation8 + $0x2c] sm:$0xf]
        %v765 = vld [vmem:[#allocation8 + $0x30] sm:$0xf]
        %v766 = vld [vmem:[#allocation8 + $0x34] sm:$0xf]
        %v767 = vld [vmem:[#allocation8 + $0x38] sm:$0xf]
        %v768 = vld [vmem:[#allocation8 + $0x3c] sm:$0xf]
        %v769 = vrot.slane %v736, 4
        %vm770 = vcmask 261120
        %v772 = vsel %vm770, %v736, 0
        %v775 = vsel %vm770, %v769, 0
        %777 = vmatprep.subr.bf16.mxu0 0
        %778 = vmatpush1.bf16.xpose.msra.mxu0 0
        %779 = vmatprep.subr.bf16.mxu0 0
        %780 = vmatpush1.bf16.xpose.msra.mxu0 0
        %781 = vmatprep.subr.bf16.mxu0 0
        %782 = vmatpush1.bf16.xpose.msra.mxu0 0
        %783 = vmatprep.subr.bf16.mxu0 0
        %784 = vmatpush1.bf16.xpose.msra.mxu0 0
        %785 = vmatprep.subr.bf16.mxu0 0
        %786 = vmatpush1.bf16.xpose.msra.mxu0 0
        %787 = vmatprep.subr.bf16.mxu0 0
        %788 = vmatpush1.bf16.xpose.msra.mxu0 0
        %789 = vmatprep.subr.bf16.mxu0 0
        %790 = vmatpush1.bf16.xpose.msra.mxu0 0
        %791 = vmatprep.subr.bf16.mxu0 0
        %792 = vmatpush1.bf16.xpose.msra.mxu0 %v775
        %793 = vmatprep.subr.bf16.mxu0 0
        %794 = vmatpush2.bf16.xpose.msra.mxu0 0
        %795 = vmatprep.subr.bf16.mxu0 0
        %796 = vmatpush2.bf16.xpose.msra.mxu0 0
        %797 = vmatprep.subr.bf16.mxu0 0
        %798 = vmatpush2.bf16.xpose.msra.mxu0 0
        %799 = vmatprep.subr.bf16.mxu0 0
        %800 = vmatpush2.bf16.xpose.msra.mxu0 0
        %801 = vmatprep.subr.bf16.mxu0 0
        %802 = vmatpush2.bf16.xpose.msra.mxu0 0
        %803 = vmatprep.subr.bf16.mxu0 0
        %804 = vmatpush2.bf16.xpose.msra.mxu0 0
        %805 = vmatprep.subr.bf16.mxu0 0
        %806 = vmatpush2.bf16.xpose.msra.mxu0 0
        %807 = vmatprep.subr.bf16.mxu0 0
        %808 = vmatpush2.bf16.xpose.msra.mxu0 0
        %809 = vmatprep.mubr.bf16.mxu0 0
        %810 = vmatmul.mubr.bf16.gmra.mxu0 %v772
        %v811 = vpop.f32.mrf.mxu0
        %v812 = vadd.f32 %v752, %v811
        %v813 = vpop.f32.mrf.mxu0
        %v814 = vpop.f32.mrf.mxu0
        %v815 = vpop.f32.mrf.mxu0
        %816 = vdwg.mxu0
        %v817 = vrot.slane %v738, 4
        %v819 = vsel %vm770, %v738, 0
        %v822 = vsel %vm770, %v817, 0
        %824 = vmatprep.subr.bf16.mxu0 0
        %825 = vmatpush1.bf16.xpose.msra.mxu0 0
        %826 = vmatprep.subr.bf16.mxu0 0
        %827 = vmatpush1.bf16.xpose.msra.mxu0 0
        %828 = vmatprep.subr.bf16.mxu0 0
        %829 = vmatpush1.bf16.xpose.msra.mxu0 0
        %830 = vmatprep.subr.bf16.mxu0 0
        %831 = vmatpush1.bf16.xpose.msra.mxu0 0
        %832 = vmatprep.subr.bf16.mxu0 0
        %833 = vmatpush1.bf16.xpose.msra.mxu0 0
        %834 = vmatprep.subr.bf16.mxu0 0
        %835 = vmatpush1.bf16.xpose.msra.mxu0 0
        %836 = vmatprep.subr.bf16.mxu0 0
        %837 = vmatpush1.bf16.xpose.msra.mxu0 0
        %838 = vmatprep.subr.bf16.mxu0 0
        %839 = vmatpush1.bf16.xpose.msra.mxu0 %v822
        %840 = vmatprep.subr.bf16.mxu0 0
        %841 = vmatpush2.bf16.xpose.msra.mxu0 0
        %842 = vmatprep.subr.bf16.mxu0 0
        %843 = vmatpush2.bf16.xpose.msra.mxu0 0
        %844 = vmatprep.subr.bf16.mxu0 0
        %845 = vmatpush2.bf16.xpose.msra.mxu0 0
        %846 = vmatprep.subr.bf16.mxu0 0
        %847 = vmatpush2.bf16.xpose.msra.mxu0 0
        %848 = vmatprep.subr.bf16.mxu0 0
        %849 = vmatpush2.bf16.xpose.msra.mxu0 0
        %850 = vmatprep.subr.bf16.mxu0 0
        %851 = vmatpush2.bf16.xpose.msra.mxu0 0
        %852 = vmatprep.subr.bf16.mxu0 0
        %853 = vmatpush2.bf16.xpose.msra.mxu0 0
        %854 = vmatprep.subr.bf16.mxu0 0
        %855 = vmatpush2.bf16.xpose.msra.mxu0 0
        %856 = vmatprep.mubr.bf16.mxu0 0
        %857 = vmatmul.mubr.bf16.gmra.mxu0 %v819
        %v858 = vpop.f32.mrf.mxu0
        %v859 = vadd.f32 %v752, %v858
        %v860 = vpop.f32.mrf.mxu0
        %v861 = vpop.f32.mrf.mxu0
        %v862 = vpop.f32.mrf.mxu0
        %863 = vdwg.mxu0
        %v864 = vrot.slane %v740, 4
        %v866 = vsel %vm770, %v740, 0
        %v869 = vsel %vm770, %v864, 0
        %871 = vmatprep.subr.bf16.mxu0 0
        %872 = vmatpush1.bf16.xpose.msra.mxu0 0
        %873 = vmatprep.subr.bf16.mxu0 0
        %874 = vmatpush1.bf16.xpose.msra.mxu0 0
        %875 = vmatprep.subr.bf16.mxu0 0
        %876 = vmatpush1.bf16.xpose.msra.mxu0 0
        %877 = vmatprep.subr.bf16.mxu0 0
        %878 = vmatpush1.bf16.xpose.msra.mxu0 0
        %879 = vmatprep.subr.bf16.mxu0 0
        %880 = vmatpush1.bf16.xpose.msra.mxu0 0
        %881 = vmatprep.subr.bf16.mxu0 0
        %882 = vmatpush1.bf16.xpose.msra.mxu0 0
        %883 = vmatprep.subr.bf16.mxu0 0
        %884 = vmatpush1.bf16.xpose.msra.mxu0 0
        %885 = vmatprep.subr.bf16.mxu0 0
        %886 = vmatpush1.bf16.xpose.msra.mxu0 %v869
        %887 = vmatprep.subr.bf16.mxu0 0
        %888 = vmatpush2.bf16.xpose.msra.mxu0 0
        %889 = vmatprep.subr.bf16.mxu0 0
        %890 = vmatpush2.bf16.xpose.msra.mxu0 0
        %891 = vmatprep.subr.bf16.mxu0 0
        %892 = vmatpush2.bf16.xpose.msra.mxu0 0
        %893 = vmatprep.subr.bf16.mxu0 0
        %894 = vmatpush2.bf16.xpose.msra.mxu0 0
        %895 = vmatprep.subr.bf16.mxu0 0
        %896 = vmatpush2.bf16.xpose.msra.mxu0 0
        %897 = vmatprep.subr.bf16.mxu0 0
        %898 = vmatpush2.bf16.xpose.msra.mxu0 0
        %899 = vmatprep.subr.bf16.mxu0 0
        %900 = vmatpush2.bf16.xpose.msra.mxu0 0
        %901 = vmatprep.subr.bf16.mxu0 0
        %902 = vmatpush2.bf16.xpose.msra.mxu0 0
        %903 = vmatprep.mubr.bf16.mxu0 0
        %904 = vmatmul.mubr.bf16.gmra.mxu0 %v866
        %v905 = vpop.f32.mrf.mxu0
        %v906 = vadd.f32 %v752, %v905
        %v907 = vpop.f32.mrf.mxu0
        %v908 = vpop.f32.mrf.mxu0
        %v909 = vpop.f32.mrf.mxu0
        %910 = vdwg.mxu0
        %v911 = vrot.slane %v742, 4
        %v913 = vsel %vm770, %v742, 0
        %v916 = vsel %vm770, %v911, 0
        %918 = vmatprep.subr.bf16.mxu0 0
        %919 = vmatpush1.bf16.xpose.msra.mxu0 0
        %920 = vmatprep.subr.bf16.mxu0 0
        %921 = vmatpush1.bf16.xpose.msra.mxu0 0
        %922 = vmatprep.subr.bf16.mxu0 0
        %923 = vmatpush1.bf16.xpose.msra.mxu0 0
        %924 = vmatprep.subr.bf16.mxu0 0
        %925 = vmatpush1.bf16.xpose.msra.mxu0 0
        %926 = vmatprep.subr.bf16.mxu0 0
        %927 = vmatpush1.bf16.xpose.msra.mxu0 0
        %928 = vmatprep.subr.bf16.mxu0 0
        %929 = vmatpush1.bf16.xpose.msra.mxu0 0
        %930 = vmatprep.subr.bf16.mxu0 0
        %931 = vmatpush1.bf16.xpose.msra.mxu0 0
        %932 = vmatprep.subr.bf16.mxu0 0
        %933 = vmatpush1.bf16.xpose.msra.mxu0 %v916
        %934 = vmatprep.subr.bf16.mxu0 0
        %935 = vmatpush2.bf16.xpose.msra.mxu0 0
        %936 = vmatprep.subr.bf16.mxu0 0
        %937 = vmatpush2.bf16.xpose.msra.mxu0 0
        %938 = vmatprep.subr.bf16.mxu0 0
        %939 = vmatpush2.bf16.xpose.msra.mxu0 0
        %940 = vmatprep.subr.bf16.mxu0 0
        %941 = vmatpush2.bf16.xpose.msra.mxu0 0
        %942 = vmatprep.subr.bf16.mxu0 0
        %943 = vmatpush2.bf16.xpose.msra.mxu0 0
        %944 = vmatprep.subr.bf16.mxu0 0
        %945 = vmatpush2.bf16.xpose.msra.mxu0 0
        %946 = vmatprep.subr.bf16.mxu0 0
        %947 = vmatpush2.bf16.xpose.msra.mxu0 0
        %948 = vmatprep.subr.bf16.mxu0 0
        %949 = vmatpush2.bf16.xpose.msra.mxu0 0
        %950 = vmatprep.mubr.bf16.mxu0 0
        %951 = vmatmul.mubr.bf16.gmra.mxu0 %v913
        %v952 = vpop.f32.mrf.mxu0
        %v953 = vadd.f32 %v752, %v952
        %v954 = vpop.f32.mrf.mxu0
        %v955 = vpop.f32.mrf.mxu0
        %v956 = vpop.f32.mrf.mxu0
        %957 = vdwg.mxu0
        %v958 = vrot.slane %v744, 4
        %v960 = vsel %vm770, %v744, 0
        %v963 = vsel %vm770, %v958, 0
        %965 = vmatprep.subr.bf16.mxu0 0
        %966 = vmatpush1.bf16.xpose.msra.mxu0 0
        %967 = vmatprep.subr.bf16.mxu0 0
        %968 = vmatpush1.bf16.xpose.msra.mxu0 0
        %969 = vmatprep.subr.bf16.mxu0 0
        %970 = vmatpush1.bf16.xpose.msra.mxu0 0
        %971 = vmatprep.subr.bf16.mxu0 0
        %972 = vmatpush1.bf16.xpose.msra.mxu0 0
        %973 = vmatprep.subr.bf16.mxu0 0
        %974 = vmatpush1.bf16.xpose.msra.mxu0 0
        %975 = vmatprep.subr.bf16.mxu0 0
        %976 = vmatpush1.bf16.xpose.msra.mxu0 0
        %977 = vmatprep.subr.bf16.mxu0 0
        %978 = vmatpush1.bf16.xpose.msra.mxu0 0
        %979 = vmatprep.subr.bf16.mxu0 0
        %980 = vmatpush1.bf16.xpose.msra.mxu0 %v963
        %981 = vmatprep.subr.bf16.mxu0 0
        %982 = vmatpush2.bf16.xpose.msra.mxu0 0
        %983 = vmatprep.subr.bf16.mxu0 0
        %984 = vmatpush2.bf16.xpose.msra.mxu0 0
        %985 = vmatprep.subr.bf16.mxu0 0
        %986 = vmatpush2.bf16.xpose.msra.mxu0 0
        %987 = vmatprep.subr.bf16.mxu0 0
        %988 = vmatpush2.bf16.xpose.msra.mxu0 0
        %989 = vmatprep.subr.bf16.mxu0 0
        %990 = vmatpush2.bf16.xpose.msra.mxu0 0
        %991 = vmatprep.subr.bf16.mxu0 0
        %992 = vmatpush2.bf16.xpose.msra.mxu0 0
        %993 = vmatprep.subr.bf16.mxu0 0
        %994 = vmatpush2.bf16.xpose.msra.mxu0 0
        %995 = vmatprep.subr.bf16.mxu0 0
        %996 = vmatpush2.bf16.xpose.msra.mxu0 0
        %997 = vmatprep.mubr.bf16.mxu0 0
        %998 = vmatmul.mubr.bf16.gmra.mxu0 %v960
        %v999 = vpop.f32.mrf.mxu0
        %v1000 = vadd.f32 %v752, %v999
        %v1001 = vpop.f32.mrf.mxu0
        %v1002 = vpop.f32.mrf.mxu0
        %v1003 = vpop.f32.mrf.mxu0
        %1004 = vdwg.mxu0
        %v1005 = vrot.slane %v746, 4
        %v1007 = vsel %vm770, %v746, 0
        %v1010 = vsel %vm770, %v1005, 0
        %1012 = vmatprep.subr.bf16.mxu0 0
        %1013 = vmatpush1.bf16.xpose.msra.mxu0 0
        %1014 = vmatprep.subr.bf16.mxu0 0
        %1015 = vmatpush1.bf16.xpose.msra.mxu0 0
        %1016 = vmatprep.subr.bf16.mxu0 0
        %1017 = vmatpush1.bf16.xpose.msra.mxu0 0
        %1018 = vmatprep.subr.bf16.mxu0 0
        %1019 = vmatpush1.bf16.xpose.msra.mxu0 0
        %1020 = vmatprep.subr.bf16.mxu0 0
        %1021 = vmatpush1.bf16.xpose.msra.mxu0 0
        %1022 = vmatprep.subr.bf16.mxu0 0
        %1023 = vmatpush1.bf16.xpose.msra.mxu0 0
        %1024 = vmatprep.subr.bf16.mxu0 0
        %1025 = vmatpush1.bf16.xpose.msra.mxu0 0
        %1026 = vmatprep.subr.bf16.mxu0 0
        %1027 = vmatpush1.bf16.xpose.msra.mxu0 %v1010
        %1028 = vmatprep.subr.bf16.mxu0 0
        %1029 = vmatpush2.bf16.xpose.msra.mxu0 0
        %1030 = vmatprep.subr.bf16.mxu0 0
        %1031 = vmatpush2.bf16.xpose.msra.mxu0 0
        %1032 = vmatprep.subr.bf16.mxu0 0
        %1033 = vmatpush2.bf16.xpose.msra.mxu0 0
        %1034 = vmatprep.subr.bf16.mxu0 0
        %1035 = vmatpush2.bf16.xpose.msra.mxu0 0
        %1036 = vmatprep.subr.bf16.mxu0 0
        %1037 = vmatpush2.bf16.xpose.msra.mxu0 0
        %1038 = vmatprep.subr.bf16.mxu0 0
        %1039 = vmatpush2.bf16.xpose.msra.mxu0 0
        %1040 = vmatprep.subr.bf16.mxu0 0
        %1041 = vmatpush2.bf16.xpose.msra.mxu0 0
        %1042 = vmatprep.subr.bf16.mxu0 0
        %1043 = vmatpush2.bf16.xpose.msra.mxu0 0
        %1044 = vmatprep.mubr.bf16.mxu0 0
        %1045 = vmatmul.mubr.bf16.gmra.mxu0 %v1007
        %v1046 = vpop.f32.mrf.mxu0
        %v1047 = vadd.f32 %v752, %v1046
        %v1048 = vpop.f32.mrf.mxu0
        %v1049 = vpop.f32.mrf.mxu0
        %v1050 = vpop.f32.mrf.mxu0
        %1051 = vdwg.mxu0
        %v1052 = vrot.slane %v748, 4
        %v1054 = vsel %vm770, %v748, 0
        %v1057 = vsel %vm770, %v1052, 0
        %1059 = vmatprep.subr.bf16.mxu0 0
        %1060 = vmatpush1.bf16.xpose.msra.mxu0 0
        %1061 = vmatprep.subr.bf16.mxu0 0
        %1062 = vmatpush1.bf16.xpose.msra.mxu0 0
        %1063 = vmatprep.subr.bf16.mxu0 0
        %1064 = vmatpush1.bf16.xpose.msra.mxu0 0
        %1065 = vmatprep.subr.bf16.mxu0 0
        %1066 = vmatpush1.bf16.xpose.msra.mxu0 0
        %1067 = vmatprep.subr.bf16.mxu0 0
        %1068 = vmatpush1.bf16.xpose.msra.mxu0 0
        %1069 = vmatprep.subr.bf16.mxu0 0
        %1070 = vmatpush1.bf16.xpose.msra.mxu0 0
        %1071 = vmatprep.subr.bf16.mxu0 0
        %1072 = vmatpush1.bf16.xpose.msra.mxu0 0
        %1073 = vmatprep.subr.bf16.mxu0 0
        %1074 = vmatpush1.bf16.xpose.msra.mxu0 %v1057
        %1075 = vmatprep.subr.bf16.mxu0 0
        %1076 = vmatpush2.bf16.xpose.msra.mxu0 0
        %1077 = vmatprep.subr.bf16.mxu0 0
        %1078 = vmatpush2.bf16.xpose.msra.mxu0 0
        %1079 = vmatprep.subr.bf16.mxu0 0
        %1080 = vmatpush2.bf16.xpose.msra.mxu0 0
        %1081 = vmatprep.subr.bf16.mxu0 0
        %1082 = vmatpush2.bf16.xpose.msra.mxu0 0
        %1083 = vmatprep.subr.bf16.mxu0 0
        %1084 = vmatpush2.bf16.xpose.msra.mxu0 0
        %1085 = vmatprep.subr.bf16.mxu0 0
        %1086 = vmatpush2.bf16.xpose.msra.mxu0 0
        %1087 = vmatprep.subr.bf16.mxu0 0
        %1088 = vmatpush2.bf16.xpose.msra.mxu0 0
        %1089 = vmatprep.subr.bf16.mxu0 0
        %1090 = vmatpush2.bf16.xpose.msra.mxu0 0
        %1091 = vmatprep.mubr.bf16.mxu0 0
        %1092 = vmatmul.mubr.bf16.gmra.mxu0 %v1054
        %v1093 = vpop.f32.mrf.mxu0
        %v1094 = vadd.f32 %v752, %v1093
        %v1095 = vpop.f32.mrf.mxu0
        %v1096 = vpop.f32.mrf.mxu0
        %v1097 = vpop.f32.mrf.mxu0
        %1098 = vdwg.mxu0
        %v1099 = vrot.slane %v750, 4
        %v1101 = vsel %vm770, %v750, 0
        %v1104 = vsel %vm770, %v1099, 0
        %1106 = vmatprep.subr.bf16.mxu0 0
        %1107 = vmatpush1.bf16.xpose.msra.mxu0 0
        %1108 = vmatprep.subr.bf16.mxu0 0
        %1109 = vmatpush1.bf16.xpose.msra.mxu0 0
        %1110 = vmatprep.subr.bf16.mxu0 0
        %1111 = vmatpush1.bf16.xpose.msra.mxu0 0
        %1112 = vmatprep.subr.bf16.mxu0 0
        %1113 = vmatpush1.bf16.xpose.msra.mxu0 0
        %1114 = vmatprep.subr.bf16.mxu0 0
        %1115 = vmatpush1.bf16.xpose.msra.mxu0 0
        %1116 = vmatprep.subr.bf16.mxu0 0
        %1117 = vmatpush1.bf16.xpose.msra.mxu0 0
        %1118 = vmatprep.subr.bf16.mxu0 0
        %1119 = vmatpush1.bf16.xpose.msra.mxu0 0
        %1120 = vmatprep.subr.bf16.mxu0 0
        %1121 = vmatpush1.bf16.xpose.msra.mxu0 %v1104
        %1122 = vmatprep.subr.bf16.mxu0 0
        %1123 = vmatpush2.bf16.xpose.msra.mxu0 0
        %1124 = vmatprep.subr.bf16.mxu0 0
        %1125 = vmatpush2.bf16.xpose.msra.mxu0 0
        %1126 = vmatprep.subr.bf16.mxu0 0
        %1127 = vmatpush2.bf16.xpose.msra.mxu0 0
        %1128 = vmatprep.subr.bf16.mxu0 0
        %1129 = vmatpush2.bf16.xpose.msra.mxu0 0
        %1130 = vmatprep.subr.bf16.mxu0 0
        %1131 = vmatpush2.bf16.xpose.msra.mxu0 0
        %1132 = vmatprep.subr.bf16.mxu0 0
        %1133 = vmatpush2.bf16.xpose.msra.mxu0 0
        %1134 = vmatprep.subr.bf16.mxu0 0
        %1135 = vmatpush2.bf16.xpose.msra.mxu0 0
        %1136 = vmatprep.subr.bf16.mxu0 0
        %1137 = vmatpush2.bf16.xpose.msra.mxu0 0
        %1138 = vmatprep.mubr.bf16.mxu0 0
        %1139 = vmatmul.mubr.bf16.gmra.mxu0 %v1101
        %v1140 = vpop.f32.mrf.mxu0
        %v1141 = vadd.f32 %v752, %v1140
        %v1142 = vpop.f32.mrf.mxu0
        %v1143 = vpop.f32.mrf.mxu0
        %v1144 = vpop.f32.mrf.mxu0
        %1145 = vdwg.mxu0
        %vm1146 = vcmask 64512
        %v1147 = vsel %vm1146, %v812, -inf
        %1148 = vmax.xlane.f32.xlu0 %v1147
        %v1149 = vpop.xlane.xlu0 %1148
        %v1150 = vsel %vm1146, %v859, -inf
        %1151 = vmax.xlane.f32.xlu0 %v1150
        %v1152 = vpop.xlane.xlu0 %1151
        %v1153 = vsel %vm1146, %v906, -inf
        %1154 = vmax.xlane.f32.xlu0 %v1153
        %v1155 = vpop.xlane.xlu0 %1154
        %v1156 = vsel %vm1146, %v953, -inf
        %1157 = vmax.xlane.f32.xlu0 %v1156
        %v1158 = vpop.xlane.xlu0 %1157
        %v1159 = vsel %vm1146, %v1000, -inf
        %1160 = vmax.xlane.f32.xlu0 %v1159
        %v1161 = vpop.xlane.xlu0 %1160
        %v1162 = vsel %vm1146, %v1047, -inf
        %1163 = vmax.xlane.f32.xlu0 %v1162
        %v1164 = vpop.xlane.xlu0 %1163
        %v1165 = vsel %vm1146, %v1094, -inf
        %1166 = vmax.xlane.f32.xlu0 %v1165
        %v1167 = vpop.xlane.xlu0 %1166
        %v1168 = vsel %vm1146, %v1141, -inf
        %1169 = vmax.xlane.f32.xlu0 %v1168
        %v1170 = vpop.xlane.xlu0 %1169
        %v1171 = vsub.f32 %v812, %v1149
        %v1172 = vsub.f32 %v859, %v1152
        %v1173 = vsub.f32 %v906, %v1155
        %v1174 = vsub.f32 %v953, %v1158
        %v1175 = vsub.f32 %v1000, %v1161
        %v1176 = vsub.f32 %v1047, %v1164
        %v1177 = vsub.f32 %v1094, %v1167
        %v1178 = vsub.f32 %v1141, %v1170
        %v1179 = vmul.f32 %v1171, 1.442695
        %v1180 = vpow.pop %v1179
        %v1181 = vmul.f32 %v1172, 1.442695
        %v1182 = vpow.pop %v1181
        %v1183 = vmul.f32 %v1173, 1.442695
        %v1184 = vpow.pop %v1183
        %v1185 = vmul.f32 %v1174, 1.442695
        %v1186 = vpow.pop %v1185
        %v1187 = vmul.f32 %v1175, 1.442695
        %v1188 = vpow.pop %v1187
        %v1189 = vmul.f32 %v1176, 1.442695
        %v1190 = vpow.pop %v1189
        %v1191 = vmul.f32 %v1177, 1.442695
        %v1192 = vpow.pop %v1191
        %v1193 = vmul.f32 %v1178, 1.442695
        %v1194 = vpow.pop %v1193
        %v1195 = vsel %vm1146, %v1180, 0.0
        %1196 = vadd.xlane.f32.xlu0 %v1195
        %v1197 = vpop.xlane.xlu0 %1196
        %v1198 = vsel %vm1146, %v1182, 0.0
        %1199 = vadd.xlane.f32.xlu0 %v1198
        %v1200 = vpop.xlane.xlu0 %1199
        %v1201 = vsel %vm1146, %v1184, 0.0
        %1202 = vadd.xlane.f32.xlu0 %v1201
        %v1203 = vpop.xlane.xlu0 %1202
        %v1204 = vsel %vm1146, %v1186, 0.0
        %1205 = vadd.xlane.f32.xlu0 %v1204
        %v1206 = vpop.xlane.xlu0 %1205
        %v1207 = vsel %vm1146, %v1188, 0.0
        %1208 = vadd.xlane.f32.xlu0 %v1207
        %v1209 = vpop.xlane.xlu0 %1208
        %v1210 = vsel %vm1146, %v1190, 0.0
        %1211 = vadd.xlane.f32.xlu0 %v1210
        %v1212 = vpop.xlane.xlu0 %1211
        %v1213 = vsel %vm1146, %v1192, 0.0
        %1214 = vadd.xlane.f32.xlu0 %v1213
        %v1215 = vpop.xlane.xlu0 %1214
        %v1216 = vsel %vm1146, %v1194, 0.0
        %1217 = vadd.xlane.f32.xlu0 %v1216
        %v1218 = vpop.xlane.xlu0 %1217
        %v1219 = vrcp.pop %v1197
        %v1220 = vrcp.pop %v1200
        %v1221 = vrcp.pop %v1203
        %v1222 = vrcp.pop %v1206
        %v1223 = vrcp.pop %v1209
        %v1224 = vrcp.pop %v1212
        %v1225 = vrcp.pop %v1215
        %v1226 = vrcp.pop %v1218
        %v1227 = vmul.f32 %v1180, %v1219
        %v1228 = vmul.f32 %v1182, %v1220
        %v1229 = vmul.f32 %v1184, %v1221
        %v1230 = vmul.f32 %v1186, %v1222
        %v1231 = vmul.f32 %v1188, %v1223
        %v1232 = vmul.f32 %v1190, %v1224
        %v1233 = vmul.f32 %v1192, %v1225
        %v1234 = vmul.f32 %v1194, %v1226
        %v1235 = vpack.c.bf16 %v1227, %v1227
        %v1236 = vpack.c.bf16 %v1228, %v1228
        %v1237 = vpack.c.bf16 %v1229, %v1229
        %v1238 = vpack.c.bf16 %v1230, %v1230
        %v1239 = vpack.c.bf16 %v1231, %v1231
        %v1240 = vpack.c.bf16 %v1232, %v1232
        %v1241 = vpack.c.bf16 %v1233, %v1233
        %v1242 = vpack.c.bf16 %v1234, %v1234
        %v1244 = vsel %vm1146, %v1235, 0
        %vm1246 = vcmask 1043456
        %v1248 = vsel %vm1246, %v737, 0
        %1250 = vmatprep.subr.bf16.mxu0 0
        %1251 = vmatpush1.bf16.msra.mxu0 0
        %1252 = vmatprep.subr.bf16.mxu0 0
        %1253 = vmatpush1.bf16.msra.mxu0 0
        %1254 = vmatprep.subr.bf16.mxu0 0
        %1255 = vmatpush1.bf16.msra.mxu0 0
        %1256 = vmatprep.subr.bf16.mxu0 0
        %1257 = vmatpush1.bf16.msra.mxu0 0
        %1258 = vmatprep.subr.bf16.mxu0 0
        %1259 = vmatpush1.bf16.msra.mxu0 0
        %1260 = vmatprep.subr.bf16.mxu0 0
        %1261 = vmatpush1.bf16.msra.mxu0 0
        %1262 = vmatprep.subr.bf16.mxu0 0
        %1263 = vmatpush1.bf16.msra.mxu0 0
        %1264 = vmatprep.subr.bf16.mxu0 0
        %1265 = vmatpush1.bf16.msra.mxu0 %v1248
        %1266 = vmatprep.subr.bf16.mxu0 0
        %1267 = vmatpush2.bf16.msra.mxu0 0
        %1268 = vmatprep.subr.bf16.mxu0 0
        %1269 = vmatpush2.bf16.msra.mxu0 0
        %1270 = vmatprep.subr.bf16.mxu0 0
        %1271 = vmatpush2.bf16.msra.mxu0 0
        %1272 = vmatprep.subr.bf16.mxu0 0
        %1273 = vmatpush2.bf16.msra.mxu0 0
        %1274 = vmatprep.subr.bf16.mxu0 0
        %1275 = vmatpush2.bf16.msra.mxu0 0
        %1276 = vmatprep.subr.bf16.mxu0 0
        %1277 = vmatpush2.bf16.msra.mxu0 0
        %1278 = vmatprep.subr.bf16.mxu0 0
        %1279 = vmatpush2.bf16.msra.mxu0 0
        %1280 = vmatprep.subr.bf16.mxu0 0
        %1281 = vmatpush2.bf16.msra.mxu0 0
        %1282 = vmatprep.mubr.bf16.mxu0 0
        %1283 = vmatmul.mubr.bf16.gmra.mxu0 %v1244
        %v1284 = vpop.f32.mrf.mxu0
        %v1285 = vadd.f32 0.0, %v1284
        %v1286 = vpop.f32.mrf.mxu0
        %v1287 = vpop.f32.mrf.mxu0
        %v1288 = vpop.f32.mrf.mxu0
        %1289 = vdwg.mxu0
        %v1291 = vsel %vm1146, %v1236, 0
        %v1294 = vsel %vm1246, %v739, 0
        %1296 = vmatprep.subr.bf16.mxu0 0
        %1297 = vmatpush1.bf16.msra.mxu0 0
        %1298 = vmatprep.subr.bf16.mxu0 0
        %1299 = vmatpush1.bf16.msra.mxu0 0
        %1300 = vmatprep.subr.bf16.mxu0 0
        %1301 = vmatpush1.bf16.msra.mxu0 0
        %1302 = vmatprep.subr.bf16.mxu0 0
        %1303 = vmatpush1.bf16.msra.mxu0 0
        %1304 = vmatprep.subr.bf16.mxu0 0
        %1305 = vmatpush1.bf16.msra.mxu0 0
        %1306 = vmatprep.subr.bf16.mxu0 0
        %1307 = vmatpush1.bf16.msra.mxu0 0
        %1308 = vmatprep.subr.bf16.mxu0 0
        %1309 = vmatpush1.bf16.msra.mxu0 0
        %1310 = vmatprep.subr.bf16.mxu0 0
        %1311 = vmatpush1.bf16.msra.mxu0 %v1294
        %1312 = vmatprep.subr.bf16.mxu0 0
        %1313 = vmatpush2.bf16.msra.mxu0 0
        %1314 = vmatprep.subr.bf16.mxu0 0
        %1315 = vmatpush2.bf16.msra.mxu0 0
        %1316 = vmatprep.subr.bf16.mxu0 0
        %1317 = vmatpush2.bf16.msra.mxu0 0
        %1318 = vmatprep.subr.bf16.mxu0 0
        %1319 = vmatpush2.bf16.msra.mxu0 0
        %1320 = vmatprep.subr.bf16.mxu0 0
        %1321 = vmatpush2.bf16.msra.mxu0 0
        %1322 = vmatprep.subr.bf16.mxu0 0
        %1323 = vmatpush2.bf16.msra.mxu0 0
        %1324 = vmatprep.subr.bf16.mxu0 0
        %1325 = vmatpush2.bf16.msra.mxu0 0
        %1326 = vmatprep.subr.bf16.mxu0 0
        %1327 = vmatpush2.bf16.msra.mxu0 0
        %1328 = vmatprep.mubr.bf16.mxu0 0
        %1329 = vmatmul.mubr.bf16.gmra.mxu0 %v1291
        %v1330 = vpop.f32.mrf.mxu0
        %v1331 = vadd.f32 0.0, %v1330
        %v1332 = vpop.f32.mrf.mxu0
        %v1333 = vpop.f32.mrf.mxu0
        %v1334 = vpop.f32.mrf.mxu0
        %1335 = vdwg.mxu0
        %v1337 = vsel %vm1146, %v1237, 0
        %v1340 = vsel %vm1246, %v741, 0
        %1342 = vmatprep.subr.bf16.mxu0 0
        %1343 = vmatpush1.bf16.msra.mxu0 0
        %1344 = vmatprep.subr.bf16.mxu0 0
        %1345 = vmatpush1.bf16.msra.mxu0 0
        %1346 = vmatprep.subr.bf16.mxu0 0
        %1347 = vmatpush1.bf16.msra.mxu0 0
        %1348 = vmatprep.subr.bf16.mxu0 0
        %1349 = vmatpush1.bf16.msra.mxu0 0
        %1350 = vmatprep.subr.bf16.mxu0 0
        %1351 = vmatpush1.bf16.msra.mxu0 0
        %1352 = vmatprep.subr.bf16.mxu0 0
        %1353 = vmatpush1.bf16.msra.mxu0 0
        %1354 = vmatprep.subr.bf16.mxu0 0
        %1355 = vmatpush1.bf16.msra.mxu0 0
        %1356 = vmatprep.subr.bf16.mxu0 0
        %1357 = vmatpush1.bf16.msra.mxu0 %v1340
        %1358 = vmatprep.subr.bf16.mxu0 0
        %1359 = vmatpush2.bf16.msra.mxu0 0
        %1360 = vmatprep.subr.bf16.mxu0 0
        %1361 = vmatpush2.bf16.msra.mxu0 0
        %1362 = vmatprep.subr.bf16.mxu0 0
        %1363 = vmatpush2.bf16.msra.mxu0 0
        %1364 = vmatprep.subr.bf16.mxu0 0
        %1365 = vmatpush2.bf16.msra.mxu0 0
        %1366 = vmatprep.subr.bf16.mxu0 0
        %1367 = vmatpush2.bf16.msra.mxu0 0
        %1368 = vmatprep.subr.bf16.mxu0 0
        %1369 = vmatpush2.bf16.msra.mxu0 0
        %1370 = vmatprep.subr.bf16.mxu0 0
        %1371 = vmatpush2.bf16.msra.mxu0 0
        %1372 = vmatprep.subr.bf16.mxu0 0
        %1373 = vmatpush2.bf16.msra.mxu0 0
        %1374 = vmatprep.mubr.bf16.mxu0 0
        %1375 = vmatmul.mubr.bf16.gmra.mxu0 %v1337
        %v1376 = vpop.f32.mrf.mxu0
        %v1377 = vadd.f32 0.0, %v1376
        %v1378 = vpop.f32.mrf.mxu0
        %v1379 = vpop.f32.mrf.mxu0
        %v1380 = vpop.f32.mrf.mxu0
        %1381 = vdwg.mxu0
        %v1383 = vsel %vm1146, %v1238, 0
        %v1386 = vsel %vm1246, %v743, 0
        %1388 = vmatprep.subr.bf16.mxu0 0
        %1389 = vmatpush1.bf16.msra.mxu0 0
        %1390 = vmatprep.subr.bf16.mxu0 0
        %1391 = vmatpush1.bf16.msra.mxu0 0
        %1392 = vmatprep.subr.bf16.mxu0 0
        %1393 = vmatpush1.bf16.msra.mxu0 0
        %1394 = vmatprep.subr.bf16.mxu0 0
        %1395 = vmatpush1.bf16.msra.mxu0 0
        %1396 = vmatprep.subr.bf16.mxu0 0
        %1397 = vmatpush1.bf16.msra.mxu0 0
        %1398 = vmatprep.subr.bf16.mxu0 0
        %1399 = vmatpush1.bf16.msra.mxu0 0
        %1400 = vmatprep.subr.bf16.mxu0 0
        %1401 = vmatpush1.bf16.msra.mxu0 0
        %1402 = vmatprep.subr.bf16.mxu0 0
        %1403 = vmatpush1.bf16.msra.mxu0 %v1386
        %1404 = vmatprep.subr.bf16.mxu0 0
        %1405 = vmatpush2.bf16.msra.mxu0 0
        %1406 = vmatprep.subr.bf16.mxu0 0
        %1407 = vmatpush2.bf16.msra.mxu0 0
        %1408 = vmatprep.subr.bf16.mxu0 0
        %1409 = vmatpush2.bf16.msra.mxu0 0
        %1410 = vmatprep.subr.bf16.mxu0 0
        %1411 = vmatpush2.bf16.msra.mxu0 0
        %1412 = vmatprep.subr.bf16.mxu0 0
        %1413 = vmatpush2.bf16.msra.mxu0 0
        %1414 = vmatprep.subr.bf16.mxu0 0
        %1415 = vmatpush2.bf16.msra.mxu0 0
        %1416 = vmatprep.subr.bf16.mxu0 0
        %1417 = vmatpush2.bf16.msra.mxu0 0
        %1418 = vmatprep.subr.bf16.mxu0 0
        %1419 = vmatpush2.bf16.msra.mxu0 0
        %1420 = vmatprep.mubr.bf16.mxu0 0
        %1421 = vmatmul.mubr.bf16.gmra.mxu0 %v1383
        %v1422 = vpop.f32.mrf.mxu0
        %v1423 = vadd.f32 0.0, %v1422
        %v1424 = vpop.f32.mrf.mxu0
        %v1425 = vpop.f32.mrf.mxu0
        %v1426 = vpop.f32.mrf.mxu0
        %1427 = vdwg.mxu0
        %v1429 = vsel %vm1146, %v1239, 0
        %v1432 = vsel %vm1246, %v745, 0
        %1434 = vmatprep.subr.bf16.mxu0 0
        %1435 = vmatpush1.bf16.msra.mxu0 0
        %1436 = vmatprep.subr.bf16.mxu0 0
        %1437 = vmatpush1.bf16.msra.mxu0 0
        %1438 = vmatprep.subr.bf16.mxu0 0
        %1439 = vmatpush1.bf16.msra.mxu0 0
        %1440 = vmatprep.subr.bf16.mxu0 0
        %1441 = vmatpush1.bf16.msra.mxu0 0
        %1442 = vmatprep.subr.bf16.mxu0 0
        %1443 = vmatpush1.bf16.msra.mxu0 0
        %1444 = vmatprep.subr.bf16.mxu0 0
        %1445 = vmatpush1.bf16.msra.mxu0 0
        %1446 = vmatprep.subr.bf16.mxu0 0
        %1447 = vmatpush1.bf16.msra.mxu0 0
        %1448 = vmatprep.subr.bf16.mxu0 0
        %1449 = vmatpush1.bf16.msra.mxu0 %v1432
        %1450 = vmatprep.subr.bf16.mxu0 0
        %1451 = vmatpush2.bf16.msra.mxu0 0
        %1452 = vmatprep.subr.bf16.mxu0 0
        %1453 = vmatpush2.bf16.msra.mxu0 0
        %1454 = vmatprep.subr.bf16.mxu0 0
        %1455 = vmatpush2.bf16.msra.mxu0 0
        %1456 = vmatprep.subr.bf16.mxu0 0
        %1457 = vmatpush2.bf16.msra.mxu0 0
        %1458 = vmatprep.subr.bf16.mxu0 0
        %1459 = vmatpush2.bf16.msra.mxu0 0
        %1460 = vmatprep.subr.bf16.mxu0 0
        %1461 = vmatpush2.bf16.msra.mxu0 0
        %1462 = vmatprep.subr.bf16.mxu0 0
        %1463 = vmatpush2.bf16.msra.mxu0 0
        %1464 = vmatprep.subr.bf16.mxu0 0
        %1465 = vmatpush2.bf16.msra.mxu0 0
        %1466 = vmatprep.mubr.bf16.mxu0 0
        %1467 = vmatmul.mubr.bf16.gmra.mxu0 %v1429
        %v1468 = vpop.f32.mrf.mxu0
        %v1469 = vadd.f32 0.0, %v1468
        %v1470 = vpop.f32.mrf.mxu0
        %v1471 = vpop.f32.mrf.mxu0
        %v1472 = vpop.f32.mrf.mxu0
        %1473 = vdwg.mxu0
        %v1475 = vsel %vm1146, %v1240, 0
        %v1478 = vsel %vm1246, %v747, 0
        %1480 = vmatprep.subr.bf16.mxu0 0
        %1481 = vmatpush1.bf16.msra.mxu0 0
        %1482 = vmatprep.subr.bf16.mxu0 0
        %1483 = vmatpush1.bf16.msra.mxu0 0
        %1484 = vmatprep.subr.bf16.mxu0 0
        %1485 = vmatpush1.bf16.msra.mxu0 0
        %1486 = vmatprep.subr.bf16.mxu0 0
        %1487 = vmatpush1.bf16.msra.mxu0 0
        %1488 = vmatprep.subr.bf16.mxu0 0
        %1489 = vmatpush1.bf16.msra.mxu0 0
        %1490 = vmatprep.subr.bf16.mxu0 0
        %1491 = vmatpush1.bf16.msra.mxu0 0
        %1492 = vmatprep.subr.bf16.mxu0 0
        %1493 = vmatpush1.bf16.msra.mxu0 0
        %1494 = vmatprep.subr.bf16.mxu0 0
        %1495 = vmatpush1.bf16.msra.mxu0 %v1478
        %1496 = vmatprep.subr.bf16.mxu0 0
        %1497 = vmatpush2.bf16.msra.mxu0 0
        %1498 = vmatprep.subr.bf16.mxu0 0
        %1499 = vmatpush2.bf16.msra.mxu0 0
        %1500 = vmatprep.subr.bf16.mxu0 0
        %1501 = vmatpush2.bf16.msra.mxu0 0
        %1502 = vmatprep.subr.bf16.mxu0 0
        %1503 = vmatpush2.bf16.msra.mxu0 0
        %1504 = vmatprep.subr.bf16.mxu0 0
        %1505 = vmatpush2.bf16.msra.mxu0 0
        %1506 = vmatprep.subr.bf16.mxu0 0
        %1507 = vmatpush2.bf16.msra.mxu0 0
        %1508 = vmatprep.subr.bf16.mxu0 0
        %1509 = vmatpush2.bf16.msra.mxu0 0
        %1510 = vmatprep.subr.bf16.mxu0 0
        %1511 = vmatpush2.bf16.msra.mxu0 0
        %1512 = vmatprep.mubr.bf16.mxu0 0
        %1513 = vmatmul.mubr.bf16.gmra.mxu0 %v1475
        %v1514 = vpop.f32.mrf.mxu0
        %v1515 = vadd.f32 0.0, %v1514
        %v1516 = vpop.f32.mrf.mxu0
        %v1517 = vpop.f32.mrf.mxu0
        %v1518 = vpop.f32.mrf.mxu0
        %1519 = vdwg.mxu0
        %v1521 = vsel %vm1146, %v1241, 0
        %v1524 = vsel %vm1246, %v749, 0
        %1526 = vmatprep.subr.bf16.mxu0 0
        %1527 = vmatpush1.bf16.msra.mxu0 0
        %1528 = vmatprep.subr.bf16.mxu0 0
        %1529 = vmatpush1.bf16.msra.mxu0 0
        %1530 = vmatprep.subr.bf16.mxu0 0
        %1531 = vmatpush1.bf16.msra.mxu0 0
        %1532 = vmatprep.subr.bf16.mxu0 0
        %1533 = vmatpush1.bf16.msra.mxu0 0
        %1534 = vmatprep.subr.bf16.mxu0 0
        %1535 = vmatpush1.bf16.msra.mxu0 0
        %1536 = vmatprep.subr.bf16.mxu0 0
        %1537 = vmatpush1.bf16.msra.mxu0 0
        %1538 = vmatprep.subr.bf16.mxu0 0
        %1539 = vmatpush1.bf16.msra.mxu0 0
        %1540 = vmatprep.subr.bf16.mxu0 0
        %1541 = vmatpush1.bf16.msra.mxu0 %v1524
        %1542 = vmatprep.subr.bf16.mxu0 0
        %1543 = vmatpush2.bf16.msra.mxu0 0
        %1544 = vmatprep.subr.bf16.mxu0 0
        %1545 = vmatpush2.bf16.msra.mxu0 0
        %1546 = vmatprep.subr.bf16.mxu0 0
        %1547 = vmatpush2.bf16.msra.mxu0 0
        %1548 = vmatprep.subr.bf16.mxu0 0
        %1549 = vmatpush2.bf16.msra.mxu0 0
        %1550 = vmatprep.subr.bf16.mxu0 0
        %1551 = vmatpush2.bf16.msra.mxu0 0
        %1552 = vmatprep.subr.bf16.mxu0 0
        %1553 = vmatpush2.bf16.msra.mxu0 0
        %1554 = vmatprep.subr.bf16.mxu0 0
        %1555 = vmatpush2.bf16.msra.mxu0 0
        %1556 = vmatprep.subr.bf16.mxu0 0
        %1557 = vmatpush2.bf16.msra.mxu0 0
        %1558 = vmatprep.mubr.bf16.mxu0 0
        %1559 = vmatmul.mubr.bf16.gmra.mxu0 %v1521
        %v1560 = vpop.f32.mrf.mxu0
        %v1561 = vadd.f32 0.0, %v1560
        %v1562 = vpop.f32.mrf.mxu0
        %v1563 = vpop.f32.mrf.mxu0
        %v1564 = vpop.f32.mrf.mxu0
        %1565 = vdwg.mxu0
        %v1567 = vsel %vm1146, %v1242, 0
        %v1570 = vsel %vm1246, %v751, 0
        %1572 = vmatprep.subr.bf16.mxu0 0
        %1573 = vmatpush1.bf16.msra.mxu0 0
        %1574 = vmatprep.subr.bf16.mxu0 0
        %1575 = vmatpush1.bf16.msra.mxu0 0
        %1576 = vmatprep.subr.bf16.mxu0 0
        %1577 = vmatpush1.bf16.msra.mxu0 0
        %1578 = vmatprep.subr.bf16.mxu0 0
        %1579 = vmatpush1.bf16.msra.mxu0 0
        %1580 = vmatprep.subr.bf16.mxu0 0
        %1581 = vmatpush1.bf16.msra.mxu0 0
        %1582 = vmatprep.subr.bf16.mxu0 0
        %1583 = vmatpush1.bf16.msra.mxu0 0
        %1584 = vmatprep.subr.bf16.mxu0 0
        %1585 = vmatpush1.bf16.msra.mxu0 0
        %1586 = vmatprep.subr.bf16.mxu0 0
        %1587 = vmatpush1.bf16.msra.mxu0 %v1570
        %1588 = vmatprep.subr.bf16.mxu0 0
        %1589 = vmatpush2.bf16.msra.mxu0 0
        %1590 = vmatprep.subr.bf16.mxu0 0
        %1591 = vmatpush2.bf16.msra.mxu0 0
        %1592 = vmatprep.subr.bf16.mxu0 0
        %1593 = vmatpush2.bf16.msra.mxu0 0
        %1594 = vmatprep.subr.bf16.mxu0 0
        %1595 = vmatpush2.bf16.msra.mxu0 0
        %1596 = vmatprep.subr.bf16.mxu0 0
        %1597 = vmatpush2.bf16.msra.mxu0 0
        %1598 = vmatprep.subr.bf16.mxu0 0
        %1599 = vmatpush2.bf16.msra.mxu0 0
        %1600 = vmatprep.subr.bf16.mxu0 0
        %1601 = vmatpush2.bf16.msra.mxu0 0
        %1602 = vmatprep.subr.bf16.mxu0 0
        %1603 = vmatpush2.bf16.msra.mxu0 0
        %1604 = vmatprep.mubr.bf16.mxu0 0
        %1605 = vmatmul.mubr.bf16.gmra.mxu0 %v1567
        %v1606 = vpop.f32.mrf.mxu0
        %v1607 = vadd.f32 0.0, %v1606
        %v1608 = vpop.f32.mrf.mxu0
        %v1609 = vpop.f32.mrf.mxu0
        %v1610 = vpop.f32.mrf.mxu0
        %1611 = vdwg.mxu0
        %v1612 = vpack.c.bf16 %v1285, %v1285
        %v1613 = vpack.c.bf16 %v1331, %v1331
        %v1614 = vpack.c.bf16 %v1377, %v1377
        %v1615 = vpack.c.bf16 %v1423, %v1423
        %v1616 = vpack.c.bf16 %v1469, %v1469
        %v1617 = vpack.c.bf16 %v1515, %v1515
        %v1618 = vpack.c.bf16 %v1561, %v1561
        %v1619 = vpack.c.bf16 %v1607, %v1607
        %1620 = vrot.lane.b32.xlu0 %v736, 96
        %v1621 = vpop.permute.xlu0 %1620
        %v1622 = vrot.slane %v1621, 4
        %v1623 = vpack.c.b16 %v712, %v712
        %1624 = vrot.lane.b32.xlu0 %v1623, 96
        %v1625 = vpop.permute.xlu0 %1624
        %v1627 = vsel %vm770, %v1625, 0
        %v1630 = vsel %vm770, %v1622, 0
        %1632 = vmatprep.subr.bf16.mxu0 0
        %1633 = vmatpush1.bf16.xpose.msra.mxu0 0
        %1634 = vmatprep.subr.bf16.mxu0 0
        %1635 = vmatpush1.bf16.xpose.msra.mxu0 0
        %1636 = vmatprep.subr.bf16.mxu0 0
        %1637 = vmatpush1.bf16.xpose.msra.mxu0 0
        %1638 = vmatprep.subr.bf16.mxu0 0
        %1639 = vmatpush1.bf16.xpose.msra.mxu0 0
        %1640 = vmatprep.subr.bf16.mxu0 0
        %1641 = vmatpush1.bf16.xpose.msra.mxu0 0
        %1642 = vmatprep.subr.bf16.mxu0 0
        %1643 = vmatpush1.bf16.xpose.msra.mxu0 0
        %1644 = vmatprep.subr.bf16.mxu0 0
        %1645 = vmatpush1.bf16.xpose.msra.mxu0 0
        %1646 = vmatprep.subr.bf16.mxu0 0
        %1647 = vmatpush1.bf16.xpose.msra.mxu0 %v1630
        %1648 = vmatprep.subr.bf16.mxu0 0
        %1649 = vmatpush2.bf16.xpose.msra.mxu0 0
        %1650 = vmatprep.subr.bf16.mxu0 0
        %1651 = vmatpush2.bf16.xpose.msra.mxu0 0
        %1652 = vmatprep.subr.bf16.mxu0 0
        %1653 = vmatpush2.bf16.xpose.msra.mxu0 0
        %1654 = vmatprep.subr.bf16.mxu0 0
        %1655 = vmatpush2.bf16.xpose.msra.mxu0 0
        %1656 = vmatprep.subr.bf16.mxu0 0
        %1657 = vmatpush2.bf16.xpose.msra.mxu0 0
        %1658 = vmatprep.subr.bf16.mxu0 0
        %1659 = vmatpush2.bf16.xpose.msra.mxu0 0
        %1660 = vmatprep.subr.bf16.mxu0 0
        %1661 = vmatpush2.bf16.xpose.msra.mxu0 0
        %1662 = vmatprep.subr.bf16.mxu0 0
        %1663 = vmatpush2.bf16.xpose.msra.mxu0 0
        %1664 = vmatprep.mubr.bf16.mxu0 0
        %1665 = vmatmul.mubr.bf16.gmra.mxu0 %v1627
        %v1666 = vpop.f32.mrf.mxu0
        %v1667 = vadd.f32 %v752, %v1666
        %v1668 = vpop.f32.mrf.mxu0
        %v1669 = vpop.f32.mrf.mxu0
        %v1670 = vpop.f32.mrf.mxu0
        %1671 = vdwg.mxu0
        %1672 = vrot.lane.b32.xlu0 %v738, 96
        %v1673 = vpop.permute.xlu0 %1672
        %v1674 = vrot.slane %v1673, 4
        %v1675 = vpack.c.b16 %v715, %v715
        %1676 = vrot.lane.b32.xlu0 %v1675, 96
        %v1677 = vpop.permute.xlu0 %1676
        %v1679 = vsel %vm770, %v1677, 0
        %v1682 = vsel %vm770, %v1674, 0
        %1684 = vmatprep.subr.bf16.mxu0 0
        %1685 = vmatpush1.bf16.xpose.msra.mxu0 0
        %1686 = vmatprep.subr.bf16.mxu0 0
        %1687 = vmatpush1.bf16.xpose.msra.mxu0 0
        %1688 = vmatprep.subr.bf16.mxu0 0
        %1689 = vmatpush1.bf16.xpose.msra.mxu0 0
        %1690 = vmatprep.subr.bf16.mxu0 0
        %1691 = vmatpush1.bf16.xpose.msra.mxu0 0
        %1692 = vmatprep.subr.bf16.mxu0 0
        %1693 = vmatpush1.bf16.xpose.msra.mxu0 0
        %1694 = vmatprep.subr.bf16.mxu0 0
        %1695 = vmatpush1.bf16.xpose.msra.mxu0 0
        %1696 = vmatprep.subr.bf16.mxu0 0
        %1697 = vmatpush1.bf16.xpose.msra.mxu0 0
        %1698 = vmatprep.subr.bf16.mxu0 0
        %1699 = vmatpush1.bf16.xpose.msra.mxu0 %v1682
        %1700 = vmatprep.subr.bf16.mxu0 0
        %1701 = vmatpush2.bf16.xpose.msra.mxu0 0
        %1702 = vmatprep.subr.bf16.mxu0 0
        %1703 = vmatpush2.bf16.xpose.msra.mxu0 0
        %1704 = vmatprep.subr.bf16.mxu0 0
        %1705 = vmatpush2.bf16.xpose.msra.mxu0 0
        %1706 = vmatprep.subr.bf16.mxu0 0
        %1707 = vmatpush2.bf16.xpose.msra.mxu0 0
        %1708 = vmatprep.subr.bf16.mxu0 0
        %1709 = vmatpush2.bf16.xpose.msra.mxu0 0
        %1710 = vmatprep.subr.bf16.mxu0 0
        %1711 = vmatpush2.bf16.xpose.msra.mxu0 0
        %1712 = vmatprep.subr.bf16.mxu0 0
        %1713 = vmatpush2.bf16.xpose.msra.mxu0 0
        %1714 = vmatprep.subr.bf16.mxu0 0
        %1715 = vmatpush2.bf16.xpose.msra.mxu0 0
        %1716 = vmatprep.mubr.bf16.mxu0 0
        %1717 = vmatmul.mubr.bf16.gmra.mxu0 %v1679
        %v1718 = vpop.f32.mrf.mxu0
        %v1719 = vadd.f32 %v752, %v1718
        %v1720 = vpop.f32.mrf.mxu0
        %v1721 = vpop.f32.mrf.mxu0
        %v1722 = vpop.f32.mrf.mxu0
        %1723 = vdwg.mxu0
        %1724 = vrot.lane.b32.xlu0 %v740, 96
        %v1725 = vpop.permute.xlu0 %1724
        %v1726 = vrot.slane %v1725, 4
        %v1727 = vpack.c.b16 %v718, %v718
        %1728 = vrot.lane.b32.xlu0 %v1727, 96
        %v1729 = vpop.permute.xlu0 %1728
        %v1731 = vsel %vm770, %v1729, 0
        %v1734 = vsel %vm770, %v1726, 0
        %1736 = vmatprep.subr.bf16.mxu0 0
        %1737 = vmatpush1.bf16.xpose.msra.mxu0 0
        %1738 = vmatprep.subr.bf16.mxu0 0
        %1739 = vmatpush1.bf16.xpose.msra.mxu0 0
        %1740 = vmatprep.subr.bf16.mxu0 0
        %1741 = vmatpush1.bf16.xpose.msra.mxu0 0
        %1742 = vmatprep.subr.bf16.mxu0 0
        %1743 = vmatpush1.bf16.xpose.msra.mxu0 0
        %1744 = vmatprep.subr.bf16.mxu0 0
        %1745 = vmatpush1.bf16.xpose.msra.mxu0 0
        %1746 = vmatprep.subr.bf16.mxu0 0
        %1747 = vmatpush1.bf16.xpose.msra.mxu0 0
        %1748 = vmatprep.subr.bf16.mxu0 0
        %1749 = vmatpush1.bf16.xpose.msra.mxu0 0
        %1750 = vmatprep.subr.bf16.mxu0 0
        %1751 = vmatpush1.bf16.xpose.msra.mxu0 %v1734
        %1752 = vmatprep.subr.bf16.mxu0 0
        %1753 = vmatpush2.bf16.xpose.msra.mxu0 0
        %1754 = vmatprep.subr.bf16.mxu0 0
        %1755 = vmatpush2.bf16.xpose.msra.mxu0 0
        %1756 = vmatprep.subr.bf16.mxu0 0
        %1757 = vmatpush2.bf16.xpose.msra.mxu0 0
        %1758 = vmatprep.subr.bf16.mxu0 0
        %1759 = vmatpush2.bf16.xpose.msra.mxu0 0
        %1760 = vmatprep.subr.bf16.mxu0 0
        %1761 = vmatpush2.bf16.xpose.msra.mxu0 0
        %1762 = vmatprep.subr.bf16.mxu0 0
        %1763 = vmatpush2.bf16.xpose.msra.mxu0 0
        %1764 = vmatprep.subr.bf16.mxu0 0
        %1765 = vmatpush2.bf16.xpose.msra.mxu0 0
        %1766 = vmatprep.subr.bf16.mxu0 0
        %1767 = vmatpush2.bf16.xpose.msra.mxu0 0
        %1768 = vmatprep.mubr.bf16.mxu0 0
        %1769 = vmatmul.mubr.bf16.gmra.mxu0 %v1731
        %v1770 = vpop.f32.mrf.mxu0
        %v1771 = vadd.f32 %v752, %v1770
        %v1772 = vpop.f32.mrf.mxu0
        %v1773 = vpop.f32.mrf.mxu0
        %v1774 = vpop.f32.mrf.mxu0
        %1775 = vdwg.mxu0
        %1776 = vrot.lane.b32.xlu0 %v742, 96
        %v1777 = vpop.permute.xlu0 %1776
        %v1778 = vrot.slane %v1777, 4
        %v1779 = vpack.c.b16 %v721, %v721
        %1780 = vrot.lane.b32.xlu0 %v1779, 96
        %v1781 = vpop.permute.xlu0 %1780
        %v1783 = vsel %vm770, %v1781, 0
        %v1786 = vsel %vm770, %v1778, 0
        %1788 = vmatprep.subr.bf16.mxu0 0
        %1789 = vmatpush1.bf16.xpose.msra.mxu0 0
        %1790 = vmatprep.subr.bf16.mxu0 0
        %1791 = vmatpush1.bf16.xpose.msra.mxu0 0
        %1792 = vmatprep.subr.bf16.mxu0 0
        %1793 = vmatpush1.bf16.xpose.msra.mxu0 0
        %1794 = vmatprep.subr.bf16.mxu0 0
        %1795 = vmatpush1.bf16.xpose.msra.mxu0 0
        %1796 = vmatprep.subr.bf16.mxu0 0
        %1797 = vmatpush1.bf16.xpose.msra.mxu0 0
        %1798 = vmatprep.subr.bf16.mxu0 0
        %1799 = vmatpush1.bf16.xpose.msra.mxu0 0
        %1800 = vmatprep.subr.bf16.mxu0 0
        %1801 = vmatpush1.bf16.xpose.msra.mxu0 0
        %1802 = vmatprep.subr.bf16.mxu0 0
        %1803 = vmatpush1.bf16.xpose.msra.mxu0 %v1786
        %1804 = vmatprep.subr.bf16.mxu0 0
        %1805 = vmatpush2.bf16.xpose.msra.mxu0 0
        %1806 = vmatprep.subr.bf16.mxu0 0
        %1807 = vmatpush2.bf16.xpose.msra.mxu0 0
        %1808 = vmatprep.subr.bf16.mxu0 0
        %1809 = vmatpush2.bf16.xpose.msra.mxu0 0
        %1810 = vmatprep.subr.bf16.mxu0 0
        %1811 = vmatpush2.bf16.xpose.msra.mxu0 0
        %1812 = vmatprep.subr.bf16.mxu0 0
        %1813 = vmatpush2.bf16.xpose.msra.mxu0 0
        %1814 = vmatprep.subr.bf16.mxu0 0
        %1815 = vmatpush2.bf16.xpose.msra.mxu0 0
        %1816 = vmatprep.subr.bf16.mxu0 0
        %1817 = vmatpush2.bf16.xpose.msra.mxu0 0
        %1818 = vmatprep.subr.bf16.mxu0 0
        %1819 = vmatpush2.bf16.xpose.msra.mxu0 0
        %1820 = vmatprep.mubr.bf16.mxu0 0
        %1821 = vmatmul.mubr.bf16.gmra.mxu0 %v1783
        %v1822 = vpop.f32.mrf.mxu0
        %v1823 = vadd.f32 %v752, %v1822
        %v1824 = vpop.f32.mrf.mxu0
        %v1825 = vpop.f32.mrf.mxu0
        %v1826 = vpop.f32.mrf.mxu0
        %1827 = vdwg.mxu0
        %1828 = vrot.lane.b32.xlu0 %v744, 96
        %v1829 = vpop.permute.xlu0 %1828
        %v1830 = vrot.slane %v1829, 4
        %v1831 = vpack.c.b16 %v724, %v724
        %1832 = vrot.lane.b32.xlu0 %v1831, 96
        %v1833 = vpop.permute.xlu0 %1832
        %v1835 = vsel %vm770, %v1833, 0
        %v1838 = vsel %vm770, %v1830, 0
        %1840 = vmatprep.subr.bf16.mxu0 0
        %1841 = vmatpush1.bf16.xpose.msra.mxu0 0
        %1842 = vmatprep.subr.bf16.mxu0 0
        %1843 = vmatpush1.bf16.xpose.msra.mxu0 0
        %1844 = vmatprep.subr.bf16.mxu0 0
        %1845 = vmatpush1.bf16.xpose.msra.mxu0 0
        %1846 = vmatprep.subr.bf16.mxu0 0
        %1847 = vmatpush1.bf16.xpose.msra.mxu0 0
        %1848 = vmatprep.subr.bf16.mxu0 0
        %1849 = vmatpush1.bf16.xpose.msra.mxu0 0
        %1850 = vmatprep.subr.bf16.mxu0 0
        %1851 = vmatpush1.bf16.xpose.msra.mxu0 0
        %1852 = vmatprep.subr.bf16.mxu0 0
        %1853 = vmatpush1.bf16.xpose.msra.mxu0 0
        %1854 = vmatprep.subr.bf16.mxu0 0
        %1855 = vmatpush1.bf16.xpose.msra.mxu0 %v1838
        %1856 = vmatprep.subr.bf16.mxu0 0
        %1857 = vmatpush2.bf16.xpose.msra.mxu0 0
        %1858 = vmatprep.subr.bf16.mxu0 0
        %1859 = vmatpush2.bf16.xpose.msra.mxu0 0
        %1860 = vmatprep.subr.bf16.mxu0 0
        %1861 = vmatpush2.bf16.xpose.msra.mxu0 0
        %1862 = vmatprep.subr.bf16.mxu0 0
        %1863 = vmatpush2.bf16.xpose.msra.mxu0 0
        %1864 = vmatprep.subr.bf16.mxu0 0
        %1865 = vmatpush2.bf16.xpose.msra.mxu0 0
        %1866 = vmatprep.subr.bf16.mxu0 0
        %1867 = vmatpush2.bf16.xpose.msra.mxu0 0
        %1868 = vmatprep.subr.bf16.mxu0 0
        %1869 = vmatpush2.bf16.xpose.msra.mxu0 0
        %1870 = vmatprep.subr.bf16.mxu0 0
        %1871 = vmatpush2.bf16.xpose.msra.mxu0 0
        %1872 = vmatprep.mubr.bf16.mxu0 0
        %1873 = vmatmul.mubr.bf16.gmra.mxu0 %v1835
        %v1874 = vpop.f32.mrf.mxu0
        %v1875 = vadd.f32 %v752, %v1874
        %v1876 = vpop.f32.mrf.mxu0
        %v1877 = vpop.f32.mrf.mxu0
        %v1878 = vpop.f32.mrf.mxu0
        %1879 = vdwg.mxu0
        %1880 = vrot.lane.b32.xlu0 %v746, 96
        %v1881 = vpop.permute.xlu0 %1880
        %v1882 = vrot.slane %v1881, 4
        %v1883 = vpack.c.b16 %v727, %v727
        %1884 = vrot.lane.b32.xlu0 %v1883, 96
        %v1885 = vpop.permute.xlu0 %1884
        %v1887 = vsel %vm770, %v1885, 0
        %v1890 = vsel %vm770, %v1882, 0
        %1892 = vmatprep.subr.bf16.mxu0 0
        %1893 = vmatpush1.bf16.xpose.msra.mxu0 0
        %1894 = vmatprep.subr.bf16.mxu0 0
        %1895 = vmatpush1.bf16.xpose.msra.mxu0 0
        %1896 = vmatprep.subr.bf16.mxu0 0
        %1897 = vmatpush1.bf16.xpose.msra.mxu0 0
        %1898 = vmatprep.subr.bf16.mxu0 0
        %1899 = vmatpush1.bf16.xpose.msra.mxu0 0
        %1900 = vmatprep.subr.bf16.mxu0 0
        %1901 = vmatpush1.bf16.xpose.msra.mxu0 0
        %1902 = vmatprep.subr.bf16.mxu0 0
        %1903 = vmatpush1.bf16.xpose.msra.mxu0 0
        %1904 = vmatprep.subr.bf16.mxu0 0
        %1905 = vmatpush1.bf16.xpose.msra.mxu0 0
        %1906 = vmatprep.subr.bf16.mxu0 0
        %1907 = vmatpush1.bf16.xpose.msra.mxu0 %v1890
        %1908 = vmatprep.subr.bf16.mxu0 0
        %1909 = vmatpush2.bf16.xpose.msra.mxu0 0
        %1910 = vmatprep.subr.bf16.mxu0 0
        %1911 = vmatpush2.bf16.xpose.msra.mxu0 0
        %1912 = vmatprep.subr.bf16.mxu0 0
        %1913 = vmatpush2.bf16.xpose.msra.mxu0 0
        %1914 = vmatprep.subr.bf16.mxu0 0
        %1915 = vmatpush2.bf16.xpose.msra.mxu0 0
        %1916 = vmatprep.subr.bf16.mxu0 0
        %1917 = vmatpush2.bf16.xpose.msra.mxu0 0
        %1918 = vmatprep.subr.bf16.mxu0 0
        %1919 = vmatpush2.bf16.xpose.msra.mxu0 0
        %1920 = vmatprep.subr.bf16.mxu0 0
        %1921 = vmatpush2.bf16.xpose.msra.mxu0 0
        %1922 = vmatprep.subr.bf16.mxu0 0
        %1923 = vmatpush2.bf16.xpose.msra.mxu0 0
        %1924 = vmatprep.mubr.bf16.mxu0 0
        %1925 = vmatmul.mubr.bf16.gmra.mxu0 %v1887
        %v1926 = vpop.f32.mrf.mxu0
        %v1927 = vadd.f32 %v752, %v1926
        %v1928 = vpop.f32.mrf.mxu0
        %v1929 = vpop.f32.mrf.mxu0
        %v1930 = vpop.f32.mrf.mxu0
        %1931 = vdwg.mxu0
        %1932 = vrot.lane.b32.xlu0 %v748, 96
        %v1933 = vpop.permute.xlu0 %1932
        %v1934 = vrot.slane %v1933, 4
        %v1935 = vpack.c.b16 %v730, %v730
        %1936 = vrot.lane.b32.xlu0 %v1935, 96
        %v1937 = vpop.permute.xlu0 %1936
        %v1939 = vsel %vm770, %v1937, 0
        %v1942 = vsel %vm770, %v1934, 0
        %1944 = vmatprep.subr.bf16.mxu0 0
        %1945 = vmatpush1.bf16.xpose.msra.mxu0 0
        %1946 = vmatprep.subr.bf16.mxu0 0
        %1947 = vmatpush1.bf16.xpose.msra.mxu0 0
        %1948 = vmatprep.subr.bf16.mxu0 0
        %1949 = vmatpush1.bf16.xpose.msra.mxu0 0
        %1950 = vmatprep.subr.bf16.mxu0 0
        %1951 = vmatpush1.bf16.xpose.msra.mxu0 0
        %1952 = vmatprep.subr.bf16.mxu0 0
        %1953 = vmatpush1.bf16.xpose.msra.mxu0 0
        %1954 = vmatprep.subr.bf16.mxu0 0
        %1955 = vmatpush1.bf16.xpose.msra.mxu0 0
        %1956 = vmatprep.subr.bf16.mxu0 0
        %1957 = vmatpush1.bf16.xpose.msra.mxu0 0
        %1958 = vmatprep.subr.bf16.mxu0 0
        %1959 = vmatpush1.bf16.xpose.msra.mxu0 %v1942
        %1960 = vmatprep.subr.bf16.mxu0 0
        %1961 = vmatpush2.bf16.xpose.msra.mxu0 0
        %1962 = vmatprep.subr.bf16.mxu0 0
        %1963 = vmatpush2.bf16.xpose.msra.mxu0 0
        %1964 = vmatprep.subr.bf16.mxu0 0
        %1965 = vmatpush2.bf16.xpose.msra.mxu0 0
        %1966 = vmatprep.subr.bf16.mxu0 0
        %1967 = vmatpush2.bf16.xpose.msra.mxu0 0
        %1968 = vmatprep.subr.bf16.mxu0 0
        %1969 = vmatpush2.bf16.xpose.msra.mxu0 0
        %1970 = vmatprep.subr.bf16.mxu0 0
        %1971 = vmatpush2.bf16.xpose.msra.mxu0 0
        %1972 = vmatprep.subr.bf16.mxu0 0
        %1973 = vmatpush2.bf16.xpose.msra.mxu0 0
        %1974 = vmatprep.subr.bf16.mxu0 0
        %1975 = vmatpush2.bf16.xpose.msra.mxu0 0
        %1976 = vmatprep.mubr.bf16.mxu0 0
        %1977 = vmatmul.mubr.bf16.gmra.mxu0 %v1939
        %v1978 = vpop.f32.mrf.mxu0
        %v1979 = vadd.f32 %v752, %v1978
        %v1980 = vpop.f32.mrf.mxu0
        %v1981 = vpop.f32.mrf.mxu0
        %v1982 = vpop.f32.mrf.mxu0
        %1983 = vdwg.mxu0
        %1984 = vrot.lane.b32.xlu0 %v750, 96
        %v1985 = vpop.permute.xlu0 %1984
        %v1986 = vrot.slane %v1985, 4
        %v1987 = vpack.c.b16 %v733, %v733
        %1988 = vrot.lane.b32.xlu0 %v1987, 96
        %v1989 = vpop.permute.xlu0 %1988
        %v1991 = vsel %vm770, %v1989, 0
        %v1994 = vsel %vm770, %v1986, 0
        %1996 = vmatprep.subr.bf16.mxu0 0
        %1997 = vmatpush1.bf16.xpose.msra.mxu0 0
        %1998 = vmatprep.subr.bf16.mxu0 0
        %1999 = vmatpush1.bf16.xpose.msra.mxu0 0
        %2000 = vmatprep.subr.bf16.mxu0 0
        %2001 = vmatpush1.bf16.xpose.msra.mxu0 0
        %2002 = vmatprep.subr.bf16.mxu0 0
        %2003 = vmatpush1.bf16.xpose.msra.mxu0 0
        %2004 = vmatprep.subr.bf16.mxu0 0
        %2005 = vmatpush1.bf16.xpose.msra.mxu0 0
        %2006 = vmatprep.subr.bf16.mxu0 0
        %2007 = vmatpush1.bf16.xpose.msra.mxu0 0
        %2008 = vmatprep.subr.bf16.mxu0 0
        %2009 = vmatpush1.bf16.xpose.msra.mxu0 0
        %2010 = vmatprep.subr.bf16.mxu0 0
        %2011 = vmatpush1.bf16.xpose.msra.mxu0 %v1994
        %2012 = vmatprep.subr.bf16.mxu0 0
        %2013 = vmatpush2.bf16.xpose.msra.mxu0 0
        %2014 = vmatprep.subr.bf16.mxu0 0
        %2015 = vmatpush2.bf16.xpose.msra.mxu0 0
        %2016 = vmatprep.subr.bf16.mxu0 0
        %2017 = vmatpush2.bf16.xpose.msra.mxu0 0
        %2018 = vmatprep.subr.bf16.mxu0 0
        %2019 = vmatpush2.bf16.xpose.msra.mxu0 0
        %2020 = vmatprep.subr.bf16.mxu0 0
        %2021 = vmatpush2.bf16.xpose.msra.mxu0 0
        %2022 = vmatprep.subr.bf16.mxu0 0
        %2023 = vmatpush2.bf16.xpose.msra.mxu0 0
        %2024 = vmatprep.subr.bf16.mxu0 0
        %2025 = vmatpush2.bf16.xpose.msra.mxu0 0
        %2026 = vmatprep.subr.bf16.mxu0 0
        %2027 = vmatpush2.bf16.xpose.msra.mxu0 0
        %2028 = vmatprep.mubr.bf16.mxu0 0
        %2029 = vmatmul.mubr.bf16.gmra.mxu0 %v1991
        %v2030 = vpop.f32.mrf.mxu0
        %v2031 = vadd.f32 %v752, %v2030
        %v2032 = vpop.f32.mrf.mxu0
        %v2033 = vpop.f32.mrf.mxu0
        %v2034 = vpop.f32.mrf.mxu0
        %2035 = vdwg.mxu0
        %v2036 = vsel %vm1146, %v1667, -inf
        %2037 = vmax.xlane.f32.xlu0 %v2036
        %v2038 = vpop.xlane.xlu0 %2037
        %v2039 = vsel %vm1146, %v1719, -inf
        %2040 = vmax.xlane.f32.xlu0 %v2039
        %v2041 = vpop.xlane.xlu0 %2040
        %v2042 = vsel %vm1146, %v1771, -inf
        %2043 = vmax.xlane.f32.xlu0 %v2042
        %v2044 = vpop.xlane.xlu0 %2043
        %v2045 = vsel %vm1146, %v1823, -inf
        %2046 = vmax.xlane.f32.xlu0 %v2045
        %v2047 = vpop.xlane.xlu0 %2046
        %v2048 = vsel %vm1146, %v1875, -inf
        %2049 = vmax.xlane.f32.xlu0 %v2048
        %v2050 = vpop.xlane.xlu0 %2049
        %v2051 = vsel %vm1146, %v1927, -inf
        %2052 = vmax.xlane.f32.xlu0 %v2051
        %v2053 = vpop.xlane.xlu0 %2052
        %v2054 = vsel %vm1146, %v1979, -inf
        %2055 = vmax.xlane.f32.xlu0 %v2054
        %v2056 = vpop.xlane.xlu0 %2055
        %v2057 = vsel %vm1146, %v2031, -inf
        %2058 = vmax.xlane.f32.xlu0 %v2057
        %v2059 = vpop.xlane.xlu0 %2058
        %v2060 = vsub.f32 %v1667, %v2038
        %v2061 = vsub.f32 %v1719, %v2041
        %v2062 = vsub.f32 %v1771, %v2044
        %v2063 = vsub.f32 %v1823, %v2047
        %v2064 = vsub.f32 %v1875, %v2050
        %v2065 = vsub.f32 %v1927, %v2053
        %v2066 = vsub.f32 %v1979, %v2056
        %v2067 = vsub.f32 %v2031, %v2059
        %v2068 = vmul.f32 %v2060, 1.442695
        %v2069 = vpow.pop %v2068
        %v2070 = vmul.f32 %v2061, 1.442695
        %v2071 = vpow.pop %v2070
        %v2072 = vmul.f32 %v2062, 1.442695
        %v2073 = vpow.pop %v2072
        %v2074 = vmul.f32 %v2063, 1.442695
        %v2075 = vpow.pop %v2074
        %v2076 = vmul.f32 %v2064, 1.442695
        %v2077 = vpow.pop %v2076
        %v2078 = vmul.f32 %v2065, 1.442695
        %v2079 = vpow.pop %v2078
        %v2080 = vmul.f32 %v2066, 1.442695
        %v2081 = vpow.pop %v2080
        %v2082 = vmul.f32 %v2067, 1.442695
        %v2083 = vpow.pop %v2082
        %v2084 = vsel %vm1146, %v2069, 0.0
        %2085 = vadd.xlane.f32.xlu0 %v2084
        %v2086 = vpop.xlane.xlu0 %2085
        %v2087 = vsel %vm1146, %v2071, 0.0
        %2088 = vadd.xlane.f32.xlu0 %v2087
        %v2089 = vpop.xlane.xlu0 %2088
        %v2090 = vsel %vm1146, %v2073, 0.0
        %2091 = vadd.xlane.f32.xlu0 %v2090
        %v2092 = vpop.xlane.xlu0 %2091
        %v2093 = vsel %vm1146, %v2075, 0.0
        %2094 = vadd.xlane.f32.xlu0 %v2093
        %v2095 = vpop.xlane.xlu0 %2094
        %v2096 = vsel %vm1146, %v2077, 0.0
        %2097 = vadd.xlane.f32.xlu0 %v2096
        %v2098 = vpop.xlane.xlu0 %2097
        %v2099 = vsel %vm1146, %v2079, 0.0
        %2100 = vadd.xlane.f32.xlu0 %v2099
        %v2101 = vpop.xlane.xlu0 %2100
        %v2102 = vsel %vm1146, %v2081, 0.0
        %2103 = vadd.xlane.f32.xlu0 %v2102
        %v2104 = vpop.xlane.xlu0 %2103
        %v2105 = vsel %vm1146, %v2083, 0.0
        %2106 = vadd.xlane.f32.xlu0 %v2105
        %v2107 = vpop.xlane.xlu0 %2106
        %v2108 = vrcp.pop %v2086
        %v2109 = vrcp.pop %v2089
        %v2110 = vrcp.pop %v2092
        %v2111 = vrcp.pop %v2095
        %v2112 = vrcp.pop %v2098
        %v2113 = vrcp.pop %v2101
        %v2114 = vrcp.pop %v2104
        %v2115 = vrcp.pop %v2107
        %v2116 = vmul.f32 %v2069, %v2108
        %v2117 = vmul.f32 %v2071, %v2109
        %v2118 = vmul.f32 %v2073, %v2110
        %v2119 = vmul.f32 %v2075, %v2111
        %v2120 = vmul.f32 %v2077, %v2112
        %v2121 = vmul.f32 %v2079, %v2113
        %v2122 = vmul.f32 %v2081, %v2114
        %v2123 = vmul.f32 %v2083, %v2115
        %v2124 = vpack.c.bf16 %v2116, %v2116
        %v2125 = vpack.c.bf16 %v2117, %v2117
        %v2126 = vpack.c.bf16 %v2118, %v2118
        %v2127 = vpack.c.bf16 %v2119, %v2119
        %v2128 = vpack.c.bf16 %v2120, %v2120
        %v2129 = vpack.c.bf16 %v2121, %v2121
        %v2130 = vpack.c.bf16 %v2122, %v2122
        %v2131 = vpack.c.bf16 %v2123, %v2123
        %2132 = vrot.lane.b32.xlu0 %v737, 96
        %v2133 = vpop.permute.xlu0 %2132
        %v2135 = vsel %vm1146, %v2124, 0
        %v2138 = vsel %vm1246, %v2133, 0
        %2140 = vmatprep.subr.bf16.mxu0 0
        %2141 = vmatpush1.bf16.msra.mxu0 0
        %2142 = vmatprep.subr.bf16.mxu0 0
        %2143 = vmatpush1.bf16.msra.mxu0 0
        %2144 = vmatprep.subr.bf16.mxu0 0
        %2145 = vmatpush1.bf16.msra.mxu0 0
        %2146 = vmatprep.subr.bf16.mxu0 0
        %2147 = vmatpush1.bf16.msra.mxu0 0
        %2148 = vmatprep.subr.bf16.mxu0 0
        %2149 = vmatpush1.bf16.msra.mxu0 0
        %2150 = vmatprep.subr.bf16.mxu0 0
        %2151 = vmatpush1.bf16.msra.mxu0 0
        %2152 = vmatprep.subr.bf16.mxu0 0
        %2153 = vmatpush1.bf16.msra.mxu0 0
        %2154 = vmatprep.subr.bf16.mxu0 0
        %2155 = vmatpush1.bf16.msra.mxu0 %v2138
        %2156 = vmatprep.subr.bf16.mxu0 0
        %2157 = vmatpush2.bf16.msra.mxu0 0
        %2158 = vmatprep.subr.bf16.mxu0 0
        %2159 = vmatpush2.bf16.msra.mxu0 0
        %2160 = vmatprep.subr.bf16.mxu0 0
        %2161 = vmatpush2.bf16.msra.mxu0 0
        %2162 = vmatprep.subr.bf16.mxu0 0
        %2163 = vmatpush2.bf16.msra.mxu0 0
        %2164 = vmatprep.subr.bf16.mxu0 0
        %2165 = vmatpush2.bf16.msra.mxu0 0
        %2166 = vmatprep.subr.bf16.mxu0 0
        %2167 = vmatpush2.bf16.msra.mxu0 0
        %2168 = vmatprep.subr.bf16.mxu0 0
        %2169 = vmatpush2.bf16.msra.mxu0 0
        %2170 = vmatprep.subr.bf16.mxu0 0
        %2171 = vmatpush2.bf16.msra.mxu0 0
        %2172 = vmatprep.mubr.bf16.mxu0 0
        %2173 = vmatmul.mubr.bf16.gmra.mxu0 %v2135
        %v2174 = vpop.f32.mrf.mxu0
        %v2175 = vadd.f32 0.0, %v2174
        %v2176 = vpop.f32.mrf.mxu0
        %v2177 = vpop.f32.mrf.mxu0
        %v2178 = vpop.f32.mrf.mxu0
        %2179 = vdwg.mxu0
        %2180 = vrot.lane.b32.xlu0 %v739, 96
        %v2181 = vpop.permute.xlu0 %2180
        %v2183 = vsel %vm1146, %v2125, 0
        %v2186 = vsel %vm1246, %v2181, 0
        %2188 = vmatprep.subr.bf16.mxu0 0
        %2189 = vmatpush1.bf16.msra.mxu0 0
        %2190 = vmatprep.subr.bf16.mxu0 0
        %2191 = vmatpush1.bf16.msra.mxu0 0
        %2192 = vmatprep.subr.bf16.mxu0 0
        %2193 = vmatpush1.bf16.msra.mxu0 0
        %2194 = vmatprep.subr.bf16.mxu0 0
        %2195 = vmatpush1.bf16.msra.mxu0 0
        %2196 = vmatprep.subr.bf16.mxu0 0
        %2197 = vmatpush1.bf16.msra.mxu0 0
        %2198 = vmatprep.subr.bf16.mxu0 0
        %2199 = vmatpush1.bf16.msra.mxu0 0
        %2200 = vmatprep.subr.bf16.mxu0 0
        %2201 = vmatpush1.bf16.msra.mxu0 0
        %2202 = vmatprep.subr.bf16.mxu0 0
        %2203 = vmatpush1.bf16.msra.mxu0 %v2186
        %2204 = vmatprep.subr.bf16.mxu0 0
        %2205 = vmatpush2.bf16.msra.mxu0 0
        %2206 = vmatprep.subr.bf16.mxu0 0
        %2207 = vmatpush2.bf16.msra.mxu0 0
        %2208 = vmatprep.subr.bf16.mxu0 0
        %2209 = vmatpush2.bf16.msra.mxu0 0
        %2210 = vmatprep.subr.bf16.mxu0 0
        %2211 = vmatpush2.bf16.msra.mxu0 0
        %2212 = vmatprep.subr.bf16.mxu0 0
        %2213 = vmatpush2.bf16.msra.mxu0 0
        %2214 = vmatprep.subr.bf16.mxu0 0
        %2215 = vmatpush2.bf16.msra.mxu0 0
        %2216 = vmatprep.subr.bf16.mxu0 0
        %2217 = vmatpush2.bf16.msra.mxu0 0
        %2218 = vmatprep.subr.bf16.mxu0 0
        %2219 = vmatpush2.bf16.msra.mxu0 0
        %2220 = vmatprep.mubr.bf16.mxu0 0
        %2221 = vmatmul.mubr.bf16.gmra.mxu0 %v2183
        %v2222 = vpop.f32.mrf.mxu0
        %v2223 = vadd.f32 0.0, %v2222
        %v2224 = vpop.f32.mrf.mxu0
        %v2225 = vpop.f32.mrf.mxu0
        %v2226 = vpop.f32.mrf.mxu0
        %2227 = vdwg.mxu0
        %2228 = vrot.lane.b32.xlu0 %v741, 96
        %v2229 = vpop.permute.xlu0 %2228
        %v2231 = vsel %vm1146, %v2126, 0
        %v2234 = vsel %vm1246, %v2229, 0
        %2236 = vmatprep.subr.bf16.mxu0 0
        %2237 = vmatpush1.bf16.msra.mxu0 0
        %2238 = vmatprep.subr.bf16.mxu0 0
        %2239 = vmatpush1.bf16.msra.mxu0 0
        %2240 = vmatprep.subr.bf16.mxu0 0
        %2241 = vmatpush1.bf16.msra.mxu0 0
        %2242 = vmatprep.subr.bf16.mxu0 0
        %2243 = vmatpush1.bf16.msra.mxu0 0
        %2244 = vmatprep.subr.bf16.mxu0 0
        %2245 = vmatpush1.bf16.msra.mxu0 0
        %2246 = vmatprep.subr.bf16.mxu0 0
        %2247 = vmatpush1.bf16.msra.mxu0 0
        %2248 = vmatprep.subr.bf16.mxu0 0
        %2249 = vmatpush1.bf16.msra.mxu0 0
        %2250 = vmatprep.subr.bf16.mxu0 0
        %2251 = vmatpush1.bf16.msra.mxu0 %v2234
        %2252 = vmatprep.subr.bf16.mxu0 0
        %2253 = vmatpush2.bf16.msra.mxu0 0
        %2254 = vmatprep.subr.bf16.mxu0 0
        %2255 = vmatpush2.bf16.msra.mxu0 0
        %2256 = vmatprep.subr.bf16.mxu0 0
        %2257 = vmatpush2.bf16.msra.mxu0 0
        %2258 = vmatprep.subr.bf16.mxu0 0
        %2259 = vmatpush2.bf16.msra.mxu0 0
        %2260 = vmatprep.subr.bf16.mxu0 0
        %2261 = vmatpush2.bf16.msra.mxu0 0
        %2262 = vmatprep.subr.bf16.mxu0 0
        %2263 = vmatpush2.bf16.msra.mxu0 0
        %2264 = vmatprep.subr.bf16.mxu0 0
        %2265 = vmatpush2.bf16.msra.mxu0 0
        %2266 = vmatprep.subr.bf16.mxu0 0
        %2267 = vmatpush2.bf16.msra.mxu0 0
        %2268 = vmatprep.mubr.bf16.mxu0 0
        %2269 = vmatmul.mubr.bf16.gmra.mxu0 %v2231
        %v2270 = vpop.f32.mrf.mxu0
        %v2271 = vadd.f32 0.0, %v2270
        %v2272 = vpop.f32.mrf.mxu0
        %v2273 = vpop.f32.mrf.mxu0
        %v2274 = vpop.f32.mrf.mxu0
        %2275 = vdwg.mxu0
        %2276 = vrot.lane.b32.xlu0 %v743, 96
        %v2277 = vpop.permute.xlu0 %2276
        %v2279 = vsel %vm1146, %v2127, 0
        %v2282 = vsel %vm1246, %v2277, 0
        %2284 = vmatprep.subr.bf16.mxu0 0
        %2285 = vmatpush1.bf16.msra.mxu0 0
        %2286 = vmatprep.subr.bf16.mxu0 0
        %2287 = vmatpush1.bf16.msra.mxu0 0
        %2288 = vmatprep.subr.bf16.mxu0 0
        %2289 = vmatpush1.bf16.msra.mxu0 0
        %2290 = vmatprep.subr.bf16.mxu0 0
        %2291 = vmatpush1.bf16.msra.mxu0 0
        %2292 = vmatprep.subr.bf16.mxu0 0
        %2293 = vmatpush1.bf16.msra.mxu0 0
        %2294 = vmatprep.subr.bf16.mxu0 0
        %2295 = vmatpush1.bf16.msra.mxu0 0
        %2296 = vmatprep.subr.bf16.mxu0 0
        %2297 = vmatpush1.bf16.msra.mxu0 0
        %2298 = vmatprep.subr.bf16.mxu0 0
        %2299 = vmatpush1.bf16.msra.mxu0 %v2282
        %2300 = vmatprep.subr.bf16.mxu0 0
        %2301 = vmatpush2.bf16.msra.mxu0 0
        %2302 = vmatprep.subr.bf16.mxu0 0
        %2303 = vmatpush2.bf16.msra.mxu0 0
        %2304 = vmatprep.subr.bf16.mxu0 0
        %2305 = vmatpush2.bf16.msra.mxu0 0
        %2306 = vmatprep.subr.bf16.mxu0 0
        %2307 = vmatpush2.bf16.msra.mxu0 0
        %2308 = vmatprep.subr.bf16.mxu0 0
        %2309 = vmatpush2.bf16.msra.mxu0 0
        %2310 = vmatprep.subr.bf16.mxu0 0
        %2311 = vmatpush2.bf16.msra.mxu0 0
        %2312 = vmatprep.subr.bf16.mxu0 0
        %2313 = vmatpush2.bf16.msra.mxu0 0
        %2314 = vmatprep.subr.bf16.mxu0 0
        %2315 = vmatpush2.bf16.msra.mxu0 0
        %2316 = vmatprep.mubr.bf16.mxu0 0
        %2317 = vmatmul.mubr.bf16.gmra.mxu0 %v2279
        %v2318 = vpop.f32.mrf.mxu0
        %v2319 = vadd.f32 0.0, %v2318
        %v2320 = vpop.f32.mrf.mxu0
        %v2321 = vpop.f32.mrf.mxu0
        %v2322 = vpop.f32.mrf.mxu0
        %2323 = vdwg.mxu0
        %2324 = vrot.lane.b32.xlu0 %v745, 96
        %v2325 = vpop.permute.xlu0 %2324
        %v2327 = vsel %vm1146, %v2128, 0
        %v2330 = vsel %vm1246, %v2325, 0
        %2332 = vmatprep.subr.bf16.mxu0 0
        %2333 = vmatpush1.bf16.msra.mxu0 0
        %2334 = vmatprep.subr.bf16.mxu0 0
        %2335 = vmatpush1.bf16.msra.mxu0 0
        %2336 = vmatprep.subr.bf16.mxu0 0
        %2337 = vmatpush1.bf16.msra.mxu0 0
        %2338 = vmatprep.subr.bf16.mxu0 0
        %2339 = vmatpush1.bf16.msra.mxu0 0
        %2340 = vmatprep.subr.bf16.mxu0 0
        %2341 = vmatpush1.bf16.msra.mxu0 0
        %2342 = vmatprep.subr.bf16.mxu0 0
        %2343 = vmatpush1.bf16.msra.mxu0 0
        %2344 = vmatprep.subr.bf16.mxu0 0
        %2345 = vmatpush1.bf16.msra.mxu0 0
        %2346 = vmatprep.subr.bf16.mxu0 0
        %2347 = vmatpush1.bf16.msra.mxu0 %v2330
        %2348 = vmatprep.subr.bf16.mxu0 0
        %2349 = vmatpush2.bf16.msra.mxu0 0
        %2350 = vmatprep.subr.bf16.mxu0 0
        %2351 = vmatpush2.bf16.msra.mxu0 0
        %2352 = vmatprep.subr.bf16.mxu0 0
        %2353 = vmatpush2.bf16.msra.mxu0 0
        %2354 = vmatprep.subr.bf16.mxu0 0
        %2355 = vmatpush2.bf16.msra.mxu0 0
        %2356 = vmatprep.subr.bf16.mxu0 0
        %2357 = vmatpush2.bf16.msra.mxu0 0
        %2358 = vmatprep.subr.bf16.mxu0 0
        %2359 = vmatpush2.bf16.msra.mxu0 0
        %2360 = vmatprep.subr.bf16.mxu0 0
        %2361 = vmatpush2.bf16.msra.mxu0 0
        %2362 = vmatprep.subr.bf16.mxu0 0
        %2363 = vmatpush2.bf16.msra.mxu0 0
        %2364 = vmatprep.mubr.bf16.mxu0 0
        %2365 = vmatmul.mubr.bf16.gmra.mxu0 %v2327
        %v2366 = vpop.f32.mrf.mxu0
        %v2367 = vadd.f32 0.0, %v2366
        %v2368 = vpop.f32.mrf.mxu0
        %v2369 = vpop.f32.mrf.mxu0
        %v2370 = vpop.f32.mrf.mxu0
        %2371 = vdwg.mxu0
        %2372 = vrot.lane.b32.xlu0 %v747, 96
        %v2373 = vpop.permute.xlu0 %2372
        %v2375 = vsel %vm1146, %v2129, 0
        %v2378 = vsel %vm1246, %v2373, 0
        %2380 = vmatprep.subr.bf16.mxu0 0
        %2381 = vmatpush1.bf16.msra.mxu0 0
        %2382 = vmatprep.subr.bf16.mxu0 0
        %2383 = vmatpush1.bf16.msra.mxu0 0
        %2384 = vmatprep.subr.bf16.mxu0 0
        %2385 = vmatpush1.bf16.msra.mxu0 0
        %2386 = vmatprep.subr.bf16.mxu0 0
        %2387 = vmatpush1.bf16.msra.mxu0 0
        %2388 = vmatprep.subr.bf16.mxu0 0
        %2389 = vmatpush1.bf16.msra.mxu0 0
        %2390 = vmatprep.subr.bf16.mxu0 0
        %2391 = vmatpush1.bf16.msra.mxu0 0
        %2392 = vmatprep.subr.bf16.mxu0 0
        %2393 = vmatpush1.bf16.msra.mxu0 0
        %2394 = vmatprep.subr.bf16.mxu0 0
        %2395 = vmatpush1.bf16.msra.mxu0 %v2378
        %2396 = vmatprep.subr.bf16.mxu0 0
        %2397 = vmatpush2.bf16.msra.mxu0 0
        %2398 = vmatprep.subr.bf16.mxu0 0
        %2399 = vmatpush2.bf16.msra.mxu0 0
        %2400 = vmatprep.subr.bf16.mxu0 0
        %2401 = vmatpush2.bf16.msra.mxu0 0
        %2402 = vmatprep.subr.bf16.mxu0 0
        %2403 = vmatpush2.bf16.msra.mxu0 0
        %2404 = vmatprep.subr.bf16.mxu0 0
        %2405 = vmatpush2.bf16.msra.mxu0 0
        %2406 = vmatprep.subr.bf16.mxu0 0
        %2407 = vmatpush2.bf16.msra.mxu0 0
        %2408 = vmatprep.subr.bf16.mxu0 0
        %2409 = vmatpush2.bf16.msra.mxu0 0
        %2410 = vmatprep.subr.bf16.mxu0 0
        %2411 = vmatpush2.bf16.msra.mxu0 0
        %2412 = vmatprep.mubr.bf16.mxu0 0
        %2413 = vmatmul.mubr.bf16.gmra.mxu0 %v2375
        %v2414 = vpop.f32.mrf.mxu0
        %v2415 = vadd.f32 0.0, %v2414
        %v2416 = vpop.f32.mrf.mxu0
        %v2417 = vpop.f32.mrf.mxu0
        %v2418 = vpop.f32.mrf.mxu0
        %2419 = vdwg.mxu0
        %2420 = vrot.lane.b32.xlu0 %v749, 96
        %v2421 = vpop.permute.xlu0 %2420
        %v2423 = vsel %vm1146, %v2130, 0
        %v2426 = vsel %vm1246, %v2421, 0
        %2428 = vmatprep.subr.bf16.mxu0 0
        %2429 = vmatpush1.bf16.msra.mxu0 0
        %2430 = vmatprep.subr.bf16.mxu0 0
        %2431 = vmatpush1.bf16.msra.mxu0 0
        %2432 = vmatprep.subr.bf16.mxu0 0
        %2433 = vmatpush1.bf16.msra.mxu0 0
        %2434 = vmatprep.subr.bf16.mxu0 0
        %2435 = vmatpush1.bf16.msra.mxu0 0
        %2436 = vmatprep.subr.bf16.mxu0 0
        %2437 = vmatpush1.bf16.msra.mxu0 0
        %2438 = vmatprep.subr.bf16.mxu0 0
        %2439 = vmatpush1.bf16.msra.mxu0 0
        %2440 = vmatprep.subr.bf16.mxu0 0
        %2441 = vmatpush1.bf16.msra.mxu0 0
        %2442 = vmatprep.subr.bf16.mxu0 0
        %2443 = vmatpush1.bf16.msra.mxu0 %v2426
        %2444 = vmatprep.subr.bf16.mxu0 0
        %2445 = vmatpush2.bf16.msra.mxu0 0
        %2446 = vmatprep.subr.bf16.mxu0 0
        %2447 = vmatpush2.bf16.msra.mxu0 0
        %2448 = vmatprep.subr.bf16.mxu0 0
        %2449 = vmatpush2.bf16.msra.mxu0 0
        %2450 = vmatprep.subr.bf16.mxu0 0
        %2451 = vmatpush2.bf16.msra.mxu0 0
        %2452 = vmatprep.subr.bf16.mxu0 0
        %2453 = vmatpush2.bf16.msra.mxu0 0
        %2454 = vmatprep.subr.bf16.mxu0 0
        %2455 = vmatpush2.bf16.msra.mxu0 0
        %2456 = vmatprep.subr.bf16.mxu0 0
        %2457 = vmatpush2.bf16.msra.mxu0 0
        %2458 = vmatprep.subr.bf16.mxu0 0
        %2459 = vmatpush2.bf16.msra.mxu0 0
        %2460 = vmatprep.mubr.bf16.mxu0 0
        %2461 = vmatmul.mubr.bf16.gmra.mxu0 %v2423
        %v2462 = vpop.f32.mrf.mxu0
        %v2463 = vadd.f32 0.0, %v2462
        %v2464 = vpop.f32.mrf.mxu0
        %v2465 = vpop.f32.mrf.mxu0
        %v2466 = vpop.f32.mrf.mxu0
        %2467 = vdwg.mxu0
        %2468 = vrot.lane.b32.xlu0 %v751, 96
        %v2469 = vpop.permute.xlu0 %2468
        %v2471 = vsel %vm1146, %v2131, 0
        %v2474 = vsel %vm1246, %v2469, 0
        %2476 = vmatprep.subr.bf16.mxu0 0
        %2477 = vmatpush1.bf16.msra.mxu0 0
        %2478 = vmatprep.subr.bf16.mxu0 0
        %2479 = vmatpush1.bf16.msra.mxu0 0
        %2480 = vmatprep.subr.bf16.mxu0 0
        %2481 = vmatpush1.bf16.msra.mxu0 0
        %2482 = vmatprep.subr.bf16.mxu0 0
        %2483 = vmatpush1.bf16.msra.mxu0 0
        %2484 = vmatprep.subr.bf16.mxu0 0
        %2485 = vmatpush1.bf16.msra.mxu0 0
        %2486 = vmatprep.subr.bf16.mxu0 0
        %2487 = vmatpush1.bf16.msra.mxu0 0
        %2488 = vmatprep.subr.bf16.mxu0 0
        %2489 = vmatpush1.bf16.msra.mxu0 0
        %2490 = vmatprep.subr.bf16.mxu0 0
        %2491 = vmatpush1.bf16.msra.mxu0 %v2474
        %2492 = vmatprep.subr.bf16.mxu0 0
        %2493 = vmatpush2.bf16.msra.mxu0 0
        %2494 = vmatprep.subr.bf16.mxu0 0
        %2495 = vmatpush2.bf16.msra.mxu0 0
        %2496 = vmatprep.subr.bf16.mxu0 0
        %2497 = vmatpush2.bf16.msra.mxu0 0
        %2498 = vmatprep.subr.bf16.mxu0 0
        %2499 = vmatpush2.bf16.msra.mxu0 0
        %2500 = vmatprep.subr.bf16.mxu0 0
        %2501 = vmatpush2.bf16.msra.mxu0 0
        %2502 = vmatprep.subr.bf16.mxu0 0
        %2503 = vmatpush2.bf16.msra.mxu0 0
        %2504 = vmatprep.subr.bf16.mxu0 0
        %2505 = vmatpush2.bf16.msra.mxu0 0
        %2506 = vmatprep.subr.bf16.mxu0 0
        %2507 = vmatpush2.bf16.msra.mxu0 0
        %2508 = vmatprep.mubr.bf16.mxu0 0
        %2509 = vmatmul.mubr.bf16.gmra.mxu0 %v2471
        %v2510 = vpop.f32.mrf.mxu0
        %v2511 = vadd.f32 0.0, %v2510
        %v2512 = vpop.f32.mrf.mxu0
        %v2513 = vpop.f32.mrf.mxu0
        %v2514 = vpop.f32.mrf.mxu0
        %2515 = vdwg.mxu0
        %v2516 = vpack.c.bf16 %v2175, %v2175
        %v2517 = vpack.c.bf16 %v2223, %v2223
        %v2518 = vpack.c.bf16 %v2271, %v2271
        %v2519 = vpack.c.bf16 %v2319, %v2319
        %v2520 = vpack.c.bf16 %v2367, %v2367
        %v2521 = vpack.c.bf16 %v2415, %v2415
        %v2522 = vpack.c.bf16 %v2463, %v2463
        %v2523 = vpack.c.bf16 %v2511, %v2511
        %v2532 = vunpack.c.l.b16 %v2516
        %v2533 = vunpack.c.l.b16 %v2517
        %v2534 = vunpack.c.l.b16 %v2518
        %v2535 = vunpack.c.l.b16 %v2519
        %v2536 = vunpack.c.l.b16 %v2520
        %v2537 = vunpack.c.l.b16 %v2521
        %v2538 = vunpack.c.l.b16 %v2522
        %v2539 = vunpack.c.l.b16 %v2523
        %v2540 = vpack.c.b16 %v2533, %v2532
        %v2541 = vpack.c.b16 %v2535, %v2534
        %v2542 = vpack.c.b16 %v2537, %v2536
        %v2543 = vpack.c.b16 %v2539, %v2538
        %v2548 = vunpack.c.l.b16 %v757
        %v2549 = vunpack.c.l.b16 %v758
        %v2550 = vunpack.c.l.b16 %v759
        %v2551 = vunpack.c.l.b16 %v760
        %v2552 = vpack.c.b16 %v2549, %v2548
        %v2553 = vpack.c.b16 %v2551, %v2550
        %v2557 = vsel %vm770, %v2540, 0
        %v2560 = vsel %vm770, %v2541, 0
        %v2563 = vsel %vm770, %v2542, 0
        %v2566 = vsel %vm770, %v2543, 0
        %2568 = vmatprep.subr.bf16.mxu0 0
        %2569 = vmatpush1.bf16.msra.mxu0 0
        %2570 = vmatprep.subr.bf16.mxu0 0
        %2571 = vmatpush1.bf16.msra.mxu0 0
        %2572 = vmatprep.subr.bf16.mxu0 0
        %2573 = vmatpush1.bf16.msra.mxu0 0
        %2574 = vmatprep.subr.bf16.mxu0 0
        %2575 = vmatpush1.bf16.msra.mxu0 0
        %2576 = vmatprep.subr.bf16.mxu0 0
        %2577 = vmatpush1.bf16.msra.mxu0 0
        %2578 = vmatprep.subr.bf16.mxu0 0
        %2579 = vmatpush1.bf16.msra.mxu0 0
        %2580 = vmatprep.subr.bf16.mxu0 0
        %2581 = vmatpush1.bf16.msra.mxu0 %v2553
        %2582 = vmatprep.subr.bf16.mxu0 0
        %2583 = vmatpush1.bf16.msra.mxu0 %v2552
        %2584 = vmatprep.subr.bf16.mxu0 0
        %2585 = vmatpush2.bf16.msra.mxu0 0
        %2586 = vmatprep.subr.bf16.mxu0 0
        %2587 = vmatpush2.bf16.msra.mxu0 0
        %2588 = vmatprep.subr.bf16.mxu0 0
        %2589 = vmatpush2.bf16.msra.mxu0 0
        %2590 = vmatprep.subr.bf16.mxu0 0
        %2591 = vmatpush2.bf16.msra.mxu0 0
        %2592 = vmatprep.subr.bf16.mxu0 0
        %2593 = vmatpush2.bf16.msra.mxu0 0
        %2594 = vmatprep.subr.bf16.mxu0 0
        %2595 = vmatpush2.bf16.msra.mxu0 0
        %2596 = vmatprep.subr.bf16.mxu0 0
        %2597 = vmatpush2.bf16.msra.mxu0 0
        %2598 = vmatprep.subr.bf16.mxu0 0
        %2599 = vmatpush2.bf16.msra.mxu0 0
        %2600 = vmatprep.mubr.bf16.mxu0 0
        %2601 = vmatmul.mubr.bf16.gmra.mxu0 %v2557
        %v2602 = vpop.f32.mrf.mxu0
        %v2603 = vadd.f32 0.0, %v2602
        %v2604 = vpop.f32.mrf.mxu0
        %v2605 = vpop.f32.mrf.mxu0
        %v2606 = vadd.f32 0.0, %v2605
        %v2607 = vpop.f32.mrf.mxu0
        %2608 = vmatprep.mubr.bf16.mxu0 0
        %2609 = vmatmul.mubr.bf16.gmra.mxu0 %v2560
        %v2610 = vpop.f32.mrf.mxu0
        %v2611 = vadd.f32 0.0, %v2610
        %v2612 = vpop.f32.mrf.mxu0
        %v2613 = vpop.f32.mrf.mxu0
        %v2614 = vadd.f32 0.0, %v2613
        %v2615 = vpop.f32.mrf.mxu0
        %2616 = vmatprep.mubr.bf16.mxu0 0
        %2617 = vmatmul.mubr.bf16.gmra.mxu0 %v2563
        %v2618 = vpop.f32.mrf.mxu0
        %v2619 = vadd.f32 0.0, %v2618
        %v2620 = vpop.f32.mrf.mxu0
        %v2621 = vpop.f32.mrf.mxu0
        %v2622 = vadd.f32 0.0, %v2621
        %v2623 = vpop.f32.mrf.mxu0
        %2624 = vmatprep.mubr.bf16.mxu0 0
        %2625 = vmatmul.mubr.bf16.gmra.mxu0 %v2566
        %v2626 = vpop.f32.mrf.mxu0
        %v2627 = vadd.f32 0.0, %v2626
        %v2628 = vpop.f32.mrf.mxu0
        %v2629 = vpop.f32.mrf.mxu0
        %v2630 = vadd.f32 0.0, %v2629
        %v2631 = vpop.f32.mrf.mxu0
        %2632 = vdwg.mxu0
        %v2641 = vunpack.c.l.b16 %v1612
        %v2642 = vunpack.c.l.b16 %v1613
        %v2643 = vunpack.c.l.b16 %v1614
        %v2644 = vunpack.c.l.b16 %v1615
        %v2645 = vunpack.c.l.b16 %v1616
        %v2646 = vunpack.c.l.b16 %v1617
        %v2647 = vunpack.c.l.b16 %v1618
        %v2648 = vunpack.c.l.b16 %v1619
        %v2649 = vpack.c.b16 %v2642, %v2641
        %v2650 = vpack.c.b16 %v2644, %v2643
        %v2651 = vpack.c.b16 %v2646, %v2645
        %v2652 = vpack.c.b16 %v2648, %v2647
        %v2657 = vunpack.c.l.b16 %v753
        %v2658 = vunpack.c.l.b16 %v754
        %v2659 = vunpack.c.l.b16 %v755
        %v2660 = vunpack.c.l.b16 %v756
        %v2661 = vpack.c.b16 %v2658, %v2657
        %v2662 = vpack.c.b16 %v2660, %v2659
        %v2666 = vsel %vm770, %v2649, 0
        %v2669 = vsel %vm770, %v2650, 0
        %v2672 = vsel %vm770, %v2651, 0
        %v2675 = vsel %vm770, %v2652, 0
        %2677 = vmatprep.subr.bf16.mxu0 0
        %2678 = vmatpush1.bf16.msra.mxu0 0
        %2679 = vmatprep.subr.bf16.mxu0 0
        %2680 = vmatpush1.bf16.msra.mxu0 0
        %2681 = vmatprep.subr.bf16.mxu0 0
        %2682 = vmatpush1.bf16.msra.mxu0 0
        %2683 = vmatprep.subr.bf16.mxu0 0
        %2684 = vmatpush1.bf16.msra.mxu0 0
        %2685 = vmatprep.subr.bf16.mxu0 0
        %2686 = vmatpush1.bf16.msra.mxu0 0
        %2687 = vmatprep.subr.bf16.mxu0 0
        %2688 = vmatpush1.bf16.msra.mxu0 0
        %2689 = vmatprep.subr.bf16.mxu0 0
        %2690 = vmatpush1.bf16.msra.mxu0 %v2662
        %2691 = vmatprep.subr.bf16.mxu0 0
        %2692 = vmatpush1.bf16.msra.mxu0 %v2661
        %2693 = vmatprep.subr.bf16.mxu0 0
        %2694 = vmatpush2.bf16.msra.mxu0 0
        %2695 = vmatprep.subr.bf16.mxu0 0
        %2696 = vmatpush2.bf16.msra.mxu0 0
        %2697 = vmatprep.subr.bf16.mxu0 0
        %2698 = vmatpush2.bf16.msra.mxu0 0
        %2699 = vmatprep.subr.bf16.mxu0 0
        %2700 = vmatpush2.bf16.msra.mxu0 0
        %2701 = vmatprep.subr.bf16.mxu0 0
        %2702 = vmatpush2.bf16.msra.mxu0 0
        %2703 = vmatprep.subr.bf16.mxu0 0
        %2704 = vmatpush2.bf16.msra.mxu0 0
        %2705 = vmatprep.subr.bf16.mxu0 0
        %2706 = vmatpush2.bf16.msra.mxu0 0
        %2707 = vmatprep.subr.bf16.mxu0 0
        %2708 = vmatpush2.bf16.msra.mxu0 0
        %2709 = vmatprep.mubr.bf16.mxu0 0
        %2710 = vmatmul.mubr.bf16.gmra.mxu0 %v2666
        %v2711 = vpop.f32.mrf.mxu0
        %v2712 = vadd.f32 %v2603, %v2711
        %v2713 = vpop.f32.mrf.mxu0
        %v2714 = vpop.f32.mrf.mxu0
        %v2715 = vadd.f32 %v2606, %v2714
        %v2716 = vpop.f32.mrf.mxu0
        %2717 = vmatprep.mubr.bf16.mxu0 0
        %2718 = vmatmul.mubr.bf16.gmra.mxu0 %v2669
        %v2719 = vpop.f32.mrf.mxu0
        %v2720 = vadd.f32 %v2611, %v2719
        %v2721 = vpop.f32.mrf.mxu0
        %v2722 = vpop.f32.mrf.mxu0
        %v2723 = vadd.f32 %v2614, %v2722
        %v2724 = vpop.f32.mrf.mxu0
        %2725 = vmatprep.mubr.bf16.mxu0 0
        %2726 = vmatmul.mubr.bf16.gmra.mxu0 %v2672
        %v2727 = vpop.f32.mrf.mxu0
        %v2728 = vadd.f32 %v2619, %v2727
        %v2729 = vpop.f32.mrf.mxu0
        %v2730 = vpop.f32.mrf.mxu0
        %v2731 = vadd.f32 %v2622, %v2730
        %v2732 = vpop.f32.mrf.mxu0
        %2733 = vmatprep.mubr.bf16.mxu0 0
        %2734 = vmatmul.mubr.bf16.gmra.mxu0 %v2675
        %v2735 = vpop.f32.mrf.mxu0
        %v2736 = vadd.f32 %v2627, %v2735
        %v2737 = vpop.f32.mrf.mxu0
        %v2738 = vpop.f32.mrf.mxu0
        %v2739 = vadd.f32 %v2630, %v2738
        %v2740 = vpop.f32.mrf.mxu0
        %2741 = vdwg.mxu0
        %2742 = vrot.lane.b32.xlu0 %v736, 64
        %v2743 = vpop.permute.xlu0 %2742
        %v2744 = vrot.slane %v2743, 4
        %2745 = vrot.lane.b32.xlu0 %v1623, 64
        %v2746 = vpop.permute.xlu0 %2745
        %v2748 = vsel %vm770, %v2746, 0
        %v2751 = vsel %vm770, %v2744, 0
        %2753 = vmatprep.subr.bf16.mxu0 0
        %2754 = vmatpush1.bf16.xpose.msra.mxu0 0
        %2755 = vmatprep.subr.bf16.mxu0 0
        %2756 = vmatpush1.bf16.xpose.msra.mxu0 0
        %2757 = vmatprep.subr.bf16.mxu0 0
        %2758 = vmatpush1.bf16.xpose.msra.mxu0 0
        %2759 = vmatprep.subr.bf16.mxu0 0
        %2760 = vmatpush1.bf16.xpose.msra.mxu0 0
        %2761 = vmatprep.subr.bf16.mxu0 0
        %2762 = vmatpush1.bf16.xpose.msra.mxu0 0
        %2763 = vmatprep.subr.bf16.mxu0 0
        %2764 = vmatpush1.bf16.xpose.msra.mxu0 0
        %2765 = vmatprep.subr.bf16.mxu0 0
        %2766 = vmatpush1.bf16.xpose.msra.mxu0 0
        %2767 = vmatprep.subr.bf16.mxu0 0
        %2768 = vmatpush1.bf16.xpose.msra.mxu0 %v2751
        %2769 = vmatprep.subr.bf16.mxu0 0
        %2770 = vmatpush2.bf16.xpose.msra.mxu0 0
        %2771 = vmatprep.subr.bf16.mxu0 0
        %2772 = vmatpush2.bf16.xpose.msra.mxu0 0
        %2773 = vmatprep.subr.bf16.mxu0 0
        %2774 = vmatpush2.bf16.xpose.msra.mxu0 0
        %2775 = vmatprep.subr.bf16.mxu0 0
        %2776 = vmatpush2.bf16.xpose.msra.mxu0 0
        %2777 = vmatprep.subr.bf16.mxu0 0
        %2778 = vmatpush2.bf16.xpose.msra.mxu0 0
        %2779 = vmatprep.subr.bf16.mxu0 0
        %2780 = vmatpush2.bf16.xpose.msra.mxu0 0
        %2781 = vmatprep.subr.bf16.mxu0 0
        %2782 = vmatpush2.bf16.xpose.msra.mxu0 0
        %2783 = vmatprep.subr.bf16.mxu0 0
        %2784 = vmatpush2.bf16.xpose.msra.mxu0 0
        %2785 = vmatprep.mubr.bf16.mxu0 0
        %2786 = vmatmul.mubr.bf16.gmra.mxu0 %v2748
        %v2787 = vpop.f32.mrf.mxu0
        %v2788 = vadd.f32 %v752, %v2787
        %v2789 = vpop.f32.mrf.mxu0
        %v2790 = vpop.f32.mrf.mxu0
        %v2791 = vpop.f32.mrf.mxu0
        %2792 = vdwg.mxu0
        %2793 = vrot.lane.b32.xlu0 %v738, 64
        %v2794 = vpop.permute.xlu0 %2793
        %v2795 = vrot.slane %v2794, 4
        %2796 = vrot.lane.b32.xlu0 %v1675, 64
        %v2797 = vpop.permute.xlu0 %2796
        %v2799 = vsel %vm770, %v2797, 0
        %v2802 = vsel %vm770, %v2795, 0
        %2804 = vmatprep.subr.bf16.mxu0 0
        %2805 = vmatpush1.bf16.xpose.msra.mxu0 0
        %2806 = vmatprep.subr.bf16.mxu0 0
        %2807 = vmatpush1.bf16.xpose.msra.mxu0 0
        %2808 = vmatprep.subr.bf16.mxu0 0
        %2809 = vmatpush1.bf16.xpose.msra.mxu0 0
        %2810 = vmatprep.subr.bf16.mxu0 0
        %2811 = vmatpush1.bf16.xpose.msra.mxu0 0
        %2812 = vmatprep.subr.bf16.mxu0 0
        %2813 = vmatpush1.bf16.xpose.msra.mxu0 0
        %2814 = vmatprep.subr.bf16.mxu0 0
        %2815 = vmatpush1.bf16.xpose.msra.mxu0 0
        %2816 = vmatprep.subr.bf16.mxu0 0
        %2817 = vmatpush1.bf16.xpose.msra.mxu0 0
        %2818 = vmatprep.subr.bf16.mxu0 0
        %2819 = vmatpush1.bf16.xpose.msra.mxu0 %v2802
        %2820 = vmatprep.subr.bf16.mxu0 0
        %2821 = vmatpush2.bf16.xpose.msra.mxu0 0
        %2822 = vmatprep.subr.bf16.mxu0 0
        %2823 = vmatpush2.bf16.xpose.msra.mxu0 0
        %2824 = vmatprep.subr.bf16.mxu0 0
        %2825 = vmatpush2.bf16.xpose.msra.mxu0 0
        %2826 = vmatprep.subr.bf16.mxu0 0
        %2827 = vmatpush2.bf16.xpose.msra.mxu0 0
        %2828 = vmatprep.subr.bf16.mxu0 0
        %2829 = vmatpush2.bf16.xpose.msra.mxu0 0
        %2830 = vmatprep.subr.bf16.mxu0 0
        %2831 = vmatpush2.bf16.xpose.msra.mxu0 0
        %2832 = vmatprep.subr.bf16.mxu0 0
        %2833 = vmatpush2.bf16.xpose.msra.mxu0 0
        %2834 = vmatprep.subr.bf16.mxu0 0
        %2835 = vmatpush2.bf16.xpose.msra.mxu0 0
        %2836 = vmatprep.mubr.bf16.mxu0 0
        %2837 = vmatmul.mubr.bf16.gmra.mxu0 %v2799
        %v2838 = vpop.f32.mrf.mxu0
        %v2839 = vadd.f32 %v752, %v2838
        %v2840 = vpop.f32.mrf.mxu0
        %v2841 = vpop.f32.mrf.mxu0
        %v2842 = vpop.f32.mrf.mxu0
        %2843 = vdwg.mxu0
        %2844 = vrot.lane.b32.xlu0 %v740, 64
        %v2845 = vpop.permute.xlu0 %2844
        %v2846 = vrot.slane %v2845, 4
        %2847 = vrot.lane.b32.xlu0 %v1727, 64
        %v2848 = vpop.permute.xlu0 %2847
        %v2850 = vsel %vm770, %v2848, 0
        %v2853 = vsel %vm770, %v2846, 0
        %2855 = vmatprep.subr.bf16.mxu0 0
        %2856 = vmatpush1.bf16.xpose.msra.mxu0 0
        %2857 = vmatprep.subr.bf16.mxu0 0
        %2858 = vmatpush1.bf16.xpose.msra.mxu0 0
        %2859 = vmatprep.subr.bf16.mxu0 0
        %2860 = vmatpush1.bf16.xpose.msra.mxu0 0
        %2861 = vmatprep.subr.bf16.mxu0 0
        %2862 = vmatpush1.bf16.xpose.msra.mxu0 0
        %2863 = vmatprep.subr.bf16.mxu0 0
        %2864 = vmatpush1.bf16.xpose.msra.mxu0 0
        %2865 = vmatprep.subr.bf16.mxu0 0
        %2866 = vmatpush1.bf16.xpose.msra.mxu0 0
        %2867 = vmatprep.subr.bf16.mxu0 0
        %2868 = vmatpush1.bf16.xpose.msra.mxu0 0
        %2869 = vmatprep.subr.bf16.mxu0 0
        %2870 = vmatpush1.bf16.xpose.msra.mxu0 %v2853
        %2871 = vmatprep.subr.bf16.mxu0 0
        %2872 = vmatpush2.bf16.xpose.msra.mxu0 0
        %2873 = vmatprep.subr.bf16.mxu0 0
        %2874 = vmatpush2.bf16.xpose.msra.mxu0 0
        %2875 = vmatprep.subr.bf16.mxu0 0
        %2876 = vmatpush2.bf16.xpose.msra.mxu0 0
        %2877 = vmatprep.subr.bf16.mxu0 0
        %2878 = vmatpush2.bf16.xpose.msra.mxu0 0
        %2879 = vmatprep.subr.bf16.mxu0 0
        %2880 = vmatpush2.bf16.xpose.msra.mxu0 0
        %2881 = vmatprep.subr.bf16.mxu0 0
        %2882 = vmatpush2.bf16.xpose.msra.mxu0 0
        %2883 = vmatprep.subr.bf16.mxu0 0
        %2884 = vmatpush2.bf16.xpose.msra.mxu0 0
        %2885 = vmatprep.subr.bf16.mxu0 0
        %2886 = vmatpush2.bf16.xpose.msra.mxu0 0
        %2887 = vmatprep.mubr.bf16.mxu0 0
        %2888 = vmatmul.mubr.bf16.gmra.mxu0 %v2850
        %v2889 = vpop.f32.mrf.mxu0
        %v2890 = vadd.f32 %v752, %v2889
        %v2891 = vpop.f32.mrf.mxu0
        %v2892 = vpop.f32.mrf.mxu0
        %v2893 = vpop.f32.mrf.mxu0
        %2894 = vdwg.mxu0
        %2895 = vrot.lane.b32.xlu0 %v742, 64
        %v2896 = vpop.permute.xlu0 %2895
        %v2897 = vrot.slane %v2896, 4
        %2898 = vrot.lane.b32.xlu0 %v1779, 64
        %v2899 = vpop.permute.xlu0 %2898
        %v2901 = vsel %vm770, %v2899, 0
        %v2904 = vsel %vm770, %v2897, 0
        %2906 = vmatprep.subr.bf16.mxu0 0
        %2907 = vmatpush1.bf16.xpose.msra.mxu0 0
        %2908 = vmatprep.subr.bf16.mxu0 0
        %2909 = vmatpush1.bf16.xpose.msra.mxu0 0
        %2910 = vmatprep.subr.bf16.mxu0 0
        %2911 = vmatpush1.bf16.xpose.msra.mxu0 0
        %2912 = vmatprep.subr.bf16.mxu0 0
        %2913 = vmatpush1.bf16.xpose.msra.mxu0 0
        %2914 = vmatprep.subr.bf16.mxu0 0
        %2915 = vmatpush1.bf16.xpose.msra.mxu0 0
        %2916 = vmatprep.subr.bf16.mxu0 0
        %2917 = vmatpush1.bf16.xpose.msra.mxu0 0
        %2918 = vmatprep.subr.bf16.mxu0 0
        %2919 = vmatpush1.bf16.xpose.msra.mxu0 0
        %2920 = vmatprep.subr.bf16.mxu0 0
        %2921 = vmatpush1.bf16.xpose.msra.mxu0 %v2904
        %2922 = vmatprep.subr.bf16.mxu0 0
        %2923 = vmatpush2.bf16.xpose.msra.mxu0 0
        %2924 = vmatprep.subr.bf16.mxu0 0
        %2925 = vmatpush2.bf16.xpose.msra.mxu0 0
        %2926 = vmatprep.subr.bf16.mxu0 0
        %2927 = vmatpush2.bf16.xpose.msra.mxu0 0
        %2928 = vmatprep.subr.bf16.mxu0 0
        %2929 = vmatpush2.bf16.xpose.msra.mxu0 0
        %2930 = vmatprep.subr.bf16.mxu0 0
        %2931 = vmatpush2.bf16.xpose.msra.mxu0 0
        %2932 = vmatprep.subr.bf16.mxu0 0
        %2933 = vmatpush2.bf16.xpose.msra.mxu0 0
        %2934 = vmatprep.subr.bf16.mxu0 0
        %2935 = vmatpush2.bf16.xpose.msra.mxu0 0
        %2936 = vmatprep.subr.bf16.mxu0 0
        %2937 = vmatpush2.bf16.xpose.msra.mxu0 0
        %2938 = vmatprep.mubr.bf16.mxu0 0
        %2939 = vmatmul.mubr.bf16.gmra.mxu0 %v2901
        %v2940 = vpop.f32.mrf.mxu0
        %v2941 = vadd.f32 %v752, %v2940
        %v2942 = vpop.f32.mrf.mxu0
        %v2943 = vpop.f32.mrf.mxu0
        %v2944 = vpop.f32.mrf.mxu0
        %2945 = vdwg.mxu0
        %2946 = vrot.lane.b32.xlu0 %v744, 64
        %v2947 = vpop.permute.xlu0 %2946
        %v2948 = vrot.slane %v2947, 4
        %2949 = vrot.lane.b32.xlu0 %v1831, 64
        %v2950 = vpop.permute.xlu0 %2949
        %v2952 = vsel %vm770, %v2950, 0
        %v2955 = vsel %vm770, %v2948, 0
        %2957 = vmatprep.subr.bf16.mxu0 0
        %2958 = vmatpush1.bf16.xpose.msra.mxu0 0
        %2959 = vmatprep.subr.bf16.mxu0 0
        %2960 = vmatpush1.bf16.xpose.msra.mxu0 0
        %2961 = vmatprep.subr.bf16.mxu0 0
        %2962 = vmatpush1.bf16.xpose.msra.mxu0 0
        %2963 = vmatprep.subr.bf16.mxu0 0
        %2964 = vmatpush1.bf16.xpose.msra.mxu0 0
        %2965 = vmatprep.subr.bf16.mxu0 0
        %2966 = vmatpush1.bf16.xpose.msra.mxu0 0
        %2967 = vmatprep.subr.bf16.mxu0 0
        %2968 = vmatpush1.bf16.xpose.msra.mxu0 0
        %2969 = vmatprep.subr.bf16.mxu0 0
        %2970 = vmatpush1.bf16.xpose.msra.mxu0 0
        %2971 = vmatprep.subr.bf16.mxu0 0
        %2972 = vmatpush1.bf16.xpose.msra.mxu0 %v2955
        %2973 = vmatprep.subr.bf16.mxu0 0
        %2974 = vmatpush2.bf16.xpose.msra.mxu0 0
        %2975 = vmatprep.subr.bf16.mxu0 0
        %2976 = vmatpush2.bf16.xpose.msra.mxu0 0
        %2977 = vmatprep.subr.bf16.mxu0 0
        %2978 = vmatpush2.bf16.xpose.msra.mxu0 0
        %2979 = vmatprep.subr.bf16.mxu0 0
        %2980 = vmatpush2.bf16.xpose.msra.mxu0 0
        %2981 = vmatprep.subr.bf16.mxu0 0
        %2982 = vmatpush2.bf16.xpose.msra.mxu0 0
        %2983 = vmatprep.subr.bf16.mxu0 0
        %2984 = vmatpush2.bf16.xpose.msra.mxu0 0
        %2985 = vmatprep.subr.bf16.mxu0 0
        %2986 = vmatpush2.bf16.xpose.msra.mxu0 0
        %2987 = vmatprep.subr.bf16.mxu0 0
        %2988 = vmatpush2.bf16.xpose.msra.mxu0 0
        %2989 = vmatprep.mubr.bf16.mxu0 0
        %2990 = vmatmul.mubr.bf16.gmra.mxu0 %v2952
        %v2991 = vpop.f32.mrf.mxu0
        %v2992 = vadd.f32 %v752, %v2991
        %v2993 = vpop.f32.mrf.mxu0
        %v2994 = vpop.f32.mrf.mxu0
        %v2995 = vpop.f32.mrf.mxu0
        %2996 = vdwg.mxu0
        %2997 = vrot.lane.b32.xlu0 %v746, 64
        %v2998 = vpop.permute.xlu0 %2997
        %v2999 = vrot.slane %v2998, 4
        %3000 = vrot.lane.b32.xlu0 %v1883, 64
        %v3001 = vpop.permute.xlu0 %3000
        %v3003 = vsel %vm770, %v3001, 0
        %v3006 = vsel %vm770, %v2999, 0
        %3008 = vmatprep.subr.bf16.mxu0 0
        %3009 = vmatpush1.bf16.xpose.msra.mxu0 0
        %3010 = vmatprep.subr.bf16.mxu0 0
        %3011 = vmatpush1.bf16.xpose.msra.mxu0 0
        %3012 = vmatprep.subr.bf16.mxu0 0
        %3013 = vmatpush1.bf16.xpose.msra.mxu0 0
        %3014 = vmatprep.subr.bf16.mxu0 0
        %3015 = vmatpush1.bf16.xpose.msra.mxu0 0
        %3016 = vmatprep.subr.bf16.mxu0 0
        %3017 = vmatpush1.bf16.xpose.msra.mxu0 0
        %3018 = vmatprep.subr.bf16.mxu0 0
        %3019 = vmatpush1.bf16.xpose.msra.mxu0 0
        %3020 = vmatprep.subr.bf16.mxu0 0
        %3021 = vmatpush1.bf16.xpose.msra.mxu0 0
        %3022 = vmatprep.subr.bf16.mxu0 0
        %3023 = vmatpush1.bf16.xpose.msra.mxu0 %v3006
        %3024 = vmatprep.subr.bf16.mxu0 0
        %3025 = vmatpush2.bf16.xpose.msra.mxu0 0
        %3026 = vmatprep.subr.bf16.mxu0 0
        %3027 = vmatpush2.bf16.xpose.msra.mxu0 0
        %3028 = vmatprep.subr.bf16.mxu0 0
        %3029 = vmatpush2.bf16.xpose.msra.mxu0 0
        %3030 = vmatprep.subr.bf16.mxu0 0
        %3031 = vmatpush2.bf16.xpose.msra.mxu0 0
        %3032 = vmatprep.subr.bf16.mxu0 0
        %3033 = vmatpush2.bf16.xpose.msra.mxu0 0
        %3034 = vmatprep.subr.bf16.mxu0 0
        %3035 = vmatpush2.bf16.xpose.msra.mxu0 0
        %3036 = vmatprep.subr.bf16.mxu0 0
        %3037 = vmatpush2.bf16.xpose.msra.mxu0 0
        %3038 = vmatprep.subr.bf16.mxu0 0
        %3039 = vmatpush2.bf16.xpose.msra.mxu0 0
        %3040 = vmatprep.mubr.bf16.mxu0 0
        %3041 = vmatmul.mubr.bf16.gmra.mxu0 %v3003
        %v3042 = vpop.f32.mrf.mxu0
        %v3043 = vadd.f32 %v752, %v3042
        %v3044 = vpop.f32.mrf.mxu0
        %v3045 = vpop.f32.mrf.mxu0
        %v3046 = vpop.f32.mrf.mxu0
        %3047 = vdwg.mxu0
        %3048 = vrot.lane.b32.xlu0 %v748, 64
        %v3049 = vpop.permute.xlu0 %3048
        %v3050 = vrot.slane %v3049, 4
        %3051 = vrot.lane.b32.xlu0 %v1935, 64
        %v3052 = vpop.permute.xlu0 %3051
        %v3054 = vsel %vm770, %v3052, 0
        %v3057 = vsel %vm770, %v3050, 0
        %3059 = vmatprep.subr.bf16.mxu0 0
        %3060 = vmatpush1.bf16.xpose.msra.mxu0 0
        %3061 = vmatprep.subr.bf16.mxu0 0
        %3062 = vmatpush1.bf16.xpose.msra.mxu0 0
        %3063 = vmatprep.subr.bf16.mxu0 0
        %3064 = vmatpush1.bf16.xpose.msra.mxu0 0
        %3065 = vmatprep.subr.bf16.mxu0 0
        %3066 = vmatpush1.bf16.xpose.msra.mxu0 0
        %3067 = vmatprep.subr.bf16.mxu0 0
        %3068 = vmatpush1.bf16.xpose.msra.mxu0 0
        %3069 = vmatprep.subr.bf16.mxu0 0
        %3070 = vmatpush1.bf16.xpose.msra.mxu0 0
        %3071 = vmatprep.subr.bf16.mxu0 0
        %3072 = vmatpush1.bf16.xpose.msra.mxu0 0
        %3073 = vmatprep.subr.bf16.mxu0 0
        %3074 = vmatpush1.bf16.xpose.msra.mxu0 %v3057
        %3075 = vmatprep.subr.bf16.mxu0 0
        %3076 = vmatpush2.bf16.xpose.msra.mxu0 0
        %3077 = vmatprep.subr.bf16.mxu0 0
        %3078 = vmatpush2.bf16.xpose.msra.mxu0 0
        %3079 = vmatprep.subr.bf16.mxu0 0
        %3080 = vmatpush2.bf16.xpose.msra.mxu0 0
        %3081 = vmatprep.subr.bf16.mxu0 0
        %3082 = vmatpush2.bf16.xpose.msra.mxu0 0
        %3083 = vmatprep.subr.bf16.mxu0 0
        %3084 = vmatpush2.bf16.xpose.msra.mxu0 0
        %3085 = vmatprep.subr.bf16.mxu0 0
        %3086 = vmatpush2.bf16.xpose.msra.mxu0 0
        %3087 = vmatprep.subr.bf16.mxu0 0
        %3088 = vmatpush2.bf16.xpose.msra.mxu0 0
        %3089 = vmatprep.subr.bf16.mxu0 0
        %3090 = vmatpush2.bf16.xpose.msra.mxu0 0
        %3091 = vmatprep.mubr.bf16.mxu0 0
        %3092 = vmatmul.mubr.bf16.gmra.mxu0 %v3054
        %v3093 = vpop.f32.mrf.mxu0
        %v3094 = vadd.f32 %v752, %v3093
        %v3095 = vpop.f32.mrf.mxu0
        %v3096 = vpop.f32.mrf.mxu0
        %v3097 = vpop.f32.mrf.mxu0
        %3098 = vdwg.mxu0
        %3099 = vrot.lane.b32.xlu0 %v750, 64
        %v3100 = vpop.permute.xlu0 %3099
        %v3101 = vrot.slane %v3100, 4
        %3102 = vrot.lane.b32.xlu0 %v1987, 64
        %v3103 = vpop.permute.xlu0 %3102
        %v3105 = vsel %vm770, %v3103, 0
        %v3108 = vsel %vm770, %v3101, 0
        %3110 = vmatprep.subr.bf16.mxu0 0
        %3111 = vmatpush1.bf16.xpose.msra.mxu0 0
        %3112 = vmatprep.subr.bf16.mxu0 0
        %3113 = vmatpush1.bf16.xpose.msra.mxu0 0
        %3114 = vmatprep.subr.bf16.mxu0 0
        %3115 = vmatpush1.bf16.xpose.msra.mxu0 0
        %3116 = vmatprep.subr.bf16.mxu0 0
        %3117 = vmatpush1.bf16.xpose.msra.mxu0 0
        %3118 = vmatprep.subr.bf16.mxu0 0
        %3119 = vmatpush1.bf16.xpose.msra.mxu0 0
        %3120 = vmatprep.subr.bf16.mxu0 0
        %3121 = vmatpush1.bf16.xpose.msra.mxu0 0
        %3122 = vmatprep.subr.bf16.mxu0 0
        %3123 = vmatpush1.bf16.xpose.msra.mxu0 0
        %3124 = vmatprep.subr.bf16.mxu0 0
        %3125 = vmatpush1.bf16.xpose.msra.mxu0 %v3108
        %3126 = vmatprep.subr.bf16.mxu0 0
        %3127 = vmatpush2.bf16.xpose.msra.mxu0 0
        %3128 = vmatprep.subr.bf16.mxu0 0
        %3129 = vmatpush2.bf16.xpose.msra.mxu0 0
        %3130 = vmatprep.subr.bf16.mxu0 0
        %3131 = vmatpush2.bf16.xpose.msra.mxu0 0
        %3132 = vmatprep.subr.bf16.mxu0 0
        %3133 = vmatpush2.bf16.xpose.msra.mxu0 0
        %3134 = vmatprep.subr.bf16.mxu0 0
        %3135 = vmatpush2.bf16.xpose.msra.mxu0 0
        %3136 = vmatprep.subr.bf16.mxu0 0
        %3137 = vmatpush2.bf16.xpose.msra.mxu0 0
        %3138 = vmatprep.subr.bf16.mxu0 0
        %3139 = vmatpush2.bf16.xpose.msra.mxu0 0
        %3140 = vmatprep.subr.bf16.mxu0 0
        %3141 = vmatpush2.bf16.xpose.msra.mxu0 0
        %3142 = vmatprep.mubr.bf16.mxu0 0
        %3143 = vmatmul.mubr.bf16.gmra.mxu0 %v3105
        %v3144 = vpop.f32.mrf.mxu0
        %v3145 = vadd.f32 %v752, %v3144
        %v3146 = vpop.f32.mrf.mxu0
        %v3147 = vpop.f32.mrf.mxu0
        %v3148 = vpop.f32.mrf.mxu0
        %3149 = vdwg.mxu0
        %v3150 = vsel %vm1146, %v2788, -inf
        %3151 = vmax.xlane.f32.xlu0 %v3150
        %v3152 = vpop.xlane.xlu0 %3151
        %v3153 = vsel %vm1146, %v2839, -inf
        %3154 = vmax.xlane.f32.xlu0 %v3153
        %v3155 = vpop.xlane.xlu0 %3154
        %v3156 = vsel %vm1146, %v2890, -inf
        %3157 = vmax.xlane.f32.xlu0 %v3156
        %v3158 = vpop.xlane.xlu0 %3157
        %v3159 = vsel %vm1146, %v2941, -inf
        %3160 = vmax.xlane.f32.xlu0 %v3159
        %v3161 = vpop.xlane.xlu0 %3160
        %v3162 = vsel %vm1146, %v2992, -inf
        %3163 = vmax.xlane.f32.xlu0 %v3162
        %v3164 = vpop.xlane.xlu0 %3163
        %v3165 = vsel %vm1146, %v3043, -inf
        %3166 = vmax.xlane.f32.xlu0 %v3165
        %v3167 = vpop.xlane.xlu0 %3166
        %v3168 = vsel %vm1146, %v3094, -inf
        %3169 = vmax.xlane.f32.xlu0 %v3168
        %v3170 = vpop.xlane.xlu0 %3169
        %v3171 = vsel %vm1146, %v3145, -inf
        %3172 = vmax.xlane.f32.xlu0 %v3171
        %v3173 = vpop.xlane.xlu0 %3172
        %v3174 = vsub.f32 %v2788, %v3152
        %v3175 = vsub.f32 %v2839, %v3155
        %v3176 = vsub.f32 %v2890, %v3158
        %v3177 = vsub.f32 %v2941, %v3161
        %v3178 = vsub.f32 %v2992, %v3164
        %v3179 = vsub.f32 %v3043, %v3167
        %v3180 = vsub.f32 %v3094, %v3170
        %v3181 = vsub.f32 %v3145, %v3173
        %v3182 = vmul.f32 %v3174, 1.442695
        %v3183 = vpow.pop %v3182
        %v3184 = vmul.f32 %v3175, 1.442695
        %v3185 = vpow.pop %v3184
        %v3186 = vmul.f32 %v3176, 1.442695
        %v3187 = vpow.pop %v3186
        %v3188 = vmul.f32 %v3177, 1.442695
        %v3189 = vpow.pop %v3188
        %v3190 = vmul.f32 %v3178, 1.442695
        %v3191 = vpow.pop %v3190
        %v3192 = vmul.f32 %v3179, 1.442695
        %v3193 = vpow.pop %v3192
        %v3194 = vmul.f32 %v3180, 1.442695
        %v3195 = vpow.pop %v3194
        %v3196 = vmul.f32 %v3181, 1.442695
        %v3197 = vpow.pop %v3196
        %v3198 = vsel %vm1146, %v3183, 0.0
        %3199 = vadd.xlane.f32.xlu0 %v3198
        %v3200 = vpop.xlane.xlu0 %3199
        %v3201 = vsel %vm1146, %v3185, 0.0
        %3202 = vadd.xlane.f32.xlu0 %v3201
        %v3203 = vpop.xlane.xlu0 %3202
        %v3204 = vsel %vm1146, %v3187, 0.0
        %3205 = vadd.xlane.f32.xlu0 %v3204
        %v3206 = vpop.xlane.xlu0 %3205
        %v3207 = vsel %vm1146, %v3189, 0.0
        %3208 = vadd.xlane.f32.xlu0 %v3207
        %v3209 = vpop.xlane.xlu0 %3208
        %v3210 = vsel %vm1146, %v3191, 0.0
        %3211 = vadd.xlane.f32.xlu0 %v3210
        %v3212 = vpop.xlane.xlu0 %3211
        %v3213 = vsel %vm1146, %v3193, 0.0
        %3214 = vadd.xlane.f32.xlu0 %v3213
        %v3215 = vpop.xlane.xlu0 %3214
        %v3216 = vsel %vm1146, %v3195, 0.0
        %3217 = vadd.xlane.f32.xlu0 %v3216
        %v3218 = vpop.xlane.xlu0 %3217
        %v3219 = vsel %vm1146, %v3197, 0.0
        %3220 = vadd.xlane.f32.xlu0 %v3219
        %v3221 = vpop.xlane.xlu0 %3220
        %v3222 = vrcp.pop %v3200
        %v3223 = vrcp.pop %v3203
        %v3224 = vrcp.pop %v3206
        %v3225 = vrcp.pop %v3209
        %v3226 = vrcp.pop %v3212
        %v3227 = vrcp.pop %v3215
        %v3228 = vrcp.pop %v3218
        %v3229 = vrcp.pop %v3221
        %v3230 = vmul.f32 %v3183, %v3222
        %v3231 = vmul.f32 %v3185, %v3223
        %v3232 = vmul.f32 %v3187, %v3224
        %v3233 = vmul.f32 %v3189, %v3225
        %v3234 = vmul.f32 %v3191, %v3226
        %v3235 = vmul.f32 %v3193, %v3227
        %v3236 = vmul.f32 %v3195, %v3228
        %v3237 = vmul.f32 %v3197, %v3229
        %v3238 = vpack.c.bf16 %v3230, %v3230
        %v3239 = vpack.c.bf16 %v3231, %v3231
        %v3240 = vpack.c.bf16 %v3232, %v3232
        %v3241 = vpack.c.bf16 %v3233, %v3233
        %v3242 = vpack.c.bf16 %v3234, %v3234
        %v3243 = vpack.c.bf16 %v3235, %v3235
        %v3244 = vpack.c.bf16 %v3236, %v3236
        %v3245 = vpack.c.bf16 %v3237, %v3237
        %3246 = vrot.lane.b32.xlu0 %v737, 64
        %v3247 = vpop.permute.xlu0 %3246
        %v3249 = vsel %vm1146, %v3238, 0
        %v3252 = vsel %vm1246, %v3247, 0
        %3254 = vmatprep.subr.bf16.mxu0 0
        %3255 = vmatpush1.bf16.msra.mxu0 0
        %3256 = vmatprep.subr.bf16.mxu0 0
        %3257 = vmatpush1.bf16.msra.mxu0 0
        %3258 = vmatprep.subr.bf16.mxu0 0
        %3259 = vmatpush1.bf16.msra.mxu0 0
        %3260 = vmatprep.subr.bf16.mxu0 0
        %3261 = vmatpush1.bf16.msra.mxu0 0
        %3262 = vmatprep.subr.bf16.mxu0 0
        %3263 = vmatpush1.bf16.msra.mxu0 0
        %3264 = vmatprep.subr.bf16.mxu0 0
        %3265 = vmatpush1.bf16.msra.mxu0 0
        %3266 = vmatprep.subr.bf16.mxu0 0
        %3267 = vmatpush1.bf16.msra.mxu0 0
        %3268 = vmatprep.subr.bf16.mxu0 0
        %3269 = vmatpush1.bf16.msra.mxu0 %v3252
        %3270 = vmatprep.subr.bf16.mxu0 0
        %3271 = vmatpush2.bf16.msra.mxu0 0
        %3272 = vmatprep.subr.bf16.mxu0 0
        %3273 = vmatpush2.bf16.msra.mxu0 0
        %3274 = vmatprep.subr.bf16.mxu0 0
        %3275 = vmatpush2.bf16.msra.mxu0 0
        %3276 = vmatprep.subr.bf16.mxu0 0
        %3277 = vmatpush2.bf16.msra.mxu0 0
        %3278 = vmatprep.subr.bf16.mxu0 0
        %3279 = vmatpush2.bf16.msra.mxu0 0
        %3280 = vmatprep.subr.bf16.mxu0 0
        %3281 = vmatpush2.bf16.msra.mxu0 0
        %3282 = vmatprep.subr.bf16.mxu0 0
        %3283 = vmatpush2.bf16.msra.mxu0 0
        %3284 = vmatprep.subr.bf16.mxu0 0
        %3285 = vmatpush2.bf16.msra.mxu0 0
        %3286 = vmatprep.mubr.bf16.mxu0 0
        %3287 = vmatmul.mubr.bf16.gmra.mxu0 %v3249
        %v3288 = vpop.f32.mrf.mxu0
        %v3289 = vadd.f32 0.0, %v3288
        %v3290 = vpop.f32.mrf.mxu0
        %v3291 = vpop.f32.mrf.mxu0
        %v3292 = vpop.f32.mrf.mxu0
        %3293 = vdwg.mxu0
        %3294 = vrot.lane.b32.xlu0 %v739, 64
        %v3295 = vpop.permute.xlu0 %3294
        %v3297 = vsel %vm1146, %v3239, 0
        %v3300 = vsel %vm1246, %v3295, 0
        %3302 = vmatprep.subr.bf16.mxu0 0
        %3303 = vmatpush1.bf16.msra.mxu0 0
        %3304 = vmatprep.subr.bf16.mxu0 0
        %3305 = vmatpush1.bf16.msra.mxu0 0
        %3306 = vmatprep.subr.bf16.mxu0 0
        %3307 = vmatpush1.bf16.msra.mxu0 0
        %3308 = vmatprep.subr.bf16.mxu0 0
        %3309 = vmatpush1.bf16.msra.mxu0 0
        %3310 = vmatprep.subr.bf16.mxu0 0
        %3311 = vmatpush1.bf16.msra.mxu0 0
        %3312 = vmatprep.subr.bf16.mxu0 0
        %3313 = vmatpush1.bf16.msra.mxu0 0
        %3314 = vmatprep.subr.bf16.mxu0 0
        %3315 = vmatpush1.bf16.msra.mxu0 0
        %3316 = vmatprep.subr.bf16.mxu0 0
        %3317 = vmatpush1.bf16.msra.mxu0 %v3300
        %3318 = vmatprep.subr.bf16.mxu0 0
        %3319 = vmatpush2.bf16.msra.mxu0 0
        %3320 = vmatprep.subr.bf16.mxu0 0
        %3321 = vmatpush2.bf16.msra.mxu0 0
        %3322 = vmatprep.subr.bf16.mxu0 0
        %3323 = vmatpush2.bf16.msra.mxu0 0
        %3324 = vmatprep.subr.bf16.mxu0 0
        %3325 = vmatpush2.bf16.msra.mxu0 0
        %3326 = vmatprep.subr.bf16.mxu0 0
        %3327 = vmatpush2.bf16.msra.mxu0 0
        %3328 = vmatprep.subr.bf16.mxu0 0
        %3329 = vmatpush2.bf16.msra.mxu0 0
        %3330 = vmatprep.subr.bf16.mxu0 0
        %3331 = vmatpush2.bf16.msra.mxu0 0
        %3332 = vmatprep.subr.bf16.mxu0 0
        %3333 = vmatpush2.bf16.msra.mxu0 0
        %3334 = vmatprep.mubr.bf16.mxu0 0
        %3335 = vmatmul.mubr.bf16.gmra.mxu0 %v3297
        %v3336 = vpop.f32.mrf.mxu0
        %v3337 = vadd.f32 0.0, %v3336
        %v3338 = vpop.f32.mrf.mxu0
        %v3339 = vpop.f32.mrf.mxu0
        %v3340 = vpop.f32.mrf.mxu0
        %3341 = vdwg.mxu0
        %3342 = vrot.lane.b32.xlu0 %v741, 64
        %v3343 = vpop.permute.xlu0 %3342
        %v3345 = vsel %vm1146, %v3240, 0
        %v3348 = vsel %vm1246, %v3343, 0
        %3350 = vmatprep.subr.bf16.mxu0 0
        %3351 = vmatpush1.bf16.msra.mxu0 0
        %3352 = vmatprep.subr.bf16.mxu0 0
        %3353 = vmatpush1.bf16.msra.mxu0 0
        %3354 = vmatprep.subr.bf16.mxu0 0
        %3355 = vmatpush1.bf16.msra.mxu0 0
        %3356 = vmatprep.subr.bf16.mxu0 0
        %3357 = vmatpush1.bf16.msra.mxu0 0
        %3358 = vmatprep.subr.bf16.mxu0 0
        %3359 = vmatpush1.bf16.msra.mxu0 0
        %3360 = vmatprep.subr.bf16.mxu0 0
        %3361 = vmatpush1.bf16.msra.mxu0 0
        %3362 = vmatprep.subr.bf16.mxu0 0
        %3363 = vmatpush1.bf16.msra.mxu0 0
        %3364 = vmatprep.subr.bf16.mxu0 0
        %3365 = vmatpush1.bf16.msra.mxu0 %v3348
        %3366 = vmatprep.subr.bf16.mxu0 0
        %3367 = vmatpush2.bf16.msra.mxu0 0
        %3368 = vmatprep.subr.bf16.mxu0 0
        %3369 = vmatpush2.bf16.msra.mxu0 0
        %3370 = vmatprep.subr.bf16.mxu0 0
        %3371 = vmatpush2.bf16.msra.mxu0 0
        %3372 = vmatprep.subr.bf16.mxu0 0
        %3373 = vmatpush2.bf16.msra.mxu0 0
        %3374 = vmatprep.subr.bf16.mxu0 0
        %3375 = vmatpush2.bf16.msra.mxu0 0
        %3376 = vmatprep.subr.bf16.mxu0 0
        %3377 = vmatpush2.bf16.msra.mxu0 0
        %3378 = vmatprep.subr.bf16.mxu0 0
        %3379 = vmatpush2.bf16.msra.mxu0 0
        %3380 = vmatprep.subr.bf16.mxu0 0
        %3381 = vmatpush2.bf16.msra.mxu0 0
        %3382 = vmatprep.mubr.bf16.mxu0 0
        %3383 = vmatmul.mubr.bf16.gmra.mxu0 %v3345
        %v3384 = vpop.f32.mrf.mxu0
        %v3385 = vadd.f32 0.0, %v3384
        %v3386 = vpop.f32.mrf.mxu0
        %v3387 = vpop.f32.mrf.mxu0
        %v3388 = vpop.f32.mrf.mxu0
        %3389 = vdwg.mxu0
        %3390 = vrot.lane.b32.xlu0 %v743, 64
        %v3391 = vpop.permute.xlu0 %3390
        %v3393 = vsel %vm1146, %v3241, 0
        %v3396 = vsel %vm1246, %v3391, 0
        %3398 = vmatprep.subr.bf16.mxu0 0
        %3399 = vmatpush1.bf16.msra.mxu0 0
        %3400 = vmatprep.subr.bf16.mxu0 0
        %3401 = vmatpush1.bf16.msra.mxu0 0
        %3402 = vmatprep.subr.bf16.mxu0 0
        %3403 = vmatpush1.bf16.msra.mxu0 0
        %3404 = vmatprep.subr.bf16.mxu0 0
        %3405 = vmatpush1.bf16.msra.mxu0 0
        %3406 = vmatprep.subr.bf16.mxu0 0
        %3407 = vmatpush1.bf16.msra.mxu0 0
        %3408 = vmatprep.subr.bf16.mxu0 0
        %3409 = vmatpush1.bf16.msra.mxu0 0
        %3410 = vmatprep.subr.bf16.mxu0 0
        %3411 = vmatpush1.bf16.msra.mxu0 0
        %3412 = vmatprep.subr.bf16.mxu0 0
        %3413 = vmatpush1.bf16.msra.mxu0 %v3396
        %3414 = vmatprep.subr.bf16.mxu0 0
        %3415 = vmatpush2.bf16.msra.mxu0 0
        %3416 = vmatprep.subr.bf16.mxu0 0
        %3417 = vmatpush2.bf16.msra.mxu0 0
        %3418 = vmatprep.subr.bf16.mxu0 0
        %3419 = vmatpush2.bf16.msra.mxu0 0
        %3420 = vmatprep.subr.bf16.mxu0 0
        %3421 = vmatpush2.bf16.msra.mxu0 0
        %3422 = vmatprep.subr.bf16.mxu0 0
        %3423 = vmatpush2.bf16.msra.mxu0 0
        %3424 = vmatprep.subr.bf16.mxu0 0
        %3425 = vmatpush2.bf16.msra.mxu0 0
        %3426 = vmatprep.subr.bf16.mxu0 0
        %3427 = vmatpush2.bf16.msra.mxu0 0
        %3428 = vmatprep.subr.bf16.mxu0 0
        %3429 = vmatpush2.bf16.msra.mxu0 0
        %3430 = vmatprep.mubr.bf16.mxu0 0
        %3431 = vmatmul.mubr.bf16.gmra.mxu0 %v3393
        %v3432 = vpop.f32.mrf.mxu0
        %v3433 = vadd.f32 0.0, %v3432
        %v3434 = vpop.f32.mrf.mxu0
        %v3435 = vpop.f32.mrf.mxu0
        %v3436 = vpop.f32.mrf.mxu0
        %3437 = vdwg.mxu0
        %3438 = vrot.lane.b32.xlu0 %v745, 64
        %v3439 = vpop.permute.xlu0 %3438
        %v3441 = vsel %vm1146, %v3242, 0
        %v3444 = vsel %vm1246, %v3439, 0
        %3446 = vmatprep.subr.bf16.mxu0 0
        %3447 = vmatpush1.bf16.msra.mxu0 0
        %3448 = vmatprep.subr.bf16.mxu0 0
        %3449 = vmatpush1.bf16.msra.mxu0 0
        %3450 = vmatprep.subr.bf16.mxu0 0
        %3451 = vmatpush1.bf16.msra.mxu0 0
        %3452 = vmatprep.subr.bf16.mxu0 0
        %3453 = vmatpush1.bf16.msra.mxu0 0
        %3454 = vmatprep.subr.bf16.mxu0 0
        %3455 = vmatpush1.bf16.msra.mxu0 0
        %3456 = vmatprep.subr.bf16.mxu0 0
        %3457 = vmatpush1.bf16.msra.mxu0 0
        %3458 = vmatprep.subr.bf16.mxu0 0
        %3459 = vmatpush1.bf16.msra.mxu0 0
        %3460 = vmatprep.subr.bf16.mxu0 0
        %3461 = vmatpush1.bf16.msra.mxu0 %v3444
        %3462 = vmatprep.subr.bf16.mxu0 0
        %3463 = vmatpush2.bf16.msra.mxu0 0
        %3464 = vmatprep.subr.bf16.mxu0 0
        %3465 = vmatpush2.bf16.msra.mxu0 0
        %3466 = vmatprep.subr.bf16.mxu0 0
        %3467 = vmatpush2.bf16.msra.mxu0 0
        %3468 = vmatprep.subr.bf16.mxu0 0
        %3469 = vmatpush2.bf16.msra.mxu0 0
        %3470 = vmatprep.subr.bf16.mxu0 0
        %3471 = vmatpush2.bf16.msra.mxu0 0
        %3472 = vmatprep.subr.bf16.mxu0 0
        %3473 = vmatpush2.bf16.msra.mxu0 0
        %3474 = vmatprep.subr.bf16.mxu0 0
        %3475 = vmatpush2.bf16.msra.mxu0 0
        %3476 = vmatprep.subr.bf16.mxu0 0
        %3477 = vmatpush2.bf16.msra.mxu0 0
        %3478 = vmatprep.mubr.bf16.mxu0 0
        %3479 = vmatmul.mubr.bf16.gmra.mxu0 %v3441
        %v3480 = vpop.f32.mrf.mxu0
        %v3481 = vadd.f32 0.0, %v3480
        %v3482 = vpop.f32.mrf.mxu0
        %v3483 = vpop.f32.mrf.mxu0
        %v3484 = vpop.f32.mrf.mxu0
        %3485 = vdwg.mxu0
        %3486 = vrot.lane.b32.xlu0 %v747, 64
        %v3487 = vpop.permute.xlu0 %3486
        %v3489 = vsel %vm1146, %v3243, 0
        %v3492 = vsel %vm1246, %v3487, 0
        %3494 = vmatprep.subr.bf16.mxu0 0
        %3495 = vmatpush1.bf16.msra.mxu0 0
        %3496 = vmatprep.subr.bf16.mxu0 0
        %3497 = vmatpush1.bf16.msra.mxu0 0
        %3498 = vmatprep.subr.bf16.mxu0 0
        %3499 = vmatpush1.bf16.msra.mxu0 0
        %3500 = vmatprep.subr.bf16.mxu0 0
        %3501 = vmatpush1.bf16.msra.mxu0 0
        %3502 = vmatprep.subr.bf16.mxu0 0
        %3503 = vmatpush1.bf16.msra.mxu0 0
        %3504 = vmatprep.subr.bf16.mxu0 0
        %3505 = vmatpush1.bf16.msra.mxu0 0
        %3506 = vmatprep.subr.bf16.mxu0 0
        %3507 = vmatpush1.bf16.msra.mxu0 0
        %3508 = vmatprep.subr.bf16.mxu0 0
        %3509 = vmatpush1.bf16.msra.mxu0 %v3492
        %3510 = vmatprep.subr.bf16.mxu0 0
        %3511 = vmatpush2.bf16.msra.mxu0 0
        %3512 = vmatprep.subr.bf16.mxu0 0
        %3513 = vmatpush2.bf16.msra.mxu0 0
        %3514 = vmatprep.subr.bf16.mxu0 0
        %3515 = vmatpush2.bf16.msra.mxu0 0
        %3516 = vmatprep.subr.bf16.mxu0 0
        %3517 = vmatpush2.bf16.msra.mxu0 0
        %3518 = vmatprep.subr.bf16.mxu0 0
        %3519 = vmatpush2.bf16.msra.mxu0 0
        %3520 = vmatprep.subr.bf16.mxu0 0
        %3521 = vmatpush2.bf16.msra.mxu0 0
        %3522 = vmatprep.subr.bf16.mxu0 0
        %3523 = vmatpush2.bf16.msra.mxu0 0
        %3524 = vmatprep.subr.bf16.mxu0 0
        %3525 = vmatpush2.bf16.msra.mxu0 0
        %3526 = vmatprep.mubr.bf16.mxu0 0
        %3527 = vmatmul.mubr.bf16.gmra.mxu0 %v3489
        %v3528 = vpop.f32.mrf.mxu0
        %v3529 = vadd.f32 0.0, %v3528
        %v3530 = vpop.f32.mrf.mxu0
        %v3531 = vpop.f32.mrf.mxu0
        %v3532 = vpop.f32.mrf.mxu0
        %3533 = vdwg.mxu0
        %3534 = vrot.lane.b32.xlu0 %v749, 64
        %v3535 = vpop.permute.xlu0 %3534
        %v3537 = vsel %vm1146, %v3244, 0
        %v3540 = vsel %vm1246, %v3535, 0
        %3542 = vmatprep.subr.bf16.mxu0 0
        %3543 = vmatpush1.bf16.msra.mxu0 0
        %3544 = vmatprep.subr.bf16.mxu0 0
        %3545 = vmatpush1.bf16.msra.mxu0 0
        %3546 = vmatprep.subr.bf16.mxu0 0
        %3547 = vmatpush1.bf16.msra.mxu0 0
        %3548 = vmatprep.subr.bf16.mxu0 0
        %3549 = vmatpush1.bf16.msra.mxu0 0
        %3550 = vmatprep.subr.bf16.mxu0 0
        %3551 = vmatpush1.bf16.msra.mxu0 0
        %3552 = vmatprep.subr.bf16.mxu0 0
        %3553 = vmatpush1.bf16.msra.mxu0 0
        %3554 = vmatprep.subr.bf16.mxu0 0
        %3555 = vmatpush1.bf16.msra.mxu0 0
        %3556 = vmatprep.subr.bf16.mxu0 0
        %3557 = vmatpush1.bf16.msra.mxu0 %v3540
        %3558 = vmatprep.subr.bf16.mxu0 0
        %3559 = vmatpush2.bf16.msra.mxu0 0
        %3560 = vmatprep.subr.bf16.mxu0 0
        %3561 = vmatpush2.bf16.msra.mxu0 0
        %3562 = vmatprep.subr.bf16.mxu0 0
        %3563 = vmatpush2.bf16.msra.mxu0 0
        %3564 = vmatprep.subr.bf16.mxu0 0
        %3565 = vmatpush2.bf16.msra.mxu0 0
        %3566 = vmatprep.subr.bf16.mxu0 0
        %3567 = vmatpush2.bf16.msra.mxu0 0
        %3568 = vmatprep.subr.bf16.mxu0 0
        %3569 = vmatpush2.bf16.msra.mxu0 0
        %3570 = vmatprep.subr.bf16.mxu0 0
        %3571 = vmatpush2.bf16.msra.mxu0 0
        %3572 = vmatprep.subr.bf16.mxu0 0
        %3573 = vmatpush2.bf16.msra.mxu0 0
        %3574 = vmatprep.mubr.bf16.mxu0 0
        %3575 = vmatmul.mubr.bf16.gmra.mxu0 %v3537
        %v3576 = vpop.f32.mrf.mxu0
        %v3577 = vadd.f32 0.0, %v3576
        %v3578 = vpop.f32.mrf.mxu0
        %v3579 = vpop.f32.mrf.mxu0
        %v3580 = vpop.f32.mrf.mxu0
        %3581 = vdwg.mxu0
        %3582 = vrot.lane.b32.xlu0 %v751, 64
        %v3583 = vpop.permute.xlu0 %3582
        %v3585 = vsel %vm1146, %v3245, 0
        %v3588 = vsel %vm1246, %v3583, 0
        %3590 = vmatprep.subr.bf16.mxu0 0
        %3591 = vmatpush1.bf16.msra.mxu0 0
        %3592 = vmatprep.subr.bf16.mxu0 0
        %3593 = vmatpush1.bf16.msra.mxu0 0
        %3594 = vmatprep.subr.bf16.mxu0 0
        %3595 = vmatpush1.bf16.msra.mxu0 0
        %3596 = vmatprep.subr.bf16.mxu0 0
        %3597 = vmatpush1.bf16.msra.mxu0 0
        %3598 = vmatprep.subr.bf16.mxu0 0
        %3599 = vmatpush1.bf16.msra.mxu0 0
        %3600 = vmatprep.subr.bf16.mxu0 0
        %3601 = vmatpush1.bf16.msra.mxu0 0
        %3602 = vmatprep.subr.bf16.mxu0 0
        %3603 = vmatpush1.bf16.msra.mxu0 0
        %3604 = vmatprep.subr.bf16.mxu0 0
        %3605 = vmatpush1.bf16.msra.mxu0 %v3588
        %3606 = vmatprep.subr.bf16.mxu0 0
        %3607 = vmatpush2.bf16.msra.mxu0 0
        %3608 = vmatprep.subr.bf16.mxu0 0
        %3609 = vmatpush2.bf16.msra.mxu0 0
        %3610 = vmatprep.subr.bf16.mxu0 0
        %3611 = vmatpush2.bf16.msra.mxu0 0
        %3612 = vmatprep.subr.bf16.mxu0 0
        %3613 = vmatpush2.bf16.msra.mxu0 0
        %3614 = vmatprep.subr.bf16.mxu0 0
        %3615 = vmatpush2.bf16.msra.mxu0 0
        %3616 = vmatprep.subr.bf16.mxu0 0
        %3617 = vmatpush2.bf16.msra.mxu0 0
        %3618 = vmatprep.subr.bf16.mxu0 0
        %3619 = vmatpush2.bf16.msra.mxu0 0
        %3620 = vmatprep.subr.bf16.mxu0 0
        %3621 = vmatpush2.bf16.msra.mxu0 0
        %3622 = vmatprep.mubr.bf16.mxu0 0
        %3623 = vmatmul.mubr.bf16.gmra.mxu0 %v3585
        %v3624 = vpop.f32.mrf.mxu0
        %v3625 = vadd.f32 0.0, %v3624
        %v3626 = vpop.f32.mrf.mxu0
        %v3627 = vpop.f32.mrf.mxu0
        %v3628 = vpop.f32.mrf.mxu0
        %3629 = vdwg.mxu0
        %v3630 = vpack.c.bf16 %v3289, %v3289
        %v3631 = vpack.c.bf16 %v3337, %v3337
        %v3632 = vpack.c.bf16 %v3385, %v3385
        %v3633 = vpack.c.bf16 %v3433, %v3433
        %v3634 = vpack.c.bf16 %v3481, %v3481
        %v3635 = vpack.c.bf16 %v3529, %v3529
        %v3636 = vpack.c.bf16 %v3577, %v3577
        %v3637 = vpack.c.bf16 %v3625, %v3625
        %v3646 = vunpack.c.l.b16 %v3630
        %v3647 = vunpack.c.l.b16 %v3631
        %v3648 = vunpack.c.l.b16 %v3632
        %v3649 = vunpack.c.l.b16 %v3633
        %v3650 = vunpack.c.l.b16 %v3634
        %v3651 = vunpack.c.l.b16 %v3635
        %v3652 = vunpack.c.l.b16 %v3636
        %v3653 = vunpack.c.l.b16 %v3637
        %v3654 = vpack.c.b16 %v3647, %v3646
        %v3655 = vpack.c.b16 %v3649, %v3648
        %v3656 = vpack.c.b16 %v3651, %v3650
        %v3657 = vpack.c.b16 %v3653, %v3652
        %v3662 = vunpack.c.l.b16 %v761
        %v3663 = vunpack.c.l.b16 %v762
        %v3664 = vunpack.c.l.b16 %v763
        %v3665 = vunpack.c.l.b16 %v764
        %v3666 = vpack.c.b16 %v3663, %v3662
        %v3667 = vpack.c.b16 %v3665, %v3664
        %v3671 = vsel %vm770, %v3654, 0
        %v3674 = vsel %vm770, %v3655, 0
        %v3677 = vsel %vm770, %v3656, 0
        %v3680 = vsel %vm770, %v3657, 0
        %3682 = vmatprep.subr.bf16.mxu0 0
        %3683 = vmatpush1.bf16.msra.mxu0 0
        %3684 = vmatprep.subr.bf16.mxu0 0
        %3685 = vmatpush1.bf16.msra.mxu0 0
        %3686 = vmatprep.subr.bf16.mxu0 0
        %3687 = vmatpush1.bf16.msra.mxu0 0
        %3688 = vmatprep.subr.bf16.mxu0 0
        %3689 = vmatpush1.bf16.msra.mxu0 0
        %3690 = vmatprep.subr.bf16.mxu0 0
        %3691 = vmatpush1.bf16.msra.mxu0 0
        %3692 = vmatprep.subr.bf16.mxu0 0
        %3693 = vmatpush1.bf16.msra.mxu0 0
        %3694 = vmatprep.subr.bf16.mxu0 0
        %3695 = vmatpush1.bf16.msra.mxu0 %v3667
        %3696 = vmatprep.subr.bf16.mxu0 0
        %3697 = vmatpush1.bf16.msra.mxu0 %v3666
        %3698 = vmatprep.subr.bf16.mxu0 0
        %3699 = vmatpush2.bf16.msra.mxu0 0
        %3700 = vmatprep.subr.bf16.mxu0 0
        %3701 = vmatpush2.bf16.msra.mxu0 0
        %3702 = vmatprep.subr.bf16.mxu0 0
        %3703 = vmatpush2.bf16.msra.mxu0 0
        %3704 = vmatprep.subr.bf16.mxu0 0
        %3705 = vmatpush2.bf16.msra.mxu0 0
        %3706 = vmatprep.subr.bf16.mxu0 0
        %3707 = vmatpush2.bf16.msra.mxu0 0
        %3708 = vmatprep.subr.bf16.mxu0 0
        %3709 = vmatpush2.bf16.msra.mxu0 0
        %3710 = vmatprep.subr.bf16.mxu0 0
        %3711 = vmatpush2.bf16.msra.mxu0 0
        %3712 = vmatprep.subr.bf16.mxu0 0
        %3713 = vmatpush2.bf16.msra.mxu0 0
        %3714 = vmatprep.mubr.bf16.mxu0 0
        %3715 = vmatmul.mubr.bf16.gmra.mxu0 %v3671
        %v3716 = vpop.f32.mrf.mxu0
        %v3717 = vadd.f32 0.0, %v3716
        %v3718 = vpop.f32.mrf.mxu0
        %v3719 = vpop.f32.mrf.mxu0
        %v3720 = vadd.f32 0.0, %v3719
        %v3721 = vpop.f32.mrf.mxu0
        %3722 = vmatprep.mubr.bf16.mxu0 0
        %3723 = vmatmul.mubr.bf16.gmra.mxu0 %v3674
        %v3724 = vpop.f32.mrf.mxu0
        %v3725 = vadd.f32 0.0, %v3724
        %v3726 = vpop.f32.mrf.mxu0
        %v3727 = vpop.f32.mrf.mxu0
        %v3728 = vadd.f32 0.0, %v3727
        %v3729 = vpop.f32.mrf.mxu0
        %3730 = vmatprep.mubr.bf16.mxu0 0
        %3731 = vmatmul.mubr.bf16.gmra.mxu0 %v3677
        %v3732 = vpop.f32.mrf.mxu0
        %v3733 = vadd.f32 0.0, %v3732
        %v3734 = vpop.f32.mrf.mxu0
        %v3735 = vpop.f32.mrf.mxu0
        %v3736 = vadd.f32 0.0, %v3735
        %v3737 = vpop.f32.mrf.mxu0
        %3738 = vmatprep.mubr.bf16.mxu0 0
        %3739 = vmatmul.mubr.bf16.gmra.mxu0 %v3680
        %v3740 = vpop.f32.mrf.mxu0
        %v3741 = vadd.f32 0.0, %v3740
        %v3742 = vpop.f32.mrf.mxu0
        %v3743 = vpop.f32.mrf.mxu0
        %v3744 = vadd.f32 0.0, %v3743
        %v3745 = vpop.f32.mrf.mxu0
        %3746 = vdwg.mxu0
        %v3747 = vadd.f32 %v2712, %v3717
        %v3748 = vadd.f32 %v2715, %v3720
        %v3749 = vadd.f32 %v2720, %v3725
        %v3750 = vadd.f32 %v2723, %v3728
        %v3751 = vadd.f32 %v2728, %v3733
        %v3752 = vadd.f32 %v2731, %v3736
        %v3753 = vadd.f32 %v2736, %v3741
        %v3754 = vadd.f32 %v2739, %v3744
        %3755 = vrot.lane.b32.xlu0 %v736, 32
        %v3756 = vpop.permute.xlu0 %3755
        %v3757 = vrot.slane %v3756, 4
        %3758 = vrot.lane.b32.xlu0 %v1623, 32
        %v3759 = vpop.permute.xlu0 %3758
        %v3761 = vsel %vm770, %v3759, 0
        %v3764 = vsel %vm770, %v3757, 0
        %3766 = vmatprep.subr.bf16.mxu0 0
        %3767 = vmatpush1.bf16.xpose.msra.mxu0 0
        %3768 = vmatprep.subr.bf16.mxu0 0
        %3769 = vmatpush1.bf16.xpose.msra.mxu0 0
        %3770 = vmatprep.subr.bf16.mxu0 0
        %3771 = vmatpush1.bf16.xpose.msra.mxu0 0
        %3772 = vmatprep.subr.bf16.mxu0 0
        %3773 = vmatpush1.bf16.xpose.msra.mxu0 0
        %3774 = vmatprep.subr.bf16.mxu0 0
        %3775 = vmatpush1.bf16.xpose.msra.mxu0 0
        %3776 = vmatprep.subr.bf16.mxu0 0
        %3777 = vmatpush1.bf16.xpose.msra.mxu0 0
        %3778 = vmatprep.subr.bf16.mxu0 0
        %3779 = vmatpush1.bf16.xpose.msra.mxu0 0
        %3780 = vmatprep.subr.bf16.mxu0 0
        %3781 = vmatpush1.bf16.xpose.msra.mxu0 %v3764
        %3782 = vmatprep.subr.bf16.mxu0 0
        %3783 = vmatpush2.bf16.xpose.msra.mxu0 0
        %3784 = vmatprep.subr.bf16.mxu0 0
        %3785 = vmatpush2.bf16.xpose.msra.mxu0 0
        %3786 = vmatprep.subr.bf16.mxu0 0
        %3787 = vmatpush2.bf16.xpose.msra.mxu0 0
        %3788 = vmatprep.subr.bf16.mxu0 0
        %3789 = vmatpush2.bf16.xpose.msra.mxu0 0
        %3790 = vmatprep.subr.bf16.mxu0 0
        %3791 = vmatpush2.bf16.xpose.msra.mxu0 0
        %3792 = vmatprep.subr.bf16.mxu0 0
        %3793 = vmatpush2.bf16.xpose.msra.mxu0 0
        %3794 = vmatprep.subr.bf16.mxu0 0
        %3795 = vmatpush2.bf16.xpose.msra.mxu0 0
        %3796 = vmatprep.subr.bf16.mxu0 0
        %3797 = vmatpush2.bf16.xpose.msra.mxu0 0
        %3798 = vmatprep.mubr.bf16.mxu0 0
        %3799 = vmatmul.mubr.bf16.gmra.mxu0 %v3761
        %v3800 = vpop.f32.mrf.mxu0
        %v3801 = vadd.f32 %v752, %v3800
        %v3802 = vpop.f32.mrf.mxu0
        %v3803 = vpop.f32.mrf.mxu0
        %v3804 = vpop.f32.mrf.mxu0
        %3805 = vdwg.mxu0
        %3806 = vrot.lane.b32.xlu0 %v738, 32
        %v3807 = vpop.permute.xlu0 %3806
        %v3808 = vrot.slane %v3807, 4
        %3809 = vrot.lane.b32.xlu0 %v1675, 32
        %v3810 = vpop.permute.xlu0 %3809
        %v3812 = vsel %vm770, %v3810, 0
        %v3815 = vsel %vm770, %v3808, 0
        %3817 = vmatprep.subr.bf16.mxu0 0
        %3818 = vmatpush1.bf16.xpose.msra.mxu0 0
        %3819 = vmatprep.subr.bf16.mxu0 0
        %3820 = vmatpush1.bf16.xpose.msra.mxu0 0
        %3821 = vmatprep.subr.bf16.mxu0 0
        %3822 = vmatpush1.bf16.xpose.msra.mxu0 0
        %3823 = vmatprep.subr.bf16.mxu0 0
        %3824 = vmatpush1.bf16.xpose.msra.mxu0 0
        %3825 = vmatprep.subr.bf16.mxu0 0
        %3826 = vmatpush1.bf16.xpose.msra.mxu0 0
        %3827 = vmatprep.subr.bf16.mxu0 0
        %3828 = vmatpush1.bf16.xpose.msra.mxu0 0
        %3829 = vmatprep.subr.bf16.mxu0 0
        %3830 = vmatpush1.bf16.xpose.msra.mxu0 0
        %3831 = vmatprep.subr.bf16.mxu0 0
        %3832 = vmatpush1.bf16.xpose.msra.mxu0 %v3815
        %3833 = vmatprep.subr.bf16.mxu0 0
        %3834 = vmatpush2.bf16.xpose.msra.mxu0 0
        %3835 = vmatprep.subr.bf16.mxu0 0
        %3836 = vmatpush2.bf16.xpose.msra.mxu0 0
        %3837 = vmatprep.subr.bf16.mxu0 0
        %3838 = vmatpush2.bf16.xpose.msra.mxu0 0
        %3839 = vmatprep.subr.bf16.mxu0 0
        %3840 = vmatpush2.bf16.xpose.msra.mxu0 0
        %3841 = vmatprep.subr.bf16.mxu0 0
        %3842 = vmatpush2.bf16.xpose.msra.mxu0 0
        %3843 = vmatprep.subr.bf16.mxu0 0
        %3844 = vmatpush2.bf16.xpose.msra.mxu0 0
        %3845 = vmatprep.subr.bf16.mxu0 0
        %3846 = vmatpush2.bf16.xpose.msra.mxu0 0
        %3847 = vmatprep.subr.bf16.mxu0 0
        %3848 = vmatpush2.bf16.xpose.msra.mxu0 0
        %3849 = vmatprep.mubr.bf16.mxu0 0
        %3850 = vmatmul.mubr.bf16.gmra.mxu0 %v3812
        %v3851 = vpop.f32.mrf.mxu0
        %v3852 = vadd.f32 %v752, %v3851
        %v3853 = vpop.f32.mrf.mxu0
        %v3854 = vpop.f32.mrf.mxu0
        %v3855 = vpop.f32.mrf.mxu0
        %3856 = vdwg.mxu0
        %3857 = vrot.lane.b32.xlu0 %v740, 32
        %v3858 = vpop.permute.xlu0 %3857
        %v3859 = vrot.slane %v3858, 4
        %3860 = vrot.lane.b32.xlu0 %v1727, 32
        %v3861 = vpop.permute.xlu0 %3860
        %v3863 = vsel %vm770, %v3861, 0
        %v3866 = vsel %vm770, %v3859, 0
        %3868 = vmatprep.subr.bf16.mxu0 0
        %3869 = vmatpush1.bf16.xpose.msra.mxu0 0
        %3870 = vmatprep.subr.bf16.mxu0 0
        %3871 = vmatpush1.bf16.xpose.msra.mxu0 0
        %3872 = vmatprep.subr.bf16.mxu0 0
        %3873 = vmatpush1.bf16.xpose.msra.mxu0 0
        %3874 = vmatprep.subr.bf16.mxu0 0
        %3875 = vmatpush1.bf16.xpose.msra.mxu0 0
        %3876 = vmatprep.subr.bf16.mxu0 0
        %3877 = vmatpush1.bf16.xpose.msra.mxu0 0
        %3878 = vmatprep.subr.bf16.mxu0 0
        %3879 = vmatpush1.bf16.xpose.msra.mxu0 0
        %3880 = vmatprep.subr.bf16.mxu0 0
        %3881 = vmatpush1.bf16.xpose.msra.mxu0 0
        %3882 = vmatprep.subr.bf16.mxu0 0
        %3883 = vmatpush1.bf16.xpose.msra.mxu0 %v3866
        %3884 = vmatprep.subr.bf16.mxu0 0
        %3885 = vmatpush2.bf16.xpose.msra.mxu0 0
        %3886 = vmatprep.subr.bf16.mxu0 0
        %3887 = vmatpush2.bf16.xpose.msra.mxu0 0
        %3888 = vmatprep.subr.bf16.mxu0 0
        %3889 = vmatpush2.bf16.xpose.msra.mxu0 0
        %3890 = vmatprep.subr.bf16.mxu0 0
        %3891 = vmatpush2.bf16.xpose.msra.mxu0 0
        %3892 = vmatprep.subr.bf16.mxu0 0
        %3893 = vmatpush2.bf16.xpose.msra.mxu0 0
        %3894 = vmatprep.subr.bf16.mxu0 0
        %3895 = vmatpush2.bf16.xpose.msra.mxu0 0
        %3896 = vmatprep.subr.bf16.mxu0 0
        %3897 = vmatpush2.bf16.xpose.msra.mxu0 0
        %3898 = vmatprep.subr.bf16.mxu0 0
        %3899 = vmatpush2.bf16.xpose.msra.mxu0 0
        %3900 = vmatprep.mubr.bf16.mxu0 0
        %3901 = vmatmul.mubr.bf16.gmra.mxu0 %v3863
        %v3902 = vpop.f32.mrf.mxu0
        %v3903 = vadd.f32 %v752, %v3902
        %v3904 = vpop.f32.mrf.mxu0
        %v3905 = vpop.f32.mrf.mxu0
        %v3906 = vpop.f32.mrf.mxu0
        %3907 = vdwg.mxu0
        %3908 = vrot.lane.b32.xlu0 %v742, 32
        %v3909 = vpop.permute.xlu0 %3908
        %v3910 = vrot.slane %v3909, 4
        %3911 = vrot.lane.b32.xlu0 %v1779, 32
        %v3912 = vpop.permute.xlu0 %3911
        %v3914 = vsel %vm770, %v3912, 0
        %v3917 = vsel %vm770, %v3910, 0
        %3919 = vmatprep.subr.bf16.mxu0 0
        %3920 = vmatpush1.bf16.xpose.msra.mxu0 0
        %3921 = vmatprep.subr.bf16.mxu0 0
        %3922 = vmatpush1.bf16.xpose.msra.mxu0 0
        %3923 = vmatprep.subr.bf16.mxu0 0
        %3924 = vmatpush1.bf16.xpose.msra.mxu0 0
        %3925 = vmatprep.subr.bf16.mxu0 0
        %3926 = vmatpush1.bf16.xpose.msra.mxu0 0
        %3927 = vmatprep.subr.bf16.mxu0 0
        %3928 = vmatpush1.bf16.xpose.msra.mxu0 0
        %3929 = vmatprep.subr.bf16.mxu0 0
        %3930 = vmatpush1.bf16.xpose.msra.mxu0 0
        %3931 = vmatprep.subr.bf16.mxu0 0
        %3932 = vmatpush1.bf16.xpose.msra.mxu0 0
        %3933 = vmatprep.subr.bf16.mxu0 0
        %3934 = vmatpush1.bf16.xpose.msra.mxu0 %v3917
        %3935 = vmatprep.subr.bf16.mxu0 0
        %3936 = vmatpush2.bf16.xpose.msra.mxu0 0
        %3937 = vmatprep.subr.bf16.mxu0 0
        %3938 = vmatpush2.bf16.xpose.msra.mxu0 0
        %3939 = vmatprep.subr.bf16.mxu0 0
        %3940 = vmatpush2.bf16.xpose.msra.mxu0 0
        %3941 = vmatprep.subr.bf16.mxu0 0
        %3942 = vmatpush2.bf16.xpose.msra.mxu0 0
        %3943 = vmatprep.subr.bf16.mxu0 0
        %3944 = vmatpush2.bf16.xpose.msra.mxu0 0
        %3945 = vmatprep.subr.bf16.mxu0 0
        %3946 = vmatpush2.bf16.xpose.msra.mxu0 0
        %3947 = vmatprep.subr.bf16.mxu0 0
        %3948 = vmatpush2.bf16.xpose.msra.mxu0 0
        %3949 = vmatprep.subr.bf16.mxu0 0
        %3950 = vmatpush2.bf16.xpose.msra.mxu0 0
        %3951 = vmatprep.mubr.bf16.mxu0 0
        %3952 = vmatmul.mubr.bf16.gmra.mxu0 %v3914
        %v3953 = vpop.f32.mrf.mxu0
        %v3954 = vadd.f32 %v752, %v3953
        %v3955 = vpop.f32.mrf.mxu0
        %v3956 = vpop.f32.mrf.mxu0
        %v3957 = vpop.f32.mrf.mxu0
        %3958 = vdwg.mxu0
        %3959 = vrot.lane.b32.xlu0 %v744, 32
        %v3960 = vpop.permute.xlu0 %3959
        %v3961 = vrot.slane %v3960, 4
        %3962 = vrot.lane.b32.xlu0 %v1831, 32
        %v3963 = vpop.permute.xlu0 %3962
        %v3965 = vsel %vm770, %v3963, 0
        %v3968 = vsel %vm770, %v3961, 0
        %3970 = vmatprep.subr.bf16.mxu0 0
        %3971 = vmatpush1.bf16.xpose.msra.mxu0 0
        %3972 = vmatprep.subr.bf16.mxu0 0
        %3973 = vmatpush1.bf16.xpose.msra.mxu0 0
        %3974 = vmatprep.subr.bf16.mxu0 0
        %3975 = vmatpush1.bf16.xpose.msra.mxu0 0
        %3976 = vmatprep.subr.bf16.mxu0 0
        %3977 = vmatpush1.bf16.xpose.msra.mxu0 0
        %3978 = vmatprep.subr.bf16.mxu0 0
        %3979 = vmatpush1.bf16.xpose.msra.mxu0 0
        %3980 = vmatprep.subr.bf16.mxu0 0
        %3981 = vmatpush1.bf16.xpose.msra.mxu0 0
        %3982 = vmatprep.subr.bf16.mxu0 0
        %3983 = vmatpush1.bf16.xpose.msra.mxu0 0
        %3984 = vmatprep.subr.bf16.mxu0 0
        %3985 = vmatpush1.bf16.xpose.msra.mxu0 %v3968
        %3986 = vmatprep.subr.bf16.mxu0 0
        %3987 = vmatpush2.bf16.xpose.msra.mxu0 0
        %3988 = vmatprep.subr.bf16.mxu0 0
        %3989 = vmatpush2.bf16.xpose.msra.mxu0 0
        %3990 = vmatprep.subr.bf16.mxu0 0
        %3991 = vmatpush2.bf16.xpose.msra.mxu0 0
        %3992 = vmatprep.subr.bf16.mxu0 0
        %3993 = vmatpush2.bf16.xpose.msra.mxu0 0
        %3994 = vmatprep.subr.bf16.mxu0 0
        %3995 = vmatpush2.bf16.xpose.msra.mxu0 0
        %3996 = vmatprep.subr.bf16.mxu0 0
        %3997 = vmatpush2.bf16.xpose.msra.mxu0 0
        %3998 = vmatprep.subr.bf16.mxu0 0
        %3999 = vmatpush2.bf16.xpose.msra.mxu0 0
        %4000 = vmatprep.subr.bf16.mxu0 0
        %4001 = vmatpush2.bf16.xpose.msra.mxu0 0
        %4002 = vmatprep.mubr.bf16.mxu0 0
        %4003 = vmatmul.mubr.bf16.gmra.mxu0 %v3965
        %v4004 = vpop.f32.mrf.mxu0
        %v4005 = vadd.f32 %v752, %v4004
        %v4006 = vpop.f32.mrf.mxu0
        %v4007 = vpop.f32.mrf.mxu0
        %v4008 = vpop.f32.mrf.mxu0
        %4009 = vdwg.mxu0
        %4010 = vrot.lane.b32.xlu0 %v746, 32
        %v4011 = vpop.permute.xlu0 %4010
        %v4012 = vrot.slane %v4011, 4
        %4013 = vrot.lane.b32.xlu0 %v1883, 32
        %v4014 = vpop.permute.xlu0 %4013
        %v4016 = vsel %vm770, %v4014, 0
        %v4019 = vsel %vm770, %v4012, 0
        %4021 = vmatprep.subr.bf16.mxu0 0
        %4022 = vmatpush1.bf16.xpose.msra.mxu0 0
        %4023 = vmatprep.subr.bf16.mxu0 0
        %4024 = vmatpush1.bf16.xpose.msra.mxu0 0
        %4025 = vmatprep.subr.bf16.mxu0 0
        %4026 = vmatpush1.bf16.xpose.msra.mxu0 0
        %4027 = vmatprep.subr.bf16.mxu0 0
        %4028 = vmatpush1.bf16.xpose.msra.mxu0 0
        %4029 = vmatprep.subr.bf16.mxu0 0
        %4030 = vmatpush1.bf16.xpose.msra.mxu0 0
        %4031 = vmatprep.subr.bf16.mxu0 0
        %4032 = vmatpush1.bf16.xpose.msra.mxu0 0
        %4033 = vmatprep.subr.bf16.mxu0 0
        %4034 = vmatpush1.bf16.xpose.msra.mxu0 0
        %4035 = vmatprep.subr.bf16.mxu0 0
        %4036 = vmatpush1.bf16.xpose.msra.mxu0 %v4019
        %4037 = vmatprep.subr.bf16.mxu0 0
        %4038 = vmatpush2.bf16.xpose.msra.mxu0 0
        %4039 = vmatprep.subr.bf16.mxu0 0
        %4040 = vmatpush2.bf16.xpose.msra.mxu0 0
        %4041 = vmatprep.subr.bf16.mxu0 0
        %4042 = vmatpush2.bf16.xpose.msra.mxu0 0
        %4043 = vmatprep.subr.bf16.mxu0 0
        %4044 = vmatpush2.bf16.xpose.msra.mxu0 0
        %4045 = vmatprep.subr.bf16.mxu0 0
        %4046 = vmatpush2.bf16.xpose.msra.mxu0 0
        %4047 = vmatprep.subr.bf16.mxu0 0
        %4048 = vmatpush2.bf16.xpose.msra.mxu0 0
        %4049 = vmatprep.subr.bf16.mxu0 0
        %4050 = vmatpush2.bf16.xpose.msra.mxu0 0
        %4051 = vmatprep.subr.bf16.mxu0 0
        %4052 = vmatpush2.bf16.xpose.msra.mxu0 0
        %4053 = vmatprep.mubr.bf16.mxu0 0
        %4054 = vmatmul.mubr.bf16.gmra.mxu0 %v4016
        %v4055 = vpop.f32.mrf.mxu0
        %v4056 = vadd.f32 %v752, %v4055
        %v4057 = vpop.f32.mrf.mxu0
        %v4058 = vpop.f32.mrf.mxu0
        %v4059 = vpop.f32.mrf.mxu0
        %4060 = vdwg.mxu0
        %4061 = vrot.lane.b32.xlu0 %v748, 32
        %v4062 = vpop.permute.xlu0 %4061
        %v4063 = vrot.slane %v4062, 4
        %4064 = vrot.lane.b32.xlu0 %v1935, 32
        %v4065 = vpop.permute.xlu0 %4064
        %v4067 = vsel %vm770, %v4065, 0
        %v4070 = vsel %vm770, %v4063, 0
        %4072 = vmatprep.subr.bf16.mxu0 0
        %4073 = vmatpush1.bf16.xpose.msra.mxu0 0
        %4074 = vmatprep.subr.bf16.mxu0 0
        %4075 = vmatpush1.bf16.xpose.msra.mxu0 0
        %4076 = vmatprep.subr.bf16.mxu0 0
        %4077 = vmatpush1.bf16.xpose.msra.mxu0 0
        %4078 = vmatprep.subr.bf16.mxu0 0
        %4079 = vmatpush1.bf16.xpose.msra.mxu0 0
        %4080 = vmatprep.subr.bf16.mxu0 0
        %4081 = vmatpush1.bf16.xpose.msra.mxu0 0
        %4082 = vmatprep.subr.bf16.mxu0 0
        %4083 = vmatpush1.bf16.xpose.msra.mxu0 0
        %4084 = vmatprep.subr.bf16.mxu0 0
        %4085 = vmatpush1.bf16.xpose.msra.mxu0 0
        %4086 = vmatprep.subr.bf16.mxu0 0
        %4087 = vmatpush1.bf16.xpose.msra.mxu0 %v4070
        %4088 = vmatprep.subr.bf16.mxu0 0
        %4089 = vmatpush2.bf16.xpose.msra.mxu0 0
        %4090 = vmatprep.subr.bf16.mxu0 0
        %4091 = vmatpush2.bf16.xpose.msra.mxu0 0
        %4092 = vmatprep.subr.bf16.mxu0 0
        %4093 = vmatpush2.bf16.xpose.msra.mxu0 0
        %4094 = vmatprep.subr.bf16.mxu0 0
        %4095 = vmatpush2.bf16.xpose.msra.mxu0 0
        %4096 = vmatprep.subr.bf16.mxu0 0
        %4097 = vmatpush2.bf16.xpose.msra.mxu0 0
        %4098 = vmatprep.subr.bf16.mxu0 0
        %4099 = vmatpush2.bf16.xpose.msra.mxu0 0
        %4100 = vmatprep.subr.bf16.mxu0 0
        %4101 = vmatpush2.bf16.xpose.msra.mxu0 0
        %4102 = vmatprep.subr.bf16.mxu0 0
        %4103 = vmatpush2.bf16.xpose.msra.mxu0 0
        %4104 = vmatprep.mubr.bf16.mxu0 0
        %4105 = vmatmul.mubr.bf16.gmra.mxu0 %v4067
        %v4106 = vpop.f32.mrf.mxu0
        %v4107 = vadd.f32 %v752, %v4106
        %v4108 = vpop.f32.mrf.mxu0
        %v4109 = vpop.f32.mrf.mxu0
        %v4110 = vpop.f32.mrf.mxu0
        %4111 = vdwg.mxu0
        %4112 = vrot.lane.b32.xlu0 %v750, 32
        %v4113 = vpop.permute.xlu0 %4112
        %v4114 = vrot.slane %v4113, 4
        %4115 = vrot.lane.b32.xlu0 %v1987, 32
        %v4116 = vpop.permute.xlu0 %4115
        %v4118 = vsel %vm770, %v4116, 0
        %v4121 = vsel %vm770, %v4114, 0
        %4123 = vmatprep.subr.bf16.mxu0 0
        %4124 = vmatpush1.bf16.xpose.msra.mxu0 0
        %4125 = vmatprep.subr.bf16.mxu0 0
        %4126 = vmatpush1.bf16.xpose.msra.mxu0 0
        %4127 = vmatprep.subr.bf16.mxu0 0
        %4128 = vmatpush1.bf16.xpose.msra.mxu0 0
        %4129 = vmatprep.subr.bf16.mxu0 0
        %4130 = vmatpush1.bf16.xpose.msra.mxu0 0
        %4131 = vmatprep.subr.bf16.mxu0 0
        %4132 = vmatpush1.bf16.xpose.msra.mxu0 0
        %4133 = vmatprep.subr.bf16.mxu0 0
        %4134 = vmatpush1.bf16.xpose.msra.mxu0 0
        %4135 = vmatprep.subr.bf16.mxu0 0
        %4136 = vmatpush1.bf16.xpose.msra.mxu0 0
        %4137 = vmatprep.subr.bf16.mxu0 0
        %4138 = vmatpush1.bf16.xpose.msra.mxu0 %v4121
        %4139 = vmatprep.subr.bf16.mxu0 0
        %4140 = vmatpush2.bf16.xpose.msra.mxu0 0
        %4141 = vmatprep.subr.bf16.mxu0 0
        %4142 = vmatpush2.bf16.xpose.msra.mxu0 0
        %4143 = vmatprep.subr.bf16.mxu0 0
        %4144 = vmatpush2.bf16.xpose.msra.mxu0 0
        %4145 = vmatprep.subr.bf16.mxu0 0
        %4146 = vmatpush2.bf16.xpose.msra.mxu0 0
        %4147 = vmatprep.subr.bf16.mxu0 0
        %4148 = vmatpush2.bf16.xpose.msra.mxu0 0
        %4149 = vmatprep.subr.bf16.mxu0 0
        %4150 = vmatpush2.bf16.xpose.msra.mxu0 0
        %4151 = vmatprep.subr.bf16.mxu0 0
        %4152 = vmatpush2.bf16.xpose.msra.mxu0 0
        %4153 = vmatprep.subr.bf16.mxu0 0
        %4154 = vmatpush2.bf16.xpose.msra.mxu0 0
        %4155 = vmatprep.mubr.bf16.mxu0 0
        %4156 = vmatmul.mubr.bf16.gmra.mxu0 %v4118
        %v4157 = vpop.f32.mrf.mxu0
        %v4158 = vadd.f32 %v752, %v4157
        %v4159 = vpop.f32.mrf.mxu0
        %v4160 = vpop.f32.mrf.mxu0
        %v4161 = vpop.f32.mrf.mxu0
        %4162 = vdwg.mxu0
        %v4163 = vsel %vm1146, %v3801, -inf
        %4164 = vmax.xlane.f32.xlu0 %v4163
        %v4165 = vpop.xlane.xlu0 %4164
        %v4166 = vsel %vm1146, %v3852, -inf
        %4167 = vmax.xlane.f32.xlu0 %v4166
        %v4168 = vpop.xlane.xlu0 %4167
        %v4169 = vsel %vm1146, %v3903, -inf
        %4170 = vmax.xlane.f32.xlu0 %v4169
        %v4171 = vpop.xlane.xlu0 %4170
        %v4172 = vsel %vm1146, %v3954, -inf
        %4173 = vmax.xlane.f32.xlu0 %v4172
        %v4174 = vpop.xlane.xlu0 %4173
        %v4175 = vsel %vm1146, %v4005, -inf
        %4176 = vmax.xlane.f32.xlu0 %v4175
        %v4177 = vpop.xlane.xlu0 %4176
        %v4178 = vsel %vm1146, %v4056, -inf
        %4179 = vmax.xlane.f32.xlu0 %v4178
        %v4180 = vpop.xlane.xlu0 %4179
        %v4181 = vsel %vm1146, %v4107, -inf
        %4182 = vmax.xlane.f32.xlu0 %v4181
        %v4183 = vpop.xlane.xlu0 %4182
        %v4184 = vsel %vm1146, %v4158, -inf
        %4185 = vmax.xlane.f32.xlu0 %v4184
        %v4186 = vpop.xlane.xlu0 %4185
        %v4187 = vsub.f32 %v3801, %v4165
        %v4188 = vsub.f32 %v3852, %v4168
        %v4189 = vsub.f32 %v3903, %v4171
        %v4190 = vsub.f32 %v3954, %v4174
        %v4191 = vsub.f32 %v4005, %v4177
        %v4192 = vsub.f32 %v4056, %v4180
        %v4193 = vsub.f32 %v4107, %v4183
        %v4194 = vsub.f32 %v4158, %v4186
        %v4195 = vmul.f32 %v4187, 1.442695
        %v4196 = vpow.pop %v4195
        %v4197 = vmul.f32 %v4188, 1.442695
        %v4198 = vpow.pop %v4197
        %v4199 = vmul.f32 %v4189, 1.442695
        %v4200 = vpow.pop %v4199
        %v4201 = vmul.f32 %v4190, 1.442695
        %v4202 = vpow.pop %v4201
        %v4203 = vmul.f32 %v4191, 1.442695
        %v4204 = vpow.pop %v4203
        %v4205 = vmul.f32 %v4192, 1.442695
        %v4206 = vpow.pop %v4205
        %v4207 = vmul.f32 %v4193, 1.442695
        %v4208 = vpow.pop %v4207
        %v4209 = vmul.f32 %v4194, 1.442695
        %v4210 = vpow.pop %v4209
        %v4211 = vsel %vm1146, %v4196, 0.0
        %4212 = vadd.xlane.f32.xlu0 %v4211
        %v4213 = vpop.xlane.xlu0 %4212
        %v4214 = vsel %vm1146, %v4198, 0.0
        %4215 = vadd.xlane.f32.xlu0 %v4214
        %v4216 = vpop.xlane.xlu0 %4215
        %v4217 = vsel %vm1146, %v4200, 0.0
        %4218 = vadd.xlane.f32.xlu0 %v4217
        %v4219 = vpop.xlane.xlu0 %4218
        %v4220 = vsel %vm1146, %v4202, 0.0
        %4221 = vadd.xlane.f32.xlu0 %v4220
        %v4222 = vpop.xlane.xlu0 %4221
        %v4223 = vsel %vm1146, %v4204, 0.0
        %4224 = vadd.xlane.f32.xlu0 %v4223
        %v4225 = vpop.xlane.xlu0 %4224
        %v4226 = vsel %vm1146, %v4206, 0.0
        %4227 = vadd.xlane.f32.xlu0 %v4226
        %v4228 = vpop.xlane.xlu0 %4227
        %v4229 = vsel %vm1146, %v4208, 0.0
        %4230 = vadd.xlane.f32.xlu0 %v4229
        %v4231 = vpop.xlane.xlu0 %4230
        %v4232 = vsel %vm1146, %v4210, 0.0
        %4233 = vadd.xlane.f32.xlu0 %v4232
        %v4234 = vpop.xlane.xlu0 %4233
        %v4235 = vrcp.pop %v4213
        %v4236 = vrcp.pop %v4216
        %v4237 = vrcp.pop %v4219
        %v4238 = vrcp.pop %v4222
        %v4239 = vrcp.pop %v4225
        %v4240 = vrcp.pop %v4228
        %v4241 = vrcp.pop %v4231
        %v4242 = vrcp.pop %v4234
        %v4243 = vmul.f32 %v4196, %v4235
        %v4244 = vmul.f32 %v4198, %v4236
        %v4245 = vmul.f32 %v4200, %v4237
        %v4246 = vmul.f32 %v4202, %v4238
        %v4247 = vmul.f32 %v4204, %v4239
        %v4248 = vmul.f32 %v4206, %v4240
        %v4249 = vmul.f32 %v4208, %v4241
        %v4250 = vmul.f32 %v4210, %v4242
        %v4251 = vpack.c.bf16 %v4243, %v4243
        %v4252 = vpack.c.bf16 %v4244, %v4244
        %v4253 = vpack.c.bf16 %v4245, %v4245
        %v4254 = vpack.c.bf16 %v4246, %v4246
        %v4255 = vpack.c.bf16 %v4247, %v4247
        %v4256 = vpack.c.bf16 %v4248, %v4248
        %v4257 = vpack.c.bf16 %v4249, %v4249
        %v4258 = vpack.c.bf16 %v4250, %v4250
        %4259 = vrot.lane.b32.xlu0 %v737, 32
        %v4260 = vpop.permute.xlu0 %4259
        %v4262 = vsel %vm1146, %v4251, 0
        %v4265 = vsel %vm1246, %v4260, 0
        %4267 = vmatprep.subr.bf16.mxu0 0
        %4268 = vmatpush1.bf16.msra.mxu0 0
        %4269 = vmatprep.subr.bf16.mxu0 0
        %4270 = vmatpush1.bf16.msra.mxu0 0
        %4271 = vmatprep.subr.bf16.mxu0 0
        %4272 = vmatpush1.bf16.msra.mxu0 0
        %4273 = vmatprep.subr.bf16.mxu0 0
        %4274 = vmatpush1.bf16.msra.mxu0 0
        %4275 = vmatprep.subr.bf16.mxu0 0
        %4276 = vmatpush1.bf16.msra.mxu0 0
        %4277 = vmatprep.subr.bf16.mxu0 0
        %4278 = vmatpush1.bf16.msra.mxu0 0
        %4279 = vmatprep.subr.bf16.mxu0 0
        %4280 = vmatpush1.bf16.msra.mxu0 0
        %4281 = vmatprep.subr.bf16.mxu0 0
        %4282 = vmatpush1.bf16.msra.mxu0 %v4265
        %4283 = vmatprep.subr.bf16.mxu0 0
        %4284 = vmatpush2.bf16.msra.mxu0 0
        %4285 = vmatprep.subr.bf16.mxu0 0
        %4286 = vmatpush2.bf16.msra.mxu0 0
        %4287 = vmatprep.subr.bf16.mxu0 0
        %4288 = vmatpush2.bf16.msra.mxu0 0
        %4289 = vmatprep.subr.bf16.mxu0 0
        %4290 = vmatpush2.bf16.msra.mxu0 0
        %4291 = vmatprep.subr.bf16.mxu0 0
        %4292 = vmatpush2.bf16.msra.mxu0 0
        %4293 = vmatprep.subr.bf16.mxu0 0
        %4294 = vmatpush2.bf16.msra.mxu0 0
        %4295 = vmatprep.subr.bf16.mxu0 0
        %4296 = vmatpush2.bf16.msra.mxu0 0
        %4297 = vmatprep.subr.bf16.mxu0 0
        %4298 = vmatpush2.bf16.msra.mxu0 0
        %4299 = vmatprep.mubr.bf16.mxu0 0
        %4300 = vmatmul.mubr.bf16.gmra.mxu0 %v4262
        %v4301 = vpop.f32.mrf.mxu0
        %v4302 = vadd.f32 0.0, %v4301
        %v4303 = vpop.f32.mrf.mxu0
        %v4304 = vpop.f32.mrf.mxu0
        %v4305 = vpop.f32.mrf.mxu0
        %4306 = vdwg.mxu0
        %4307 = vrot.lane.b32.xlu0 %v739, 32
        %v4308 = vpop.permute.xlu0 %4307
        %v4310 = vsel %vm1146, %v4252, 0
        %v4313 = vsel %vm1246, %v4308, 0
        %4315 = vmatprep.subr.bf16.mxu0 0
        %4316 = vmatpush1.bf16.msra.mxu0 0
        %4317 = vmatprep.subr.bf16.mxu0 0
        %4318 = vmatpush1.bf16.msra.mxu0 0
        %4319 = vmatprep.subr.bf16.mxu0 0
        %4320 = vmatpush1.bf16.msra.mxu0 0
        %4321 = vmatprep.subr.bf16.mxu0 0
        %4322 = vmatpush1.bf16.msra.mxu0 0
        %4323 = vmatprep.subr.bf16.mxu0 0
        %4324 = vmatpush1.bf16.msra.mxu0 0
        %4325 = vmatprep.subr.bf16.mxu0 0
        %4326 = vmatpush1.bf16.msra.mxu0 0
        %4327 = vmatprep.subr.bf16.mxu0 0
        %4328 = vmatpush1.bf16.msra.mxu0 0
        %4329 = vmatprep.subr.bf16.mxu0 0
        %4330 = vmatpush1.bf16.msra.mxu0 %v4313
        %4331 = vmatprep.subr.bf16.mxu0 0
        %4332 = vmatpush2.bf16.msra.mxu0 0
        %4333 = vmatprep.subr.bf16.mxu0 0
        %4334 = vmatpush2.bf16.msra.mxu0 0
        %4335 = vmatprep.subr.bf16.mxu0 0
        %4336 = vmatpush2.bf16.msra.mxu0 0
        %4337 = vmatprep.subr.bf16.mxu0 0
        %4338 = vmatpush2.bf16.msra.mxu0 0
        %4339 = vmatprep.subr.bf16.mxu0 0
        %4340 = vmatpush2.bf16.msra.mxu0 0
        %4341 = vmatprep.subr.bf16.mxu0 0
        %4342 = vmatpush2.bf16.msra.mxu0 0
        %4343 = vmatprep.subr.bf16.mxu0 0
        %4344 = vmatpush2.bf16.msra.mxu0 0
        %4345 = vmatprep.subr.bf16.mxu0 0
        %4346 = vmatpush2.bf16.msra.mxu0 0
        %4347 = vmatprep.mubr.bf16.mxu0 0
        %4348 = vmatmul.mubr.bf16.gmra.mxu0 %v4310
        %v4349 = vpop.f32.mrf.mxu0
        %v4350 = vadd.f32 0.0, %v4349
        %v4351 = vpop.f32.mrf.mxu0
        %v4352 = vpop.f32.mrf.mxu0
        %v4353 = vpop.f32.mrf.mxu0
        %4354 = vdwg.mxu0
        %4355 = vrot.lane.b32.xlu0 %v741, 32
        %v4356 = vpop.permute.xlu0 %4355
        %v4358 = vsel %vm1146, %v4253, 0
        %v4361 = vsel %vm1246, %v4356, 0
        %4363 = vmatprep.subr.bf16.mxu0 0
        %4364 = vmatpush1.bf16.msra.mxu0 0
        %4365 = vmatprep.subr.bf16.mxu0 0
        %4366 = vmatpush1.bf16.msra.mxu0 0
        %4367 = vmatprep.subr.bf16.mxu0 0
        %4368 = vmatpush1.bf16.msra.mxu0 0
        %4369 = vmatprep.subr.bf16.mxu0 0
        %4370 = vmatpush1.bf16.msra.mxu0 0
        %4371 = vmatprep.subr.bf16.mxu0 0
        %4372 = vmatpush1.bf16.msra.mxu0 0
        %4373 = vmatprep.subr.bf16.mxu0 0
        %4374 = vmatpush1.bf16.msra.mxu0 0
        %4375 = vmatprep.subr.bf16.mxu0 0
        %4376 = vmatpush1.bf16.msra.mxu0 0
        %4377 = vmatprep.subr.bf16.mxu0 0
        %4378 = vmatpush1.bf16.msra.mxu0 %v4361
        %4379 = vmatprep.subr.bf16.mxu0 0
        %4380 = vmatpush2.bf16.msra.mxu0 0
        %4381 = vmatprep.subr.bf16.mxu0 0
        %4382 = vmatpush2.bf16.msra.mxu0 0
        %4383 = vmatprep.subr.bf16.mxu0 0
        %4384 = vmatpush2.bf16.msra.mxu0 0
        %4385 = vmatprep.subr.bf16.mxu0 0
        %4386 = vmatpush2.bf16.msra.mxu0 0
        %4387 = vmatprep.subr.bf16.mxu0 0
        %4388 = vmatpush2.bf16.msra.mxu0 0
        %4389 = vmatprep.subr.bf16.mxu0 0
        %4390 = vmatpush2.bf16.msra.mxu0 0
        %4391 = vmatprep.subr.bf16.mxu0 0
        %4392 = vmatpush2.bf16.msra.mxu0 0
        %4393 = vmatprep.subr.bf16.mxu0 0
        %4394 = vmatpush2.bf16.msra.mxu0 0
        %4395 = vmatprep.mubr.bf16.mxu0 0
        %4396 = vmatmul.mubr.bf16.gmra.mxu0 %v4358
        %v4397 = vpop.f32.mrf.mxu0
        %v4398 = vadd.f32 0.0, %v4397
        %v4399 = vpop.f32.mrf.mxu0
        %v4400 = vpop.f32.mrf.mxu0
        %v4401 = vpop.f32.mrf.mxu0
        %4402 = vdwg.mxu0
        %4403 = vrot.lane.b32.xlu0 %v743, 32
        %v4404 = vpop.permute.xlu0 %4403
        %v4406 = vsel %vm1146, %v4254, 0
        %v4409 = vsel %vm1246, %v4404, 0
        %4411 = vmatprep.subr.bf16.mxu0 0
        %4412 = vmatpush1.bf16.msra.mxu0 0
        %4413 = vmatprep.subr.bf16.mxu0 0
        %4414 = vmatpush1.bf16.msra.mxu0 0
        %4415 = vmatprep.subr.bf16.mxu0 0
        %4416 = vmatpush1.bf16.msra.mxu0 0
        %4417 = vmatprep.subr.bf16.mxu0 0
        %4418 = vmatpush1.bf16.msra.mxu0 0
        %4419 = vmatprep.subr.bf16.mxu0 0
        %4420 = vmatpush1.bf16.msra.mxu0 0
        %4421 = vmatprep.subr.bf16.mxu0 0
        %4422 = vmatpush1.bf16.msra.mxu0 0
        %4423 = vmatprep.subr.bf16.mxu0 0
        %4424 = vmatpush1.bf16.msra.mxu0 0
        %4425 = vmatprep.subr.bf16.mxu0 0
        %4426 = vmatpush1.bf16.msra.mxu0 %v4409
        %4427 = vmatprep.subr.bf16.mxu0 0
        %4428 = vmatpush2.bf16.msra.mxu0 0
        %4429 = vmatprep.subr.bf16.mxu0 0
        %4430 = vmatpush2.bf16.msra.mxu0 0
        %4431 = vmatprep.subr.bf16.mxu0 0
        %4432 = vmatpush2.bf16.msra.mxu0 0
        %4433 = vmatprep.subr.bf16.mxu0 0
        %4434 = vmatpush2.bf16.msra.mxu0 0
        %4435 = vmatprep.subr.bf16.mxu0 0
        %4436 = vmatpush2.bf16.msra.mxu0 0
        %4437 = vmatprep.subr.bf16.mxu0 0
        %4438 = vmatpush2.bf16.msra.mxu0 0
        %4439 = vmatprep.subr.bf16.mxu0 0
        %4440 = vmatpush2.bf16.msra.mxu0 0
        %4441 = vmatprep.subr.bf16.mxu0 0
        %4442 = vmatpush2.bf16.msra.mxu0 0
        %4443 = vmatprep.mubr.bf16.mxu0 0
        %4444 = vmatmul.mubr.bf16.gmra.mxu0 %v4406
        %v4445 = vpop.f32.mrf.mxu0
        %v4446 = vadd.f32 0.0, %v4445
        %v4447 = vpop.f32.mrf.mxu0
        %v4448 = vpop.f32.mrf.mxu0
        %v4449 = vpop.f32.mrf.mxu0
        %4450 = vdwg.mxu0
        %4451 = vrot.lane.b32.xlu0 %v745, 32
        %v4452 = vpop.permute.xlu0 %4451
        %v4454 = vsel %vm1146, %v4255, 0
        %v4457 = vsel %vm1246, %v4452, 0
        %4459 = vmatprep.subr.bf16.mxu0 0
        %4460 = vmatpush1.bf16.msra.mxu0 0
        %4461 = vmatprep.subr.bf16.mxu0 0
        %4462 = vmatpush1.bf16.msra.mxu0 0
        %4463 = vmatprep.subr.bf16.mxu0 0
        %4464 = vmatpush1.bf16.msra.mxu0 0
        %4465 = vmatprep.subr.bf16.mxu0 0
        %4466 = vmatpush1.bf16.msra.mxu0 0
        %4467 = vmatprep.subr.bf16.mxu0 0
        %4468 = vmatpush1.bf16.msra.mxu0 0
        %4469 = vmatprep.subr.bf16.mxu0 0
        %4470 = vmatpush1.bf16.msra.mxu0 0
        %4471 = vmatprep.subr.bf16.mxu0 0
        %4472 = vmatpush1.bf16.msra.mxu0 0
        %4473 = vmatprep.subr.bf16.mxu0 0
        %4474 = vmatpush1.bf16.msra.mxu0 %v4457
        %4475 = vmatprep.subr.bf16.mxu0 0
        %4476 = vmatpush2.bf16.msra.mxu0 0
        %4477 = vmatprep.subr.bf16.mxu0 0
        %4478 = vmatpush2.bf16.msra.mxu0 0
        %4479 = vmatprep.subr.bf16.mxu0 0
        %4480 = vmatpush2.bf16.msra.mxu0 0
        %4481 = vmatprep.subr.bf16.mxu0 0
        %4482 = vmatpush2.bf16.msra.mxu0 0
        %4483 = vmatprep.subr.bf16.mxu0 0
        %4484 = vmatpush2.bf16.msra.mxu0 0
        %4485 = vmatprep.subr.bf16.mxu0 0
        %4486 = vmatpush2.bf16.msra.mxu0 0
        %4487 = vmatprep.subr.bf16.mxu0 0
        %4488 = vmatpush2.bf16.msra.mxu0 0
        %4489 = vmatprep.subr.bf16.mxu0 0
        %4490 = vmatpush2.bf16.msra.mxu0 0
        %4491 = vmatprep.mubr.bf16.mxu0 0
        %4492 = vmatmul.mubr.bf16.gmra.mxu0 %v4454
        %v4493 = vpop.f32.mrf.mxu0
        %v4494 = vadd.f32 0.0, %v4493
        %v4495 = vpop.f32.mrf.mxu0
        %v4496 = vpop.f32.mrf.mxu0
        %v4497 = vpop.f32.mrf.mxu0
        %4498 = vdwg.mxu0
        %4499 = vrot.lane.b32.xlu0 %v747, 32
        %v4500 = vpop.permute.xlu0 %4499
        %v4502 = vsel %vm1146, %v4256, 0
        %v4505 = vsel %vm1246, %v4500, 0
        %4507 = vmatprep.subr.bf16.mxu0 0
        %4508 = vmatpush1.bf16.msra.mxu0 0
        %4509 = vmatprep.subr.bf16.mxu0 0
        %4510 = vmatpush1.bf16.msra.mxu0 0
        %4511 = vmatprep.subr.bf16.mxu0 0
        %4512 = vmatpush1.bf16.msra.mxu0 0
        %4513 = vmatprep.subr.bf16.mxu0 0
        %4514 = vmatpush1.bf16.msra.mxu0 0
        %4515 = vmatprep.subr.bf16.mxu0 0
        %4516 = vmatpush1.bf16.msra.mxu0 0
        %4517 = vmatprep.subr.bf16.mxu0 0
        %4518 = vmatpush1.bf16.msra.mxu0 0
        %4519 = vmatprep.subr.bf16.mxu0 0
        %4520 = vmatpush1.bf16.msra.mxu0 0
        %4521 = vmatprep.subr.bf16.mxu0 0
        %4522 = vmatpush1.bf16.msra.mxu0 %v4505
        %4523 = vmatprep.subr.bf16.mxu0 0
        %4524 = vmatpush2.bf16.msra.mxu0 0
        %4525 = vmatprep.subr.bf16.mxu0 0
        %4526 = vmatpush2.bf16.msra.mxu0 0
        %4527 = vmatprep.subr.bf16.mxu0 0
        %4528 = vmatpush2.bf16.msra.mxu0 0
        %4529 = vmatprep.subr.bf16.mxu0 0
        %4530 = vmatpush2.bf16.msra.mxu0 0
        %4531 = vmatprep.subr.bf16.mxu0 0
        %4532 = vmatpush2.bf16.msra.mxu0 0
        %4533 = vmatprep.subr.bf16.mxu0 0
        %4534 = vmatpush2.bf16.msra.mxu0 0
        %4535 = vmatprep.subr.bf16.mxu0 0
        %4536 = vmatpush2.bf16.msra.mxu0 0
        %4537 = vmatprep.subr.bf16.mxu0 0
        %4538 = vmatpush2.bf16.msra.mxu0 0
        %4539 = vmatprep.mubr.bf16.mxu0 0
        %4540 = vmatmul.mubr.bf16.gmra.mxu0 %v4502
        %v4541 = vpop.f32.mrf.mxu0
        %v4542 = vadd.f32 0.0, %v4541
        %v4543 = vpop.f32.mrf.mxu0
        %v4544 = vpop.f32.mrf.mxu0
        %v4545 = vpop.f32.mrf.mxu0
        %4546 = vdwg.mxu0
        %4547 = vrot.lane.b32.xlu0 %v749, 32
        %v4548 = vpop.permute.xlu0 %4547
        %v4550 = vsel %vm1146, %v4257, 0
        %v4553 = vsel %vm1246, %v4548, 0
        %4555 = vmatprep.subr.bf16.mxu0 0
        %4556 = vmatpush1.bf16.msra.mxu0 0
        %4557 = vmatprep.subr.bf16.mxu0 0
        %4558 = vmatpush1.bf16.msra.mxu0 0
        %4559 = vmatprep.subr.bf16.mxu0 0
        %4560 = vmatpush1.bf16.msra.mxu0 0
        %4561 = vmatprep.subr.bf16.mxu0 0
        %4562 = vmatpush1.bf16.msra.mxu0 0
        %4563 = vmatprep.subr.bf16.mxu0 0
        %4564 = vmatpush1.bf16.msra.mxu0 0
        %4565 = vmatprep.subr.bf16.mxu0 0
        %4566 = vmatpush1.bf16.msra.mxu0 0
        %4567 = vmatprep.subr.bf16.mxu0 0
        %4568 = vmatpush1.bf16.msra.mxu0 0
        %4569 = vmatprep.subr.bf16.mxu0 0
        %4570 = vmatpush1.bf16.msra.mxu0 %v4553
        %4571 = vmatprep.subr.bf16.mxu0 0
        %4572 = vmatpush2.bf16.msra.mxu0 0
        %4573 = vmatprep.subr.bf16.mxu0 0
        %4574 = vmatpush2.bf16.msra.mxu0 0
        %4575 = vmatprep.subr.bf16.mxu0 0
        %4576 = vmatpush2.bf16.msra.mxu0 0
        %4577 = vmatprep.subr.bf16.mxu0 0
        %4578 = vmatpush2.bf16.msra.mxu0 0
        %4579 = vmatprep.subr.bf16.mxu0 0
        %4580 = vmatpush2.bf16.msra.mxu0 0
        %4581 = vmatprep.subr.bf16.mxu0 0
        %4582 = vmatpush2.bf16.msra.mxu0 0
        %4583 = vmatprep.subr.bf16.mxu0 0
        %4584 = vmatpush2.bf16.msra.mxu0 0
        %4585 = vmatprep.subr.bf16.mxu0 0
        %4586 = vmatpush2.bf16.msra.mxu0 0
        %4587 = vmatprep.mubr.bf16.mxu0 0
        %4588 = vmatmul.mubr.bf16.gmra.mxu0 %v4550
        %v4589 = vpop.f32.mrf.mxu0
        %v4590 = vadd.f32 0.0, %v4589
        %v4591 = vpop.f32.mrf.mxu0
        %v4592 = vpop.f32.mrf.mxu0
        %v4593 = vpop.f32.mrf.mxu0
        %4594 = vdwg.mxu0
        %4595 = vrot.lane.b32.xlu0 %v751, 32
        %v4596 = vpop.permute.xlu0 %4595
        %v4598 = vsel %vm1146, %v4258, 0
        %v4601 = vsel %vm1246, %v4596, 0
        %4603 = vmatprep.subr.bf16.mxu0 0
        %4604 = vmatpush1.bf16.msra.mxu0 0
        %4605 = vmatprep.subr.bf16.mxu0 0
        %4606 = vmatpush1.bf16.msra.mxu0 0
        %4607 = vmatprep.subr.bf16.mxu0 0
        %4608 = vmatpush1.bf16.msra.mxu0 0
        %4609 = vmatprep.subr.bf16.mxu0 0
        %4610 = vmatpush1.bf16.msra.mxu0 0
        %4611 = vmatprep.subr.bf16.mxu0 0
        %4612 = vmatpush1.bf16.msra.mxu0 0
        %4613 = vmatprep.subr.bf16.mxu0 0
        %4614 = vmatpush1.bf16.msra.mxu0 0
        %4615 = vmatprep.subr.bf16.mxu0 0
        %4616 = vmatpush1.bf16.msra.mxu0 0
        %4617 = vmatprep.subr.bf16.mxu0 0
        %4618 = vmatpush1.bf16.msra.mxu0 %v4601
        %4619 = vmatprep.subr.bf16.mxu0 0
        %4620 = vmatpush2.bf16.msra.mxu0 0
        %4621 = vmatprep.subr.bf16.mxu0 0
        %4622 = vmatpush2.bf16.msra.mxu0 0
        %4623 = vmatprep.subr.bf16.mxu0 0
        %4624 = vmatpush2.bf16.msra.mxu0 0
        %4625 = vmatprep.subr.bf16.mxu0 0
        %4626 = vmatpush2.bf16.msra.mxu0 0
        %4627 = vmatprep.subr.bf16.mxu0 0
        %4628 = vmatpush2.bf16.msra.mxu0 0
        %4629 = vmatprep.subr.bf16.mxu0 0
        %4630 = vmatpush2.bf16.msra.mxu0 0
        %4631 = vmatprep.subr.bf16.mxu0 0
        %4632 = vmatpush2.bf16.msra.mxu0 0
        %4633 = vmatprep.subr.bf16.mxu0 0
        %4634 = vmatpush2.bf16.msra.mxu0 0
        %4635 = vmatprep.mubr.bf16.mxu0 0
        %4636 = vmatmul.mubr.bf16.gmra.mxu0 %v4598
        %v4637 = vpop.f32.mrf.mxu0
        %v4638 = vadd.f32 0.0, %v4637
        %v4639 = vpop.f32.mrf.mxu0
        %v4640 = vpop.f32.mrf.mxu0
        %v4641 = vpop.f32.mrf.mxu0
        %4642 = vdwg.mxu0
        %v4643 = vpack.c.bf16 %v4302, %v4302
        %v4644 = vpack.c.bf16 %v4350, %v4350
        %v4645 = vpack.c.bf16 %v4398, %v4398
        %v4646 = vpack.c.bf16 %v4446, %v4446
        %v4647 = vpack.c.bf16 %v4494, %v4494
        %v4648 = vpack.c.bf16 %v4542, %v4542
        %v4649 = vpack.c.bf16 %v4590, %v4590
        %v4650 = vpack.c.bf16 %v4638, %v4638
        %v4659 = vunpack.c.l.b16 %v4643
        %v4660 = vunpack.c.l.b16 %v4644
        %v4661 = vunpack.c.l.b16 %v4645
        %v4662 = vunpack.c.l.b16 %v4646
        %v4663 = vunpack.c.l.b16 %v4647
        %v4664 = vunpack.c.l.b16 %v4648
        %v4665 = vunpack.c.l.b16 %v4649
        %v4666 = vunpack.c.l.b16 %v4650
        %v4667 = vpack.c.b16 %v4660, %v4659
        %v4668 = vpack.c.b16 %v4662, %v4661
        %v4669 = vpack.c.b16 %v4664, %v4663
        %v4670 = vpack.c.b16 %v4666, %v4665
        %v4675 = vunpack.c.l.b16 %v765
        %v4676 = vunpack.c.l.b16 %v766
        %v4677 = vunpack.c.l.b16 %v767
        %v4678 = vunpack.c.l.b16 %v768
        %v4679 = vpack.c.b16 %v4676, %v4675
        %v4680 = vpack.c.b16 %v4678, %v4677
        %v4684 = vsel %vm770, %v4667, 0
        %v4687 = vsel %vm770, %v4668, 0
        %v4690 = vsel %vm770, %v4669, 0
        %v4693 = vsel %vm770, %v4670, 0
        %4695 = vmatprep.subr.bf16.mxu0 0
        %4696 = vmatpush1.bf16.msra.mxu0 0
        %4697 = vmatprep.subr.bf16.mxu0 0
        %4698 = vmatpush1.bf16.msra.mxu0 0
        %4699 = vmatprep.subr.bf16.mxu0 0
        %4700 = vmatpush1.bf16.msra.mxu0 0
        %4701 = vmatprep.subr.bf16.mxu0 0
        %4702 = vmatpush1.bf16.msra.mxu0 0
        %4703 = vmatprep.subr.bf16.mxu0 0
        %4704 = vmatpush1.bf16.msra.mxu0 0
        %4705 = vmatprep.subr.bf16.mxu0 0
        %4706 = vmatpush1.bf16.msra.mxu0 0
        %4707 = vmatprep.subr.bf16.mxu0 0
        %4708 = vmatpush1.bf16.msra.mxu0 %v4680
        %4709 = vmatprep.subr.bf16.mxu0 0
        %4710 = vmatpush1.bf16.msra.mxu0 %v4679
        %4711 = vmatprep.subr.bf16.mxu0 0
        %4712 = vmatpush2.bf16.msra.mxu0 0
        %4713 = vmatprep.subr.bf16.mxu0 0
        %4714 = vmatpush2.bf16.msra.mxu0 0
        %4715 = vmatprep.subr.bf16.mxu0 0
        %4716 = vmatpush2.bf16.msra.mxu0 0
        %4717 = vmatprep.subr.bf16.mxu0 0
        %4718 = vmatpush2.bf16.msra.mxu0 0
        %4719 = vmatprep.subr.bf16.mxu0 0
        %4720 = vmatpush2.bf16.msra.mxu0 0
        %4721 = vmatprep.subr.bf16.mxu0 0
        %4722 = vmatpush2.bf16.msra.mxu0 0
        %4723 = vmatprep.subr.bf16.mxu0 0
        %4724 = vmatpush2.bf16.msra.mxu0 0
        %4725 = vmatprep.subr.bf16.mxu0 0
        %4726 = vmatpush2.bf16.msra.mxu0 0
        %4727 = vmatprep.mubr.bf16.mxu0 0
        %4728 = vmatmul.mubr.bf16.gmra.mxu0 %v4684
        %v4729 = vpop.f32.mrf.mxu0
        %v4730 = vadd.f32 0.0, %v4729
        %v4731 = vpop.f32.mrf.mxu0
        %v4732 = vpop.f32.mrf.mxu0
        %v4733 = vadd.f32 0.0, %v4732
        %v4734 = vpop.f32.mrf.mxu0
        %4735 = vmatprep.mubr.bf16.mxu0 0
        %4736 = vmatmul.mubr.bf16.gmra.mxu0 %v4687
        %v4737 = vpop.f32.mrf.mxu0
        %v4738 = vadd.f32 0.0, %v4737
        %v4739 = vpop.f32.mrf.mxu0
        %v4740 = vpop.f32.mrf.mxu0
        %v4741 = vadd.f32 0.0, %v4740
        %v4742 = vpop.f32.mrf.mxu0
        %4743 = vmatprep.mubr.bf16.mxu0 0
        %4744 = vmatmul.mubr.bf16.gmra.mxu0 %v4690
        %v4745 = vpop.f32.mrf.mxu0
        %v4746 = vadd.f32 0.0, %v4745
        %v4747 = vpop.f32.mrf.mxu0
        %v4748 = vpop.f32.mrf.mxu0
        %v4749 = vadd.f32 0.0, %v4748
        %v4750 = vpop.f32.mrf.mxu0
        %4751 = vmatprep.mubr.bf16.mxu0 0
        %4752 = vmatmul.mubr.bf16.gmra.mxu0 %v4693
        %v4753 = vpop.f32.mrf.mxu0
        %v4754 = vadd.f32 0.0, %v4753
        %v4755 = vpop.f32.mrf.mxu0
        %v4756 = vpop.f32.mrf.mxu0
        %v4757 = vadd.f32 0.0, %v4756
        %v4758 = vpop.f32.mrf.mxu0
        %4759 = vdwg.mxu0
        %v4760 = vadd.f32 %v3747, %v4730
        %v4761 = vadd.f32 %v3748, %v4733
        %v4762 = vadd.f32 %v3749, %v4738
        %v4763 = vadd.f32 %v3750, %v4741
        %v4764 = vadd.f32 %v3751, %v4746
        %v4765 = vadd.f32 %v3752, %v4749
        %v4766 = vadd.f32 %v3753, %v4754
        %v4767 = vadd.f32 %v3754, %v4757
        %v4768 = vld [vmem:[%s4] sm:$0x1]
        %v4770 = vlaneseq
        %v4771 = vshrl.u32 %v4770, 7
        %v4772 = vsub.s32 0, %v4771
        %v4773 = vrot.slane %v4768, %v4772
        %v4775 = vadd.f32 %v4760, %v4773
        %v4776 = vadd.f32 %v4761, %v4773
        %v4777 = vadd.f32 %v4762, %v4773
        %v4778 = vadd.f32 %v4763, %v4773
        %v4779 = vadd.f32 %v4764, %v4773
        %v4780 = vadd.f32 %v4765, %v4773
        %v4781 = vadd.f32 %v4766, %v4773
        %v4782 = vadd.f32 %v4767, %v4773
        %4783 = vst [vmem:[%s329] sm:$0xff] %v4775
        %4784 = vst [vmem:[%s329 + $0x8] sm:$0xff] %v4776
        %4785 = vst [vmem:[%s329 + $0x10] sm:$0xff] %v4777
        %4786 = vst [vmem:[%s329 + $0x18] sm:$0xff] %v4778
        %4787 = vst [vmem:[%s329 + $0x20] sm:$0xff] %v4779
        %4788 = vst [vmem:[%s329 + $0x28] sm:$0xff] %v4780
        %4789 = vst [vmem:[%s329 + $0x30] sm:$0xff] %v4781
        %4790 = vst [vmem:[%s329 + $0x38] sm:$0xff] %v4782
        %s4791 = sand.u32 %s180, 1
        %s4792 = scalar_lea.sflag [#allocation4], %s4791
        %s4793 = sand.u32 %s180, 1
        %s4794 = smul.addr %s4793, 64
        %s4795 = scalar_lea.vmem [#allocation10], %s4794
        // Predicated region
        $region61: #{tpu_custom_call.1} parent=43 // pred_check
          %p4796 = pneg %p190
        $region62: #{tpu_custom_call.1} parent=43 // pred_check_branch
          %4798 = sbr.rel (%p4796) target = $region64
        $region63: #{tpu_custom_call.1} parent=43 // pred_region
          %s4799 = smul.u32 8, %s30
          %s4801 = ssub.s32 1024, 1024
          %4802 = vsyncadd %s4792, %s4801
          %s4803 = smul.addr %s4799, 2
          %s4804 = sadd.s32 %s29, %s4803
          %s4805 = smul.addr %s4804, 128
          %s4806 = scalar_lea.hbm %s6, %s4805
          %s4807 = sshll.u32 %s4795, 4
          %s4808 = int_to_ptr.vmem [resolvable:$true] %s4807
          %4813 = dma.vmem_to_hbm [thread:$0]  %s4808, 1024, %s4806, %s4792, 128, 256, 8
        $region64: #{tpu_custom_call.1} parent=43 // pred_fallthru
          _
      $region44: #{tpu_custom_call.1} parent=5 // pred_fallthru
        _
      %p4814 = scmp.le.s32.totalorder 2, %s20
      // Predicated region
      $region65: #{tpu_custom_call.1} parent=5 // pred_check
        %p4815 = pneg %p4814
      $region66: #{tpu_custom_call.1} parent=5 // pred_check_branch
        %4817 = sbr.rel (%p4815) target = $region68
      $region67: #{tpu_custom_call.1} parent=5 // pred_region
        %s4818 = ssub.s32 %s20, 2
        // Predicated region
        $region69: #{tpu_custom_call.1} parent=67 // pred_check
          %p4819 = pneg %p196
        $region70: #{tpu_custom_call.1} parent=67 // pred_check_branch
          %4821 = sbr.rel (%p4819) target = $region72
        $region71: #{tpu_custom_call.1} parent=67 // pred_region
          %s4822 = sand.u32 %s181, 1
          %s4823 = scalar_lea.sflag [#allocation4], %s4822
          %s4824 = sand.u32 %s181, 1
          %s4825 = smul.addr %s4824, 64
          %s4826 = scalar_lea.vmem [#allocation10], %s4825
          %4827 = dma.done %s4823, 1024
        $region72: #{tpu_custom_call.1} parent=67 // pred_fallthru
          _
      $region68: #{tpu_custom_call.1} parent=5 // pred_fallthru
        _
    $region6: #{tpu_custom_call.1} parent=1 // loop_footer
      %s24 = sadd.s32 1, %s20
    $region7: #{tpu_custom_call.1} parent=1 // loop_footer_branch
      %19 = sbr.rel target = $region3
    $region8: #{tpu_custom_call.1} parent=1 // loop_exit
      _
    %4828 = vsyncpa [#allocation3], 1
    %s4829 = scalar_lea.sflag [#allocation3], 1
    %4830 = vsyncpa %s4829, 1
    %4831 = vsyncpa [#allocation6], 1
    %4832 = vsyncpa [#allocation9], 1
    %4833 = vsyncpa [#allocation4], 1
    %s4834 = scalar_lea.sflag [#allocation4], 1
    %4835 = vsyncpa %s4834, 1

</llo_original>
